<compile_context>
chip_gen: v6e
topology: v6e:2x2x1
jax: 0.10.0
libtpu: 0.0.40
codegen_flags: <defaults>
</compile_context>

<pallas_src>
import functools

import jax
import jax.numpy as jnp
from jax import lax
from jax.experimental import pallas as pl
from jax.experimental.pallas import tpu as pltpu


# ---------------------------------------------------------------------------
# Fused Pallas kernel: encoder + projector (both views) + Barlow loss
# ---------------------------------------------------------------------------

def _fused_forward_kernel(p_ref, pool_ref, wc_ref, bc_ref, w1_ref, b1_ref,
                          w2_ref, b2_ref, loss_ref, *, batch, lmbda):
    """One-shot forward for BOTH views.

    p_ref    : [2*B*H*W, 9*C]  im2col patch slab for view1 then view2 (lane-dense)
    pool_ref : [2*B, 2*B*H*W]  block-diagonal global-average-pool matrix (constant)
    wc_ref   : [9*C, ENC]      flat 3x3 conv weights (tap-major, then channel)
    loss_ref : [1, 1]          Barlow loss scalar
    """
    # 3x3 conv (stride 1, pad 1) as a single im2col matmul, then bias + ReLU.
    conv = jnp.dot(p_ref[...], wc_ref[...], preferred_element_type=jnp.float32)
    conv = jnp.maximum(conv + bc_ref[...], 0.0)                       # [n_rows, ENC]

    # Global average pool folded into one matmul (pool matrix is block diagonal
    # with 1/(H*W) entries, one block per image per view).
    y = jnp.dot(pool_ref[...], conv, preferred_element_type=jnp.float32)   # [2B, ENC]

    # Projector MLP: Linear -> ReLU -> Linear (stays entirely in vregs/VMEM).
    h = jnp.maximum(
        jnp.dot(y, w1_ref[...], preferred_element_type=jnp.float32) + b1_ref[...], 0.0)
    z = jnp.dot(h, w2_ref[...], preferred_element_type=jnp.float32) + b2_ref[...]  # [2B, PROJ]

    # -------- Barlow cross-correlation loss (all in f32) --------
    n = batch
    z1 = z[0:n, :]
    z2 = z[n:2 * n, :]
    d = z.shape[1]

    def colnorm(zz):
        m = jnp.mean(zz, axis=0, keepdims=True)
        zc = zz - m
        # torch.std(dim=0) default is unbiased (divide by N-1)
        var = jnp.sum(zc * zc, axis=0, keepdims=True) / (n - 1)
        return zc * lax.rsqrt(var)                                    # EUP rsqrt

    z1n = colnorm(z1)
    z2n = colnorm(z2)
    # c = z1n.T @ z2n / N   (contraction over the batch axis)
    c = jnp.einsum("nd,ne->de", z1n, z2n,
                   preferred_element_type=jnp.float32) / n

    row = lax.broadcasted_iota(jnp.int32, (d, d), 0)
    col = lax.broadcasted_iota(jnp.int32, (d, d), 1)
    diag = row == col
    c_diff = (c - diag.astype(jnp.float32)) ** 2 * lmbda
    # (1/l - 1) * trace(c_diff) + sum(c_diff) == sum(c_diff * where(diag, 1/l, 1))
    loss = jnp.sum(c_diff * jnp.where(diag, 1.0 / lmbda, 1.0))
    loss_ref[...] = jnp.full((1, 1), loss, dtype=loss_ref.dtype)


def fused_forward(p_all, pool_mat, wc_flat, bc, w1, b1, w2, b2, *, batch, lmbda):
    """Single pallas_call: im2col slab + weights in, (1,1) loss out."""
    n_rows, k9c = p_all.shape
    enc = wc_flat.shape[-1]
    hid = w1.shape[-1]
    proj = w2.shape[-1]
    kern = functools.partial(_fused_forward_kernel, batch=batch, lmbda=lmbda)
    out = pl.pallas_call(
        kern,
        out_shape=jax.ShapeDtypeStruct((1, 1), jnp.float32),
        grid=(1,),
        in_specs=[
            pl.BlockSpec((n_rows, k9c), lambda i: (0, 0)),       # im2col slab (both views)
            pl.BlockSpec((2 * batch, n_rows), lambda i: (0, 0)), # pooling matrix
            pl.BlockSpec((k9c, enc), lambda i: (0, 0)),          # flat conv weights
            pl.BlockSpec((1, enc), lambda i: (0, 0)),            # conv bias
            pl.BlockSpec((enc, hid), lambda i: (0, 0)),          # w1
            pl.BlockSpec((1, hid), lambda i: (0, 0)),            # b1
            pl.BlockSpec((hid, proj), lambda i: (0, 0)),         # w2
            pl.BlockSpec((1, proj), lambda i: (0, 0)),           # b2
        ],
        out_specs=pl.BlockSpec((1, 1), lambda i: (0, 0)),
        compiler_params=pltpu.CompilerParams(
            dimension_semantics=("arbitrary",),
            vmem_limit_bytes=32 * 1024 * 1024),                  # guard v5e's 16 MiB default
    )(p_all, pool_mat, wc_flat, bc, w1, b1, w2, b2)
    return out[0, 0]


# ---------------------------------------------------------------------------
# Model (thin JAX glue around the single pallas_call)
# ---------------------------------------------------------------------------

class BarlowModel:
    """Deterministically-initialized stand-in for Model (encoder + projector + loss)."""

    def __init__(self, key, in_ch=4, enc_ch=32, proj_hidden=64, proj_out=32,
                 img_hw=16, batch=8, lmbda=0.005):
        k1, k2, k3, k4, k5, k6 = jax.random.split(key, 6)
        self.lmbda = float(lmbda)
        self.enc_ch = enc_ch
        self.B = batch
        self.H = self.W = img_hw
        self.C = in_ch

        # Parameters (conv weight kept tap-major: [9, C, enc]; flat view for the kernel).
        self.w_conv = jax.random.normal(k1, (9, in_ch, enc_ch), jnp.float32) / jnp.sqrt(9.0 * in_ch)
        self.b_conv = jax.random.normal(k2, (1, enc_ch), jnp.float32) * 0.01
        self.w1 = jax.random.normal(k3, (enc_ch, proj_hidden), jnp.float32) / jnp.sqrt(float(enc_ch))
        self.b1 = jax.random.normal(k4, (1, proj_hidden), jnp.float32) * 0.01
        self.w2 = jax.random.normal(k5, (proj_hidden, proj_out), jnp.float32) / jnp.sqrt(float(proj_hidden))
        self.b2 = jax.random.normal(k6, (1, proj_out), jnp.float32) * 0.01
        self.wc_flat = self.w_conv.reshape(-1, enc_ch)            # [9*C, enc]

        # Block-diagonal global-average-pool matrix over BOTH views:
        # row r (image r of the stacked [view1; view2] ordering) averages the
        # H*W im2col rows belonging to that image.
        hw = self.H * self.W
        n_rows = 2 * batch * hw
        owner = jnp.arange(n_rows) // hw
        self.pool = (owner[None, :] == jnp.arange(2 * batch)[:, None]).astype(jnp.float32) / float(hw)

        self._jit_forward = jax.jit(self._forward)

    def _im2col(self, x_nchw):
        """3x3, stride 1, pad 1 patches: [B,C,H,W] -> [B*H*W, 9*C] (tap-major, then C)."""
        B, C, H, W = x_nchw.shape
        xp = jnp.pad(x_nchw, ((0, 0), (0, 0), (1, 1), (1, 1)))
        patches = [xp[:, :, di:di + H, dj:dj + W] for di in range(3) for dj in range(3)]
        p = jnp.stack(patches, axis=1)          # [B, 9, C, H, W]
        p = jnp.transpose(p, (0, 3, 4, 1, 2))   # [B, H, W, 9, C]
        return p.reshape(B * H * W, 9 * C)

    def _forward(self, x1, x2):
        p_all = jnp.concatenate([self._im2col(x1), self._im2col(x2)], axis=0)  # [2*B*H*W, 36]
        return fused_forward(p_all, self.pool, self.wc_flat, self.b_conv,
                             self.w1, self.b1, self.w2, self.b2,
                             batch=self.B, lmbda=self.lmbda)

    def forward(self, x1, x2):
        return self._jit_forward(x1, x2)


# ---------------------------------------------------------------------------
# Pure-JAX reference (mirrors the PyTorch forward semantics)
# ---------------------------------------------------------------------------

def im2col_3x3(x_nchw):
    B, C, H, W = x_nchw.shape
    xp = jnp.pad(x_nchw, ((0, 0), (0, 0), (1, 1), (1, 1)))
    patches = []
    for di in range(3):
        for dj in range(3):
            patches.append(xp[:, :, di:di + H, dj:dj + W])
    p = jnp.stack(patches, axis=1)          # [B, 9, C, H, W]
    p = jnp.transpose(p, (0, 3, 4, 1, 2))   # [B, H, W, 9, C]
    return p.reshape(B * H * W, 9 * C)


def reference_loss(model, x1, x2):
    w_flat = model.w_conv.reshape(-1, model.w_conv.shape[-1])   # [9*C, ENC]

    def rep(x):
        p = im2col_3x3(x)
        c = jnp.maximum(p @ w_flat + model.b_conv, 0.0)
        B = x.shape[0]
        y = c.reshape(B, -1, model.enc_ch).mean(axis=1)
        h = jnp.maximum(y @ model.w1 + model.b1, 0.0)
        return h @ model.w2 + model.b2

    z1, z2 = rep(x1), rep(x2)
    n = z1.shape[0]

    def norm(z):
        m = z.mean(0)
        s = jnp.sqrt(jnp.sum((z - m) ** 2, axis=0) / (n - 1))  # unbiased std
        return (z - m) / s

    z1n, z2n = norm(z1), norm(z2)
    c = (z1n.T @ z2n) / n
    eye = jnp.eye(c.shape[0], dtype=c.dtype)
    c_diff = (c - eye) ** 2 * model.lmbda
    return (1.0 / model.lmbda - 1.0) * jnp.trace(c_diff) + c_diff.sum()


if __name__ == "__main__":
    key = jax.random.PRNGKey(0)
    k_params, k_x1, k_x2 = jax.random.split(key, 3)

    B, C, H, W = 8, 4, 16, 16
    model = BarlowModel(k_params, in_ch=C, enc_ch=32, proj_hidden=64,
                        proj_out=32, img_hw=H, batch=B, lmbda=0.005)

    # Two augmented views, NCHW, small shapes.
    x1 = jax.random.normal(k_x1, (B, C, H, W), jnp.float32)
    x2 = jax.random.normal(k_x2, (B, C, H, W), jnp.float32)

    loss = model.forward(x1, x2)
    loss = jax.block_until_ready(loss)

    ref = reference_loss(model, x1, x2)
    assert jnp.isfinite(loss), loss
    assert jnp.allclose(loss, ref, rtol=2e-3, atol=2e-3), (float(loss), float(ref))

    print("KERNEL_OK")
</pallas_src>

<mosaic_0001>
module attributes {stable_mosaic.version = 11 : i64} {
  func.func @_fused_forward_kernel(%arg0: i32, %arg1: memref<4096x36xf32, #tpu.memory_space<vmem>>, %arg2: memref<16x4096xf32, #tpu.memory_space<vmem>>, %arg3: memref<36x32xf32, #tpu.memory_space<vmem>>, %arg4: memref<1x32xf32, #tpu.memory_space<vmem>>, %arg5: memref<32x64xf32, #tpu.memory_space<vmem>>, %arg6: memref<1x64xf32, #tpu.memory_space<vmem>>, %arg7: memref<64x32xf32, #tpu.memory_space<vmem>>, %arg8: memref<1x32xf32, #tpu.memory_space<vmem>>, %arg9: memref<1x1xf32, #tpu.memory_space<vmem>>) attributes {dimension_semantics = [#tpu.dimension_semantics<arbitrary>], iteration_bounds = array<i64: 1>, scalar_prefetch = 0 : i64, scratch_operands = 0 : i64, tpu.core_type = #tpu.core_type<tc>, window_params = [{pipeline_mode = #tpu.pipeline_mode<synchronous>, transform_indices = @transform_0, window_bounds = array<i64: 4096, 36>}, {pipeline_mode = #tpu.pipeline_mode<synchronous>, transform_indices = @transform_1, window_bounds = array<i64: 16, 4096>}, {pipeline_mode = #tpu.pipeline_mode<synchronous>, transform_indices = @transform_2, window_bounds = array<i64: 36, 32>}, {pipeline_mode = #tpu.pipeline_mode<synchronous>, transform_indices = @transform_3, window_bounds = array<i64: 1, 32>}, {pipeline_mode = #tpu.pipeline_mode<synchronous>, transform_indices = @transform_4, window_bounds = array<i64: 32, 64>}, {pipeline_mode = #tpu.pipeline_mode<synchronous>, transform_indices = @transform_5, window_bounds = array<i64: 1, 64>}, {pipeline_mode = #tpu.pipeline_mode<synchronous>, transform_indices = @transform_6, window_bounds = array<i64: 64, 32>}, {pipeline_mode = #tpu.pipeline_mode<synchronous>, transform_indices = @transform_7, window_bounds = array<i64: 1, 32>}, {pipeline_mode = #tpu.pipeline_mode<synchronous>, transform_indices = @transform_8, window_bounds = array<i64: 1, 1>}]} {
    %c0 = arith.constant 0 : index
    %c0_0 = arith.constant 0 : index
    %0 = vector.load %arg1[%c0, %c0_0] : memref<4096x36xf32, #tpu.memory_space<vmem>>, vector<4096x36xf32>
    %c0_1 = arith.constant 0 : index
    %c0_2 = arith.constant 0 : index
    %1 = vector.load %arg3[%c0_1, %c0_2] : memref<36x32xf32, #tpu.memory_space<vmem>>, vector<36x32xf32>
    %cst = arith.constant dense<0.000000e+00> : vector<4096x32xf32>
    %2 = tpu.matmul %0, %1, %cst {dimension_numbers = #tpu.dot_dimension_numbers<[1], [0], [0], [1], [0, 0, 1, 1], [], []>} : vector<4096x36xf32>, vector<36x32xf32>, vector<4096x32xf32> -> vector<4096x32xf32>
    %c0_3 = arith.constant 0 : index
    %c0_4 = arith.constant 0 : index
    %3 = vector.load %arg4[%c0_3, %c0_4] : memref<1x32xf32, #tpu.memory_space<vmem>>, vector<1x32xf32>
    %4 = vector.broadcast %3 : vector<1x32xf32> to vector<4096x32xf32>
    %5 = arith.addf %2, %4 : vector<4096x32xf32>
    %cst_5 = arith.constant 0.000000e+00 : f32
    %6 = vector.broadcast %cst_5 : f32 to vector<4096x32xf32>
    %7 = arith.maximumf %5, %6 : vector<4096x32xf32>
    %c0_6 = arith.constant 0 : index
    %c0_7 = arith.constant 0 : index
    %8 = vector.load %arg2[%c0_6, %c0_7] : memref<16x4096xf32, #tpu.memory_space<vmem>>, vector<16x4096xf32>
    %cst_8 = arith.constant dense<0.000000e+00> : vector<16x32xf32>
    %9 = tpu.matmul %8, %7, %cst_8 {dimension_numbers = #tpu.dot_dimension_numbers<[1], [0], [0], [1], [0, 0, 1, 1], [], []>} : vector<16x4096xf32>, vector<4096x32xf32>, vector<16x32xf32> -> vector<16x32xf32>
    %c0_9 = arith.constant 0 : index
    %c0_10 = arith.constant 0 : index
    %10 = vector.load %arg5[%c0_9, %c0_10] : memref<32x64xf32, #tpu.memory_space<vmem>>, vector<32x64xf32>
    %cst_11 = arith.constant dense<0.000000e+00> : vector<16x64xf32>
    %11 = tpu.matmul %9, %10, %cst_11 {dimension_numbers = #tpu.dot_dimension_numbers<[1], [0], [0], [1], [0, 0, 1, 1], [], []>} : vector<16x32xf32>, vector<32x64xf32>, vector<16x64xf32> -> vector<16x64xf32>
    %c0_12 = arith.constant 0 : index
    %c0_13 = arith.constant 0 : index
    %12 = vector.load %arg6[%c0_12, %c0_13] : memref<1x64xf32, #tpu.memory_space<vmem>>, vector<1x64xf32>
    %13 = vector.broadcast %12 : vector<1x64xf32> to vector<16x64xf32>
    %14 = arith.addf %11, %13 : vector<16x64xf32>
    %cst_14 = arith.constant 0.000000e+00 : f32
    %15 = vector.broadcast %cst_14 : f32 to vector<16x64xf32>
    %16 = arith.maximumf %14, %15 : vector<16x64xf32>
    %c0_15 = arith.constant 0 : index
    %c0_16 = arith.constant 0 : index
    %17 = vector.load %arg7[%c0_15, %c0_16] : memref<64x32xf32, #tpu.memory_space<vmem>>, vector<64x32xf32>
    %cst_17 = arith.constant dense<0.000000e+00> : vector<16x32xf32>
    %18 = tpu.matmul %16, %17, %cst_17 {dimension_numbers = #tpu.dot_dimension_numbers<[1], [0], [0], [1], [0, 0, 1, 1], [], []>} : vector<16x64xf32>, vector<64x32xf32>, vector<16x32xf32> -> vector<16x32xf32>
    %c0_18 = arith.constant 0 : index
    %c0_19 = arith.constant 0 : index
    %19 = vector.load %arg8[%c0_18, %c0_19] : memref<1x32xf32, #tpu.memory_space<vmem>>, vector<1x32xf32>
    %20 = vector.broadcast %19 : vector<1x32xf32> to vector<16x32xf32>
    %21 = arith.addf %18, %20 : vector<16x32xf32>
    %22 = vector.extract_strided_slice %21 {offsets = [0, 0], sizes = [8, 32], strides = [1, 1]} : vector<16x32xf32> to vector<8x32xf32>
    %23 = vector.extract_strided_slice %21 {offsets = [8, 0], sizes = [8, 32], strides = [1, 1]} : vector<16x32xf32> to vector<8x32xf32>
    %cst_20 = arith.constant dense<0.000000e+00> : vector<32xf32>
    %24 = vector.multi_reduction <add>, %22, %cst_20 [0] : vector<8x32xf32> to vector<32xf32>
    %25 = vector.shape_cast %24 : vector<32xf32> to vector<1x32xf32>
    %cst_21 = arith.constant 8.000000e+00 : f32
    %26 = vector.broadcast %cst_21 : f32 to vector<1x32xf32>
    %27 = arith.divf %25, %26 : vector<1x32xf32>
    %28 = vector.broadcast %27 : vector<1x32xf32> to vector<8x32xf32>
    %29 = arith.subf %22, %28 : vector<8x32xf32>
    %30 = arith.mulf %29, %29 : vector<8x32xf32>
    %cst_22 = arith.constant dense<0.000000e+00> : vector<32xf32>
    %31 = vector.multi_reduction <add>, %30, %cst_22 [0] : vector<8x32xf32> to vector<32xf32>
    %32 = vector.shape_cast %31 : vector<32xf32> to vector<1x32xf32>
    %cst_23 = arith.constant 7.000000e+00 : f32
    %33 = vector.broadcast %cst_23 : f32 to vector<1x32xf32>
    %34 = arith.divf %32, %33 : vector<1x32xf32>
    %35 = math.rsqrt %34 : vector<1x32xf32>
    %36 = vector.broadcast %35 : vector<1x32xf32> to vector<8x32xf32>
    %37 = arith.mulf %29, %36 : vector<8x32xf32>
    %cst_24 = arith.constant dense<0.000000e+00> : vector<32xf32>
    %38 = vector.multi_reduction <add>, %23, %cst_24 [0] : vector<8x32xf32> to vector<32xf32>
    %39 = vector.shape_cast %38 : vector<32xf32> to vector<1x32xf32>
    %cst_25 = arith.constant 8.000000e+00 : f32
    %40 = vector.broadcast %cst_25 : f32 to vector<1x32xf32>
    %41 = arith.divf %39, %40 : vector<1x32xf32>
    %42 = vector.broadcast %41 : vector<1x32xf32> to vector<8x32xf32>
    %43 = arith.subf %23, %42 : vector<8x32xf32>
    %44 = arith.mulf %43, %43 : vector<8x32xf32>
    %cst_26 = arith.constant dense<0.000000e+00> : vector<32xf32>
    %45 = vector.multi_reduction <add>, %44, %cst_26 [0] : vector<8x32xf32> to vector<32xf32>
    %46 = vector.shape_cast %45 : vector<32xf32> to vector<1x32xf32>
    %cst_27 = arith.constant 7.000000e+00 : f32
    %47 = vector.broadcast %cst_27 : f32 to vector<1x32xf32>
    %48 = arith.divf %46, %47 : vector<1x32xf32>
    %49 = math.rsqrt %48 : vector<1x32xf32>
    %50 = vector.broadcast %49 : vector<1x32xf32> to vector<8x32xf32>
    %51 = arith.mulf %43, %50 : vector<8x32xf32>
    "tpu.trace_start"() <{level = 10 : i32, message = "nd,ne->de"}> : () -> ()
    %cst_28 = arith.constant dense<0.000000e+00> : vector<32x32xf32>
    %52 = tpu.matmul %37, %51, %cst_28 {dimension_numbers = #tpu.dot_dimension_numbers<[0], [0], [1], [1], [0, 1, 1, 1], [], []>} : vector<8x32xf32>, vector<8x32xf32>, vector<32x32xf32> -> vector<32x32xf32>
    "tpu.trace_stop"() : () -> ()
    %cst_29 = arith.constant 8.000000e+00 : f32
    %53 = vector.broadcast %cst_29 : f32 to vector<32x32xf32>
    %54 = arith.divf %52, %53 : vector<32x32xf32>
    %55 = tpu.iota {dimensions = array<i32: 0>} : vector<32x32xi32>
    %56 = tpu.iota {dimensions = array<i32: 1>} : vector<32x32xi32>
    %57 = arith.cmpi eq, %55, %56 : vector<32x32xi32>
    %58 = arith.extui %57 : vector<32x32xi1> to vector<32x32xi32>
    %59 = arith.sitofp %58 : vector<32x32xi32> to vector<32x32xf32>
    %60 = arith.subf %54, %59 : vector<32x32xf32>
    %61 = arith.mulf %60, %60 : vector<32x32xf32>
    %cst_30 = arith.constant 5.000000e-03 : f32
    %62 = vector.broadcast %cst_30 : f32 to vector<32x32xf32>
    %63 = arith.mulf %61, %62 : vector<32x32xf32>
    %cst_31 = arith.constant 2.000000e+02 : f32
    %cst_32 = arith.constant 1.000000e+00 : f32
    %64 = vector.broadcast %cst_31 : f32 to vector<32x32xf32>
    %65 = vector.broadcast %cst_32 : f32 to vector<32x32xf32>
    %66 = arith.select %57, %64, %65 : vector<32x32xi1>, vector<32x32xf32>
    %67 = arith.mulf %63, %66 : vector<32x32xf32>
    %68 = vector.shape_cast %67 : vector<32x32xf32> to vector<1x32x32xf32>
    %cst_33 = arith.constant dense<0.000000e+00> : vector<1xf32>
    %69 = vector.multi_reduction <add>, %68, %cst_33 [1, 2] : vector<1x32x32xf32> to vector<1xf32>
    %70 = vector.shape_cast %69 : vector<1xf32> to vector<1x1x1xf32>
    %71 = vector.extract %70[0, 0, 0] : f32 from vector<1x1x1xf32>
    %72 = vector.broadcast %71 : f32 to vector<1x1xf32>
    %c0_34 = arith.constant 0 : index
    %c0_35 = arith.constant 0 : index
    %73 = vector.load %arg9[%c0_34, %c0_35] : memref<1x1xf32, #tpu.memory_space<vmem>>, vector<1x1xf32>
    tpu.vector_store %arg9[%c0_34, %c0_35], %72 {strides = array<i32>} : memref<1x1xf32, #tpu.memory_space<vmem>>, vector<1x1xf32>,
    return
  }
  func.func @transform_0(%arg0: i32) -> (i32, i32) {
    %c0_i32 = arith.constant 0 : i32
    %c0_i32_0 = arith.constant 0 : i32
    %c0_i32_1 = arith.constant 0 : i32
    return %c0_i32, %c0_i32_0 : i32, i32
  }
  func.func @transform_1(%arg0: i32) -> (i32, i32) {
    %c0_i32 = arith.constant 0 : i32
    %c0_i32_0 = arith.constant 0 : i32
    %c0_i32_1 = arith.constant 0 : i32
    return %c0_i32, %c0_i32_0 : i32, i32
  }
  func.func @transform_2(%arg0: i32) -> (i32, i32) {
    %c0_i32 = arith.constant 0 : i32
    %c0_i32_0 = arith.constant 0 : i32
    %c0_i32_1 = arith.constant 0 : i32
    return %c0_i32, %c0_i32_0 : i32, i32
  }
  func.func @transform_3(%arg0: i32) -> (i32, i32) {
    %c0_i32 = arith.constant 0 : i32
    %c0_i32_0 = arith.constant 0 : i32
    %c0_i32_1 = arith.constant 0 : i32
    return %c0_i32, %c0_i32_0 : i32, i32
  }
  func.func @transform_4(%arg0: i32) -> (i32, i32) {
    %c0_i32 = arith.constant 0 : i32
    %c0_i32_0 = arith.constant 0 : i32
    %c0_i32_1 = arith.constant 0 : i32
    return %c0_i32, %c0_i32_0 : i32, i32
  }
  func.func @transform_5(%arg0: i32) -> (i32, i32) {
    %c0_i32 = arith.constant 0 : i32
    %c0_i32_0 = arith.constant 0 : i32
    %c0_i32_1 = arith.constant 0 : i32
    return %c0_i32, %c0_i32_0 : i32, i32
  }
  func.func @transform_6(%arg0: i32) -> (i32, i32) {
    %c0_i32 = arith.constant 0 : i32
    %c0_i32_0 = arith.constant 0 : i32
    %c0_i32_1 = arith.constant 0 : i32
    return %c0_i32, %c0_i32_0 : i32, i32
  }
  func.func @transform_7(%arg0: i32) -> (i32, i32) {
    %c0_i32 = arith.constant 0 : i32
    %c0_i32_0 = arith.constant 0 : i32
    %c0_i32_1 = arith.constant 0 : i32
    return %c0_i32, %c0_i32_0 : i32, i32
  }
  func.func @transform_8(%arg0: i32) -> (i32, i32) {
    %c0_i32 = arith.constant 0 : i32
    %c0_i32_0 = arith.constant 0 : i32
    %c0_i32_1 = arith.constant 0 : i32
    return %c0_i32, %c0_i32_0 : i32, i32
  }
}

</mosaic_0001>

<llo_original>
// kernel: _forward.1
$region0: #{_forward.1}
  #allocation0 [shape = 'u32[]', space=smem, size = 0x4, offset = 0x4, fixed_abs, tag = 'smem constant byte address 0x4 - core index']
  #allocation1 [shape = 'u32[144,128]{1,0:T(1,128)}', space=vmem, size = 0x12000, scoped, tag = 'internal scratch']
  %s0 = inlined_call_operand.vmem [shape: f32[4096,36], index: 0, kind: input, shape index: {}]
  %s1 = inlined_call_operand.vmem [shape: f32[16,4096], index: 1, kind: input, shape index: {}]
  %s2 = inlined_call_operand.vmem [shape: f32[36,32], index: 2, kind: input, shape index: {}]
  %s3 = inlined_call_operand.vmem [shape: f32[1,32], index: 3, kind: input, shape index: {}]
  %s4 = inlined_call_operand.vmem [shape: f32[32,64], index: 4, kind: input, shape index: {}]
  %s5 = inlined_call_operand.vmem [shape: f32[1,64], index: 5, kind: input, shape index: {}]
  %s6 = inlined_call_operand.vmem [shape: f32[64,32], index: 6, kind: input, shape index: {}]
  %s7 = inlined_call_operand.vmem [shape: f32[1,32], index: 7, kind: input, shape index: {}]
  %s8 = inlined_call_operand.hbm [shape: f32[1,1], index: 8, kind: output, shape index: {}]
  %s9 = sld [smem:[#allocation0]]
  $region42: #{_forward.1} parent=0
    _
  %s11 = ssub.s32 1, %s9
  %s12 = scalar_select 0, %s11, %s9
  $region1: #{_forward.1} parent=0
    #allocation2 [shape = 'u8[512]{0}', space=vmem, size = 0x400, scoped, tag = 'output window, operand 0, single buffered']
    #allocation3 [shape = 's32[1]{0}', space=sflag, size = 0x4, scoped, tag = 'scoped memory for _forward.1']
    %13 = vsyncpa [#allocation3], 0
    // Predicated region
    $region2: #{_forward.1} parent=1 // pred_check
      _
    $region3: #{_forward.1} parent=1 // pred_check_branch
      %15 = sbr.rel (0) target = $region5
    $region4: #{_forward.1} parent=1 // pred_region
      _
    $region5: #{_forward.1} parent=1 // pred_fallthru
      _
    // Predicated region
    $region6: #{_forward.1} parent=1 // pred_check
      _
    $region7: #{_forward.1} parent=1 // pred_check_branch
      %17 = sbr.rel (0) target = $region9
    $region8: #{_forward.1} parent=1 // pred_region
      _
    $region9: #{_forward.1} parent=1 // pred_fallthru
      _
    // Predicated region
    $region10: #{_forward.1} parent=1 // pred_check
      _
    $region11: #{_forward.1} parent=1 // pred_check_branch
      %19 = sbr.rel (0) target = $region13
    $region12: #{_forward.1} parent=1 // pred_region
      _
    $region13: #{_forward.1} parent=1 // pred_fallthru
      _
    // Predicated region
    $region14: #{_forward.1} parent=1 // pred_check
      _
    $region15: #{_forward.1} parent=1 // pred_check_branch
      %21 = sbr.rel (0) target = $region17
    $region16: #{_forward.1} parent=1 // pred_region
      _
    $region17: #{_forward.1} parent=1 // pred_fallthru
      _
    // Predicated region
    $region18: #{_forward.1} parent=1 // pred_check
      _
    $region19: #{_forward.1} parent=1 // pred_check_branch
      %23 = sbr.rel (0) target = $region21
    $region20: #{_forward.1} parent=1 // pred_region
      _
    $region21: #{_forward.1} parent=1 // pred_fallthru
      _
    // Predicated region
    $region22: #{_forward.1} parent=1 // pred_check
      _
    $region23: #{_forward.1} parent=1 // pred_check_branch
      %25 = sbr.rel (0) target = $region25
    $region24: #{_forward.1} parent=1 // pred_region
      _
    $region25: #{_forward.1} parent=1 // pred_fallthru
      _
    // Predicated region
    $region26: #{_forward.1} parent=1 // pred_check
      _
    $region27: #{_forward.1} parent=1 // pred_check_branch
      %27 = sbr.rel (0) target = $region29
    $region28: #{_forward.1} parent=1 // pred_region
      _
    $region29: #{_forward.1} parent=1 // pred_fallthru
      _
    // Predicated region
    $region30: #{_forward.1} parent=1 // pred_check
      _
    $region31: #{_forward.1} parent=1 // pred_check_branch
      %29 = sbr.rel (0) target = $region33
    $region32: #{_forward.1} parent=1 // pred_region
      _
    $region33: #{_forward.1} parent=1 // pred_fallthru
      _
    %v30 = vld [vmem:[%s0] sm:$0xff]
    %v31 = vld [vmem:[%s0 + $0x8] sm:$0xff]
    %v32 = vld [vmem:[%s0 + $0x10] sm:$0xff]
    %v33 = vld [vmem:[%s0 + $0x18] sm:$0xff]
    %v34 = vld [vmem:[%s0 + $0x20] sm:$0xff]
    %v35 = vld [vmem:[%s0 + $0x28] sm:$0xff]
    %v36 = vld [vmem:[%s0 + $0x30] sm:$0xff]
    %v37 = vld [vmem:[%s0 + $0x38] sm:$0xff]
    %v38 = vld [vmem:[%s0 + $0x40] sm:$0xff]
    %v39 = vld [vmem:[%s0 + $0x48] sm:$0xff]
    %v40 = vld [vmem:[%s0 + $0x50] sm:$0xff]
    %v41 = vld [vmem:[%s0 + $0x58] sm:$0xff]
    %v42 = vld [vmem:[%s0 + $0x60] sm:$0xff]
    %v43 = vld [vmem:[%s0 + $0x68] sm:$0xff]
    %v44 = vld [vmem:[%s0 + $0x70] sm:$0xff]
    %v45 = vld [vmem:[%s0 + $0x78] sm:$0xff]
    %v46 = vld [vmem:[%s0 + $0x80] sm:$0xff]
    %v47 = vld [vmem:[%s0 + $0x88] sm:$0xff]
    %v48 = vld [vmem:[%s0 + $0x90] sm:$0xff]
    %v49 = vld [vmem:[%s0 + $0x98] sm:$0xff]
    %v50 = vld [vmem:[%s0 + $0xa0] sm:$0xff]
    %v51 = vld [vmem:[%s0 + $0xa8] sm:$0xff]
    %v52 = vld [vmem:[%s0 + $0xb0] sm:$0xff]
    %v53 = vld [vmem:[%s0 + $0xb8] sm:$0xff]
    %v54 = vld [vmem:[%s0 + $0xc0] sm:$0xff]
    %v55 = vld [vmem:[%s0 + $0xc8] sm:$0xff]
    %v56 = vld [vmem:[%s0 + $0xd0] sm:$0xff]
    %v57 = vld [vmem:[%s0 + $0xd8] sm:$0xff]
    %v58 = vld [vmem:[%s0 + $0xe0] sm:$0xff]
    %v59 = vld [vmem:[%s0 + $0xe8] sm:$0xff]
    %v60 = vld [vmem:[%s0 + $0xf0] sm:$0xff]
    %v61 = vld [vmem:[%s0 + $0xf8] sm:$0xff]
    %v62 = vld [vmem:[%s0 + $0x100] sm:$0xff]
    %v63 = vld [vmem:[%s0 + $0x108] sm:$0xff]
    %v64 = vld [vmem:[%s0 + $0x110] sm:$0xff]
    %v65 = vld [vmem:[%s0 + $0x118] sm:$0xff]
    %v66 = vld [vmem:[%s0 + $0x120] sm:$0xff]
    %v67 = vld [vmem:[%s0 + $0x128] sm:$0xff]
    %v68 = vld [vmem:[%s0 + $0x130] sm:$0xff]
    %v69 = vld [vmem:[%s0 + $0x138] sm:$0xff]
    %v70 = vld [vmem:[%s0 + $0x140] sm:$0xff]
    %v71 = vld [vmem:[%s0 + $0x148] sm:$0xff]
    %v72 = vld [vmem:[%s0 + $0x150] sm:$0xff]
    %v73 = vld [vmem:[%s0 + $0x158] sm:$0xff]
    %v74 = vld [vmem:[%s0 + $0x160] sm:$0xff]
    %v75 = vld [vmem:[%s0 + $0x168] sm:$0xff]
    %v76 = vld [vmem:[%s0 + $0x170] sm:$0xff]
    %v77 = vld [vmem:[%s0 + $0x178] sm:$0xff]
    %v78 = vld [vmem:[%s0 + $0x180] sm:$0xff]
    %v79 = vld [vmem:[%s0 + $0x188] sm:$0xff]
    %v80 = vld [vmem:[%s0 + $0x190] sm:$0xff]
    %v81 = vld [vmem:[%s0 + $0x198] sm:$0xff]
    %v82 = vld [vmem:[%s0 + $0x1a0] sm:$0xff]
    %v83 = vld [vmem:[%s0 + $0x1a8] sm:$0xff]
    %v84 = vld [vmem:[%s0 + $0x1b0] sm:$0xff]
    %v85 = vld [vmem:[%s0 + $0x1b8] sm:$0xff]
    %v86 = vld [vmem:[%s0 + $0x1c0] sm:$0xff]
    %v87 = vld [vmem:[%s0 + $0x1c8] sm:$0xff]
    %v88 = vld [vmem:[%s0 + $0x1d0] sm:$0xff]
    %v89 = vld [vmem:[%s0 + $0x1d8] sm:$0xff]
    %v90 = vld [vmem:[%s0 + $0x1e0] sm:$0xff]
    %v91 = vld [vmem:[%s0 + $0x1e8] sm:$0xff]
    %v92 = vld [vmem:[%s0 + $0x1f0] sm:$0xff]
    %v93 = vld [vmem:[%s0 + $0x1f8] sm:$0xff]
    %v94 = vld [vmem:[%s0 + $0x200] sm:$0xff]
    %v95 = vld [vmem:[%s0 + $0x208] sm:$0xff]
    %v96 = vld [vmem:[%s0 + $0x210] sm:$0xff]
    %v97 = vld [vmem:[%s0 + $0x218] sm:$0xff]
    %v98 = vld [vmem:[%s0 + $0x220] sm:$0xff]
    %v99 = vld [vmem:[%s0 + $0x228] sm:$0xff]
    %v100 = vld [vmem:[%s0 + $0x230] sm:$0xff]
    %v101 = vld [vmem:[%s0 + $0x238] sm:$0xff]
    %v102 = vld [vmem:[%s0 + $0x240] sm:$0xff]
    %v103 = vld [vmem:[%s0 + $0x248] sm:$0xff]
    %v104 = vld [vmem:[%s0 + $0x250] sm:$0xff]
    %v105 = vld [vmem:[%s0 + $0x258] sm:$0xff]
    %v106 = vld [vmem:[%s0 + $0x260] sm:$0xff]
    %v107 = vld [vmem:[%s0 + $0x268] sm:$0xff]
    %v108 = vld [vmem:[%s0 + $0x270] sm:$0xff]
    %v109 = vld [vmem:[%s0 + $0x278] sm:$0xff]
    %v110 = vld [vmem:[%s0 + $0x280] sm:$0xff]
    %v111 = vld [vmem:[%s0 + $0x288] sm:$0xff]
    %v112 = vld [vmem:[%s0 + $0x290] sm:$0xff]
    %v113 = vld [vmem:[%s0 + $0x298] sm:$0xff]
    %v114 = vld [vmem:[%s0 + $0x2a0] sm:$0xff]
    %v115 = vld [vmem:[%s0 + $0x2a8] sm:$0xff]
    %v116 = vld [vmem:[%s0 + $0x2b0] sm:$0xff]
    %v117 = vld [vmem:[%s0 + $0x2b8] sm:$0xff]
    %v118 = vld [vmem:[%s0 + $0x2c0] sm:$0xff]
    %v119 = vld [vmem:[%s0 + $0x2c8] sm:$0xff]
    %v120 = vld [vmem:[%s0 + $0x2d0] sm:$0xff]
    %v121 = vld [vmem:[%s0 + $0x2d8] sm:$0xff]
    %v122 = vld [vmem:[%s0 + $0x2e0] sm:$0xff]
    %v123 = vld [vmem:[%s0 + $0x2e8] sm:$0xff]
    %v124 = vld [vmem:[%s0 + $0x2f0] sm:$0xff]
    %v125 = vld [vmem:[%s0 + $0x2f8] sm:$0xff]
    %v126 = vld [vmem:[%s0 + $0x300] sm:$0xff]
    %v127 = vld [vmem:[%s0 + $0x308] sm:$0xff]
    %v128 = vld [vmem:[%s0 + $0x310] sm:$0xff]
    %v129 = vld [vmem:[%s0 + $0x318] sm:$0xff]
    %v130 = vld [vmem:[%s0 + $0x320] sm:$0xff]
    %v131 = vld [vmem:[%s0 + $0x328] sm:$0xff]
    %v132 = vld [vmem:[%s0 + $0x330] sm:$0xff]
    %v133 = vld [vmem:[%s0 + $0x338] sm:$0xff]
    %v134 = vld [vmem:[%s0 + $0x340] sm:$0xff]
    %v135 = vld [vmem:[%s0 + $0x348] sm:$0xff]
    %v136 = vld [vmem:[%s0 + $0x350] sm:$0xff]
    %v137 = vld [vmem:[%s0 + $0x358] sm:$0xff]
    %v138 = vld [vmem:[%s0 + $0x360] sm:$0xff]
    %v139 = vld [vmem:[%s0 + $0x368] sm:$0xff]
    %v140 = vld [vmem:[%s0 + $0x370] sm:$0xff]
    %v141 = vld [vmem:[%s0 + $0x378] sm:$0xff]
    %v142 = vld [vmem:[%s0 + $0x380] sm:$0xff]
    %v143 = vld [vmem:[%s0 + $0x388] sm:$0xff]
    %v144 = vld [vmem:[%s0 + $0x390] sm:$0xff]
    %v145 = vld [vmem:[%s0 + $0x398] sm:$0xff]
    %v146 = vld [vmem:[%s0 + $0x3a0] sm:$0xff]
    %v147 = vld [vmem:[%s0 + $0x3a8] sm:$0xff]
    %v148 = vld [vmem:[%s0 + $0x3b0] sm:$0xff]
    %v149 = vld [vmem:[%s0 + $0x3b8] sm:$0xff]
    %v150 = vld [vmem:[%s0 + $0x3c0] sm:$0xff]
    %v151 = vld [vmem:[%s0 + $0x3c8] sm:$0xff]
    %v152 = vld [vmem:[%s0 + $0x3d0] sm:$0xff]
    %v153 = vld [vmem:[%s0 + $0x3d8] sm:$0xff]
    %v154 = vld [vmem:[%s0 + $0x3e0] sm:$0xff]
    %v155 = vld [vmem:[%s0 + $0x3e8] sm:$0xff]
    %v156 = vld [vmem:[%s0 + $0x3f0] sm:$0xff]
    %v157 = vld [vmem:[%s0 + $0x3f8] sm:$0xff]
    %v158 = vld [vmem:[%s0 + $0x400] sm:$0xff]
    %v159 = vld [vmem:[%s0 + $0x408] sm:$0xff]
    %v160 = vld [vmem:[%s0 + $0x410] sm:$0xff]
    %v161 = vld [vmem:[%s0 + $0x418] sm:$0xff]
    %v162 = vld [vmem:[%s0 + $0x420] sm:$0xff]
    %v163 = vld [vmem:[%s0 + $0x428] sm:$0xff]
    %v164 = vld [vmem:[%s0 + $0x430] sm:$0xff]
    %v165 = vld [vmem:[%s0 + $0x438] sm:$0xff]
    %v166 = vld [vmem:[%s0 + $0x440] sm:$0xff]
    %v167 = vld [vmem:[%s0 + $0x448] sm:$0xff]
    %v168 = vld [vmem:[%s0 + $0x450] sm:$0xff]
    %v169 = vld [vmem:[%s0 + $0x458] sm:$0xff]
    %v170 = vld [vmem:[%s0 + $0x460] sm:$0xff]
    %v171 = vld [vmem:[%s0 + $0x468] sm:$0xff]
    %v172 = vld [vmem:[%s0 + $0x470] sm:$0xff]
    %v173 = vld [vmem:[%s0 + $0x478] sm:$0xff]
    %v174 = vld [vmem:[%s0 + $0x480] sm:$0xff]
    %v175 = vld [vmem:[%s0 + $0x488] sm:$0xff]
    %v176 = vld [vmem:[%s0 + $0x490] sm:$0xff]
    %v177 = vld [vmem:[%s0 + $0x498] sm:$0xff]
    %v178 = vld [vmem:[%s0 + $0x4a0] sm:$0xff]
    %v179 = vld [vmem:[%s0 + $0x4a8] sm:$0xff]
    %v180 = vld [vmem:[%s0 + $0x4b0] sm:$0xff]
    %v181 = vld [vmem:[%s0 + $0x4b8] sm:$0xff]
    %v182 = vld [vmem:[%s0 + $0x4c0] sm:$0xff]
    %v183 = vld [vmem:[%s0 + $0x4c8] sm:$0xff]
    %v184 = vld [vmem:[%s0 + $0x4d0] sm:$0xff]
    %v185 = vld [vmem:[%s0 + $0x4d8] sm:$0xff]
    %v186 = vld [vmem:[%s0 + $0x4e0] sm:$0xff]
    %v187 = vld [vmem:[%s0 + $0x4e8] sm:$0xff]
    %v188 = vld [vmem:[%s0 + $0x4f0] sm:$0xff]
    %v189 = vld [vmem:[%s0 + $0x4f8] sm:$0xff]
    %v190 = vld [vmem:[%s0 + $0x500] sm:$0xff]
    %v191 = vld [vmem:[%s0 + $0x508] sm:$0xff]
    %v192 = vld [vmem:[%s0 + $0x510] sm:$0xff]
    %v193 = vld [vmem:[%s0 + $0x518] sm:$0xff]
    %v194 = vld [vmem:[%s0 + $0x520] sm:$0xff]
    %v195 = vld [vmem:[%s0 + $0x528] sm:$0xff]
    %v196 = vld [vmem:[%s0 + $0x530] sm:$0xff]
    %v197 = vld [vmem:[%s0 + $0x538] sm:$0xff]
    %v198 = vld [vmem:[%s0 + $0x540] sm:$0xff]
    %v199 = vld [vmem:[%s0 + $0x548] sm:$0xff]
    %v200 = vld [vmem:[%s0 + $0x550] sm:$0xff]
    %v201 = vld [vmem:[%s0 + $0x558] sm:$0xff]
    %v202 = vld [vmem:[%s0 + $0x560] sm:$0xff]
    %v203 = vld [vmem:[%s0 + $0x568] sm:$0xff]
    %v204 = vld [vmem:[%s0 + $0x570] sm:$0xff]
    %v205 = vld [vmem:[%s0 + $0x578] sm:$0xff]
    %v206 = vld [vmem:[%s0 + $0x580] sm:$0xff]
    %v207 = vld [vmem:[%s0 + $0x588] sm:$0xff]
    %v208 = vld [vmem:[%s0 + $0x590] sm:$0xff]
    %v209 = vld [vmem:[%s0 + $0x598] sm:$0xff]
    %v210 = vld [vmem:[%s0 + $0x5a0] sm:$0xff]
    %v211 = vld [vmem:[%s0 + $0x5a8] sm:$0xff]
    %v212 = vld [vmem:[%s0 + $0x5b0] sm:$0xff]
    %v213 = vld [vmem:[%s0 + $0x5b8] sm:$0xff]
    %v214 = vld [vmem:[%s0 + $0x5c0] sm:$0xff]
    %v215 = vld [vmem:[%s0 + $0x5c8] sm:$0xff]
    %v216 = vld [vmem:[%s0 + $0x5d0] sm:$0xff]
    %v217 = vld [vmem:[%s0 + $0x5d8] sm:$0xff]
    %v218 = vld [vmem:[%s0 + $0x5e0] sm:$0xff]
    %v219 = vld [vmem:[%s0 + $0x5e8] sm:$0xff]
    %v220 = vld [vmem:[%s0 + $0x5f0] sm:$0xff]
    %v221 = vld [vmem:[%s0 + $0x5f8] sm:$0xff]
    %v222 = vld [vmem:[%s0 + $0x600] sm:$0xff]
    %v223 = vld [vmem:[%s0 + $0x608] sm:$0xff]
    %v224 = vld [vmem:[%s0 + $0x610] sm:$0xff]
    %v225 = vld [vmem:[%s0 + $0x618] sm:$0xff]
    %v226 = vld [vmem:[%s0 + $0x620] sm:$0xff]
    %v227 = vld [vmem:[%s0 + $0x628] sm:$0xff]
    %v228 = vld [vmem:[%s0 + $0x630] sm:$0xff]
    %v229 = vld [vmem:[%s0 + $0x638] sm:$0xff]
    %v230 = vld [vmem:[%s0 + $0x640] sm:$0xff]
    %v231 = vld [vmem:[%s0 + $0x648] sm:$0xff]
    %v232 = vld [vmem:[%s0 + $0x650] sm:$0xff]
    %v233 = vld [vmem:[%s0 + $0x658] sm:$0xff]
    %v234 = vld [vmem:[%s0 + $0x660] sm:$0xff]
    %v235 = vld [vmem:[%s0 + $0x668] sm:$0xff]
    %v236 = vld [vmem:[%s0 + $0x670] sm:$0xff]
    %v237 = vld [vmem:[%s0 + $0x678] sm:$0xff]
    %v238 = vld [vmem:[%s0 + $0x680] sm:$0xff]
    %v239 = vld [vmem:[%s0 + $0x688] sm:$0xff]
    %v240 = vld [vmem:[%s0 + $0x690] sm:$0xff]
    %v241 = vld [vmem:[%s0 + $0x698] sm:$0xff]
    %v242 = vld [vmem:[%s0 + $0x6a0] sm:$0xff]
    %v243 = vld [vmem:[%s0 + $0x6a8] sm:$0xff]
    %v244 = vld [vmem:[%s0 + $0x6b0] sm:$0xff]
    %v245 = vld [vmem:[%s0 + $0x6b8] sm:$0xff]
    %v246 = vld [vmem:[%s0 + $0x6c0] sm:$0xff]
    %v247 = vld [vmem:[%s0 + $0x6c8] sm:$0xff]
    %v248 = vld [vmem:[%s0 + $0x6d0] sm:$0xff]
    %v249 = vld [vmem:[%s0 + $0x6d8] sm:$0xff]
    %v250 = vld [vmem:[%s0 + $0x6e0] sm:$0xff]
    %v251 = vld [vmem:[%s0 + $0x6e8] sm:$0xff]
    %v252 = vld [vmem:[%s0 + $0x6f0] sm:$0xff]
    %v253 = vld [vmem:[%s0 + $0x6f8] sm:$0xff]
    %v254 = vld [vmem:[%s0 + $0x700] sm:$0xff]
    %v255 = vld [vmem:[%s0 + $0x708] sm:$0xff]
    %v256 = vld [vmem:[%s0 + $0x710] sm:$0xff]
    %v257 = vld [vmem:[%s0 + $0x718] sm:$0xff]
    %v258 = vld [vmem:[%s0 + $0x720] sm:$0xff]
    %v259 = vld [vmem:[%s0 + $0x728] sm:$0xff]
    %v260 = vld [vmem:[%s0 + $0x730] sm:$0xff]
    %v261 = vld [vmem:[%s0 + $0x738] sm:$0xff]
    %v262 = vld [vmem:[%s0 + $0x740] sm:$0xff]
    %v263 = vld [vmem:[%s0 + $0x748] sm:$0xff]
    %v264 = vld [vmem:[%s0 + $0x750] sm:$0xff]
    %v265 = vld [vmem:[%s0 + $0x758] sm:$0xff]
    %v266 = vld [vmem:[%s0 + $0x760] sm:$0xff]
    %v267 = vld [vmem:[%s0 + $0x768] sm:$0xff]
    %v268 = vld [vmem:[%s0 + $0x770] sm:$0xff]
    %v269 = vld [vmem:[%s0 + $0x778] sm:$0xff]
    %v270 = vld [vmem:[%s0 + $0x780] sm:$0xff]
    %v271 = vld [vmem:[%s0 + $0x788] sm:$0xff]
    %v272 = vld [vmem:[%s0 + $0x790] sm:$0xff]
    %v273 = vld [vmem:[%s0 + $0x798] sm:$0xff]
    %v274 = vld [vmem:[%s0 + $0x7a0] sm:$0xff]
    %v275 = vld [vmem:[%s0 + $0x7a8] sm:$0xff]
    %v276 = vld [vmem:[%s0 + $0x7b0] sm:$0xff]
    %v277 = vld [vmem:[%s0 + $0x7b8] sm:$0xff]
    %v278 = vld [vmem:[%s0 + $0x7c0] sm:$0xff]
    %v279 = vld [vmem:[%s0 + $0x7c8] sm:$0xff]
    %v280 = vld [vmem:[%s0 + $0x7d0] sm:$0xff]
    %v281 = vld [vmem:[%s0 + $0x7d8] sm:$0xff]
    %v282 = vld [vmem:[%s0 + $0x7e0] sm:$0xff]
    %v283 = vld [vmem:[%s0 + $0x7e8] sm:$0xff]
    %v284 = vld [vmem:[%s0 + $0x7f0] sm:$0xff]
    %v285 = vld [vmem:[%s0 + $0x7f8] sm:$0xff]
    %v286 = vld [vmem:[%s0 + $0x800] sm:$0xff]
    %v287 = vld [vmem:[%s0 + $0x808] sm:$0xff]
    %v288 = vld [vmem:[%s0 + $0x810] sm:$0xff]
    %v289 = vld [vmem:[%s0 + $0x818] sm:$0xff]
    %v290 = vld [vmem:[%s0 + $0x820] sm:$0xff]
    %v291 = vld [vmem:[%s0 + $0x828] sm:$0xff]
    %v292 = vld [vmem:[%s0 + $0x830] sm:$0xff]
    %v293 = vld [vmem:[%s0 + $0x838] sm:$0xff]
    %v294 = vld [vmem:[%s0 + $0x840] sm:$0xff]
    %v295 = vld [vmem:[%s0 + $0x848] sm:$0xff]
    %v296 = vld [vmem:[%s0 + $0x850] sm:$0xff]
    %v297 = vld [vmem:[%s0 + $0x858] sm:$0xff]
    %v298 = vld [vmem:[%s0 + $0x860] sm:$0xff]
    %v299 = vld [vmem:[%s0 + $0x868] sm:$0xff]
    %v300 = vld [vmem:[%s0 + $0x870] sm:$0xff]
    %v301 = vld [vmem:[%s0 + $0x878] sm:$0xff]
    %v302 = vld [vmem:[%s0 + $0x880] sm:$0xff]
    %v303 = vld [vmem:[%s0 + $0x888] sm:$0xff]
    %v304 = vld [vmem:[%s0 + $0x890] sm:$0xff]
    %v305 = vld [vmem:[%s0 + $0x898] sm:$0xff]
    %v306 = vld [vmem:[%s0 + $0x8a0] sm:$0xff]
    %v307 = vld [vmem:[%s0 + $0x8a8] sm:$0xff]
    %v308 = vld [vmem:[%s0 + $0x8b0] sm:$0xff]
    %v309 = vld [vmem:[%s0 + $0x8b8] sm:$0xff]
    %v310 = vld [vmem:[%s0 + $0x8c0] sm:$0xff]
    %v311 = vld [vmem:[%s0 + $0x8c8] sm:$0xff]
    %v312 = vld [vmem:[%s0 + $0x8d0] sm:$0xff]
    %v313 = vld [vmem:[%s0 + $0x8d8] sm:$0xff]
    %v314 = vld [vmem:[%s0 + $0x8e0] sm:$0xff]
    %v315 = vld [vmem:[%s0 + $0x8e8] sm:$0xff]
    %v316 = vld [vmem:[%s0 + $0x8f0] sm:$0xff]
    %v317 = vld [vmem:[%s0 + $0x8f8] sm:$0xff]
    %v318 = vld [vmem:[%s0 + $0x900] sm:$0xff]
    %v319 = vld [vmem:[%s0 + $0x908] sm:$0xff]
    %v320 = vld [vmem:[%s0 + $0x910] sm:$0xff]
    %v321 = vld [vmem:[%s0 + $0x918] sm:$0xff]
    %v322 = vld [vmem:[%s0 + $0x920] sm:$0xff]
    %v323 = vld [vmem:[%s0 + $0x928] sm:$0xff]
    %v324 = vld [vmem:[%s0 + $0x930] sm:$0xff]
    %v325 = vld [vmem:[%s0 + $0x938] sm:$0xff]
    %v326 = vld [vmem:[%s0 + $0x940] sm:$0xff]
    %v327 = vld [vmem:[%s0 + $0x948] sm:$0xff]
    %v328 = vld [vmem:[%s0 + $0x950] sm:$0xff]
    %v329 = vld [vmem:[%s0 + $0x958] sm:$0xff]
    %v330 = vld [vmem:[%s0 + $0x960] sm:$0xff]
    %v331 = vld [vmem:[%s0 + $0x968] sm:$0xff]
    %v332 = vld [vmem:[%s0 + $0x970] sm:$0xff]
    %v333 = vld [vmem:[%s0 + $0x978] sm:$0xff]
    %v334 = vld [vmem:[%s0 + $0x980] sm:$0xff]
    %v335 = vld [vmem:[%s0 + $0x988] sm:$0xff]
    %v336 = vld [vmem:[%s0 + $0x990] sm:$0xff]
    %v337 = vld [vmem:[%s0 + $0x998] sm:$0xff]
    %v338 = vld [vmem:[%s0 + $0x9a0] sm:$0xff]
    %v339 = vld [vmem:[%s0 + $0x9a8] sm:$0xff]
    %v340 = vld [vmem:[%s0 + $0x9b0] sm:$0xff]
    %v341 = vld [vmem:[%s0 + $0x9b8] sm:$0xff]
    %v342 = vld [vmem:[%s0 + $0x9c0] sm:$0xff]
    %v343 = vld [vmem:[%s0 + $0x9c8] sm:$0xff]
    %v344 = vld [vmem:[%s0 + $0x9d0] sm:$0xff]
    %v345 = vld [vmem:[%s0 + $0x9d8] sm:$0xff]
    %v346 = vld [vmem:[%s0 + $0x9e0] sm:$0xff]
    %v347 = vld [vmem:[%s0 + $0x9e8] sm:$0xff]
    %v348 = vld [vmem:[%s0 + $0x9f0] sm:$0xff]
    %v349 = vld [vmem:[%s0 + $0x9f8] sm:$0xff]
    %v350 = vld [vmem:[%s0 + $0xa00] sm:$0xff]
    %v351 = vld [vmem:[%s0 + $0xa08] sm:$0xff]
    %v352 = vld [vmem:[%s0 + $0xa10] sm:$0xff]
    %v353 = vld [vmem:[%s0 + $0xa18] sm:$0xff]
    %v354 = vld [vmem:[%s0 + $0xa20] sm:$0xff]
    %v355 = vld [vmem:[%s0 + $0xa28] sm:$0xff]
    %v356 = vld [vmem:[%s0 + $0xa30] sm:$0xff]
    %v357 = vld [vmem:[%s0 + $0xa38] sm:$0xff]
    %v358 = vld [vmem:[%s0 + $0xa40] sm:$0xff]
    %v359 = vld [vmem:[%s0 + $0xa48] sm:$0xff]
    %v360 = vld [vmem:[%s0 + $0xa50] sm:$0xff]
    %v361 = vld [vmem:[%s0 + $0xa58] sm:$0xff]
    %v362 = vld [vmem:[%s0 + $0xa60] sm:$0xff]
    %v363 = vld [vmem:[%s0 + $0xa68] sm:$0xff]
    %v364 = vld [vmem:[%s0 + $0xa70] sm:$0xff]
    %v365 = vld [vmem:[%s0 + $0xa78] sm:$0xff]
    %v366 = vld [vmem:[%s0 + $0xa80] sm:$0xff]
    %v367 = vld [vmem:[%s0 + $0xa88] sm:$0xff]
    %v368 = vld [vmem:[%s0 + $0xa90] sm:$0xff]
    %v369 = vld [vmem:[%s0 + $0xa98] sm:$0xff]
    %v370 = vld [vmem:[%s0 + $0xaa0] sm:$0xff]
    %v371 = vld [vmem:[%s0 + $0xaa8] sm:$0xff]
    %v372 = vld [vmem:[%s0 + $0xab0] sm:$0xff]
    %v373 = vld [vmem:[%s0 + $0xab8] sm:$0xff]
    %v374 = vld [vmem:[%s0 + $0xac0] sm:$0xff]
    %v375 = vld [vmem:[%s0 + $0xac8] sm:$0xff]
    %v376 = vld [vmem:[%s0 + $0xad0] sm:$0xff]
    %v377 = vld [vmem:[%s0 + $0xad8] sm:$0xff]
    %v378 = vld [vmem:[%s0 + $0xae0] sm:$0xff]
    %v379 = vld [vmem:[%s0 + $0xae8] sm:$0xff]
    %v380 = vld [vmem:[%s0 + $0xaf0] sm:$0xff]
    %v381 = vld [vmem:[%s0 + $0xaf8] sm:$0xff]
    %v382 = vld [vmem:[%s0 + $0xb00] sm:$0xff]
    %v383 = vld [vmem:[%s0 + $0xb08] sm:$0xff]
    %v384 = vld [vmem:[%s0 + $0xb10] sm:$0xff]
    %v385 = vld [vmem:[%s0 + $0xb18] sm:$0xff]
    %v386 = vld [vmem:[%s0 + $0xb20] sm:$0xff]
    %v387 = vld [vmem:[%s0 + $0xb28] sm:$0xff]
    %v388 = vld [vmem:[%s0 + $0xb30] sm:$0xff]
    %v389 = vld [vmem:[%s0 + $0xb38] sm:$0xff]
    %v390 = vld [vmem:[%s0 + $0xb40] sm:$0xff]
    %v391 = vld [vmem:[%s0 + $0xb48] sm:$0xff]
    %v392 = vld [vmem:[%s0 + $0xb50] sm:$0xff]
    %v393 = vld [vmem:[%s0 + $0xb58] sm:$0xff]
    %v394 = vld [vmem:[%s0 + $0xb60] sm:$0xff]
    %v395 = vld [vmem:[%s0 + $0xb68] sm:$0xff]
    %v396 = vld [vmem:[%s0 + $0xb70] sm:$0xff]
    %v397 = vld [vmem:[%s0 + $0xb78] sm:$0xff]
    %v398 = vld [vmem:[%s0 + $0xb80] sm:$0xff]
    %v399 = vld [vmem:[%s0 + $0xb88] sm:$0xff]
    %v400 = vld [vmem:[%s0 + $0xb90] sm:$0xff]
    %v401 = vld [vmem:[%s0 + $0xb98] sm:$0xff]
    %v402 = vld [vmem:[%s0 + $0xba0] sm:$0xff]
    %v403 = vld [vmem:[%s0 + $0xba8] sm:$0xff]
    %v404 = vld [vmem:[%s0 + $0xbb0] sm:$0xff]
    %v405 = vld [vmem:[%s0 + $0xbb8] sm:$0xff]
    %v406 = vld [vmem:[%s0 + $0xbc0] sm:$0xff]
    %v407 = vld [vmem:[%s0 + $0xbc8] sm:$0xff]
    %v408 = vld [vmem:[%s0 + $0xbd0] sm:$0xff]
    %v409 = vld [vmem:[%s0 + $0xbd8] sm:$0xff]
    %v410 = vld [vmem:[%s0 + $0xbe0] sm:$0xff]
    %v411 = vld [vmem:[%s0 + $0xbe8] sm:$0xff]
    %v412 = vld [vmem:[%s0 + $0xbf0] sm:$0xff]
    %v413 = vld [vmem:[%s0 + $0xbf8] sm:$0xff]
    %v414 = vld [vmem:[%s0 + $0xc00] sm:$0xff]
    %v415 = vld [vmem:[%s0 + $0xc08] sm:$0xff]
    %v416 = vld [vmem:[%s0 + $0xc10] sm:$0xff]
    %v417 = vld [vmem:[%s0 + $0xc18] sm:$0xff]
    %v418 = vld [vmem:[%s0 + $0xc20] sm:$0xff]
    %v419 = vld [vmem:[%s0 + $0xc28] sm:$0xff]
    %v420 = vld [vmem:[%s0 + $0xc30] sm:$0xff]
    %v421 = vld [vmem:[%s0 + $0xc38] sm:$0xff]
    %v422 = vld [vmem:[%s0 + $0xc40] sm:$0xff]
    %v423 = vld [vmem:[%s0 + $0xc48] sm:$0xff]
    %v424 = vld [vmem:[%s0 + $0xc50] sm:$0xff]
    %v425 = vld [vmem:[%s0 + $0xc58] sm:$0xff]
    %v426 = vld [vmem:[%s0 + $0xc60] sm:$0xff]
    %v427 = vld [vmem:[%s0 + $0xc68] sm:$0xff]
    %v428 = vld [vmem:[%s0 + $0xc70] sm:$0xff]
    %v429 = vld [vmem:[%s0 + $0xc78] sm:$0xff]
    %v430 = vld [vmem:[%s0 + $0xc80] sm:$0xff]
    %v431 = vld [vmem:[%s0 + $0xc88] sm:$0xff]
    %v432 = vld [vmem:[%s0 + $0xc90] sm:$0xff]
    %v433 = vld [vmem:[%s0 + $0xc98] sm:$0xff]
    %v434 = vld [vmem:[%s0 + $0xca0] sm:$0xff]
    %v435 = vld [vmem:[%s0 + $0xca8] sm:$0xff]
    %v436 = vld [vmem:[%s0 + $0xcb0] sm:$0xff]
    %v437 = vld [vmem:[%s0 + $0xcb8] sm:$0xff]
    %v438 = vld [vmem:[%s0 + $0xcc0] sm:$0xff]
    %v439 = vld [vmem:[%s0 + $0xcc8] sm:$0xff]
    %v440 = vld [vmem:[%s0 + $0xcd0] sm:$0xff]
    %v441 = vld [vmem:[%s0 + $0xcd8] sm:$0xff]
    %v442 = vld [vmem:[%s0 + $0xce0] sm:$0xff]
    %v443 = vld [vmem:[%s0 + $0xce8] sm:$0xff]
    %v444 = vld [vmem:[%s0 + $0xcf0] sm:$0xff]
    %v445 = vld [vmem:[%s0 + $0xcf8] sm:$0xff]
    %v446 = vld [vmem:[%s0 + $0xd00] sm:$0xff]
    %v447 = vld [vmem:[%s0 + $0xd08] sm:$0xff]
    %v448 = vld [vmem:[%s0 + $0xd10] sm:$0xff]
    %v449 = vld [vmem:[%s0 + $0xd18] sm:$0xff]
    %v450 = vld [vmem:[%s0 + $0xd20] sm:$0xff]
    %v451 = vld [vmem:[%s0 + $0xd28] sm:$0xff]
    %v452 = vld [vmem:[%s0 + $0xd30] sm:$0xff]
    %v453 = vld [vmem:[%s0 + $0xd38] sm:$0xff]
    %v454 = vld [vmem:[%s0 + $0xd40] sm:$0xff]
    %v455 = vld [vmem:[%s0 + $0xd48] sm:$0xff]
    %v456 = vld [vmem:[%s0 + $0xd50] sm:$0xff]
    %v457 = vld [vmem:[%s0 + $0xd58] sm:$0xff]
    %v458 = vld [vmem:[%s0 + $0xd60] sm:$0xff]
    %v459 = vld [vmem:[%s0 + $0xd68] sm:$0xff]
    %v460 = vld [vmem:[%s0 + $0xd70] sm:$0xff]
    %v461 = vld [vmem:[%s0 + $0xd78] sm:$0xff]
    %v462 = vld [vmem:[%s0 + $0xd80] sm:$0xff]
    %v463 = vld [vmem:[%s0 + $0xd88] sm:$0xff]
    %v464 = vld [vmem:[%s0 + $0xd90] sm:$0xff]
    %v465 = vld [vmem:[%s0 + $0xd98] sm:$0xff]
    %v466 = vld [vmem:[%s0 + $0xda0] sm:$0xff]
    %v467 = vld [vmem:[%s0 + $0xda8] sm:$0xff]
    %v468 = vld [vmem:[%s0 + $0xdb0] sm:$0xff]
    %v469 = vld [vmem:[%s0 + $0xdb8] sm:$0xff]
    %v470 = vld [vmem:[%s0 + $0xdc0] sm:$0xff]
    %v471 = vld [vmem:[%s0 + $0xdc8] sm:$0xff]
    %v472 = vld [vmem:[%s0 + $0xdd0] sm:$0xff]
    %v473 = vld [vmem:[%s0 + $0xdd8] sm:$0xff]
    %v474 = vld [vmem:[%s0 + $0xde0] sm:$0xff]
    %v475 = vld [vmem:[%s0 + $0xde8] sm:$0xff]
    %v476 = vld [vmem:[%s0 + $0xdf0] sm:$0xff]
    %v477 = vld [vmem:[%s0 + $0xdf8] sm:$0xff]
    %v478 = vld [vmem:[%s0 + $0xe00] sm:$0xff]
    %v479 = vld [vmem:[%s0 + $0xe08] sm:$0xff]
    %v480 = vld [vmem:[%s0 + $0xe10] sm:$0xff]
    %v481 = vld [vmem:[%s0 + $0xe18] sm:$0xff]
    %v482 = vld [vmem:[%s0 + $0xe20] sm:$0xff]
    %v483 = vld [vmem:[%s0 + $0xe28] sm:$0xff]
    %v484 = vld [vmem:[%s0 + $0xe30] sm:$0xff]
    %v485 = vld [vmem:[%s0 + $0xe38] sm:$0xff]
    %v486 = vld [vmem:[%s0 + $0xe40] sm:$0xff]
    %v487 = vld [vmem:[%s0 + $0xe48] sm:$0xff]
    %v488 = vld [vmem:[%s0 + $0xe50] sm:$0xff]
    %v489 = vld [vmem:[%s0 + $0xe58] sm:$0xff]
    %v490 = vld [vmem:[%s0 + $0xe60] sm:$0xff]
    %v491 = vld [vmem:[%s0 + $0xe68] sm:$0xff]
    %v492 = vld [vmem:[%s0 + $0xe70] sm:$0xff]
    %v493 = vld [vmem:[%s0 + $0xe78] sm:$0xff]
    %v494 = vld [vmem:[%s0 + $0xe80] sm:$0xff]
    %v495 = vld [vmem:[%s0 + $0xe88] sm:$0xff]
    %v496 = vld [vmem:[%s0 + $0xe90] sm:$0xff]
    %v497 = vld [vmem:[%s0 + $0xe98] sm:$0xff]
    %v498 = vld [vmem:[%s0 + $0xea0] sm:$0xff]
    %v499 = vld [vmem:[%s0 + $0xea8] sm:$0xff]
    %v500 = vld [vmem:[%s0 + $0xeb0] sm:$0xff]
    %v501 = vld [vmem:[%s0 + $0xeb8] sm:$0xff]
    %v502 = vld [vmem:[%s0 + $0xec0] sm:$0xff]
    %v503 = vld [vmem:[%s0 + $0xec8] sm:$0xff]
    %v504 = vld [vmem:[%s0 + $0xed0] sm:$0xff]
    %v505 = vld [vmem:[%s0 + $0xed8] sm:$0xff]
    %v506 = vld [vmem:[%s0 + $0xee0] sm:$0xff]
    %v507 = vld [vmem:[%s0 + $0xee8] sm:$0xff]
    %v508 = vld [vmem:[%s0 + $0xef0] sm:$0xff]
    %v509 = vld [vmem:[%s0 + $0xef8] sm:$0xff]
    %v510 = vld [vmem:[%s0 + $0xf00] sm:$0xff]
    %v511 = vld [vmem:[%s0 + $0xf08] sm:$0xff]
    %v512 = vld [vmem:[%s0 + $0xf10] sm:$0xff]
    %v513 = vld [vmem:[%s0 + $0xf18] sm:$0xff]
    %v514 = vld [vmem:[%s0 + $0xf20] sm:$0xff]
    %v515 = vld [vmem:[%s0 + $0xf28] sm:$0xff]
    %v516 = vld [vmem:[%s0 + $0xf30] sm:$0xff]
    %v517 = vld [vmem:[%s0 + $0xf38] sm:$0xff]
    %v518 = vld [vmem:[%s0 + $0xf40] sm:$0xff]
    %v519 = vld [vmem:[%s0 + $0xf48] sm:$0xff]
    %v520 = vld [vmem:[%s0 + $0xf50] sm:$0xff]
    %v521 = vld [vmem:[%s0 + $0xf58] sm:$0xff]
    %v522 = vld [vmem:[%s0 + $0xf60] sm:$0xff]
    %v523 = vld [vmem:[%s0 + $0xf68] sm:$0xff]
    %v524 = vld [vmem:[%s0 + $0xf70] sm:$0xff]
    %v525 = vld [vmem:[%s0 + $0xf78] sm:$0xff]
    %v526 = vld [vmem:[%s0 + $0xf80] sm:$0xff]
    %v527 = vld [vmem:[%s0 + $0xf88] sm:$0xff]
    %v528 = vld [vmem:[%s0 + $0xf90] sm:$0xff]
    %v529 = vld [vmem:[%s0 + $0xf98] sm:$0xff]
    %v530 = vld [vmem:[%s0 + $0xfa0] sm:$0xff]
    %v531 = vld [vmem:[%s0 + $0xfa8] sm:$0xff]
    %v532 = vld [vmem:[%s0 + $0xfb0] sm:$0xff]
    %v533 = vld [vmem:[%s0 + $0xfb8] sm:$0xff]
    %v534 = vld [vmem:[%s0 + $0xfc0] sm:$0xff]
    %v535 = vld [vmem:[%s0 + $0xfc8] sm:$0xff]
    %v536 = vld [vmem:[%s0 + $0xfd0] sm:$0xff]
    %v537 = vld [vmem:[%s0 + $0xfd8] sm:$0xff]
    %v538 = vld [vmem:[%s0 + $0xfe0] sm:$0xff]
    %v539 = vld [vmem:[%s0 + $0xfe8] sm:$0xff]
    %v540 = vld [vmem:[%s0 + $0xff0] sm:$0xff]
    %v541 = vld [vmem:[%s0 + $0xff8] sm:$0xff]
    %v542 = vld [vmem:[%s2] sm:$0xff]
    %v543 = vld [vmem:[%s2 + $0x8] sm:$0xff]
    %v544 = vld [vmem:[%s2 + $0x10] sm:$0xff]
    %v545 = vld [vmem:[%s2 + $0x18] sm:$0xff]
    %v546 = vld [vmem:[%s2 + $0x20] sm:$0xf]
    %v547 = vld [vmem:[%s3] sm:$0x1]
    %v549 = vlaneseq
    %v550 = vshrl.u32 %v549, 7
    %v551 = vsub.s32 0, %v550
    %v552 = vrot.slane %v547, %v551
    %vm554 = vcmask 293888
    %v556 = vsel %vm554, %v30, 0
    %v559 = vsel %vm554, %v31, 0
    %v562 = vsel %vm554, %v32, 0
    %v565 = vsel %vm554, %v33, 0
    %v568 = vsel %vm554, %v34, 0
    %v571 = vsel %vm554, %v35, 0
    %v574 = vsel %vm554, %v36, 0
    %v577 = vsel %vm554, %v37, 0
    %v580 = vsel %vm554, %v38, 0
    %v583 = vsel %vm554, %v39, 0
    %v586 = vsel %vm554, %v40, 0
    %v589 = vsel %vm554, %v41, 0
    %v592 = vsel %vm554, %v42, 0
    %v595 = vsel %vm554, %v43, 0
    %v598 = vsel %vm554, %v44, 0
    %v601 = vsel %vm554, %v45, 0
    %v604 = vsel %vm554, %v46, 0
    %v607 = vsel %vm554, %v47, 0
    %v610 = vsel %vm554, %v48, 0
    %v613 = vsel %vm554, %v49, 0
    %v616 = vsel %vm554, %v50, 0
    %v619 = vsel %vm554, %v51, 0
    %v622 = vsel %vm554, %v52, 0
    %v625 = vsel %vm554, %v53, 0
    %v628 = vsel %vm554, %v54, 0
    %v631 = vsel %vm554, %v55, 0
    %v634 = vsel %vm554, %v56, 0
    %v637 = vsel %vm554, %v57, 0
    %v640 = vsel %vm554, %v58, 0
    %v643 = vsel %vm554, %v59, 0
    %v646 = vsel %vm554, %v60, 0
    %v649 = vsel %vm554, %v61, 0
    %v652 = vsel %vm554, %v62, 0
    %v655 = vsel %vm554, %v63, 0
    %v658 = vsel %vm554, %v64, 0
    %v661 = vsel %vm554, %v65, 0
    %v664 = vsel %vm554, %v66, 0
    %v667 = vsel %vm554, %v67, 0
    %v670 = vsel %vm554, %v68, 0
    %v673 = vsel %vm554, %v69, 0
    %v676 = vsel %vm554, %v70, 0
    %v679 = vsel %vm554, %v71, 0
    %v682 = vsel %vm554, %v72, 0
    %v685 = vsel %vm554, %v73, 0
    %v688 = vsel %vm554, %v74, 0
    %v691 = vsel %vm554, %v75, 0
    %v694 = vsel %vm554, %v76, 0
    %v697 = vsel %vm554, %v77, 0
    %v700 = vsel %vm554, %v78, 0
    %v703 = vsel %vm554, %v79, 0
    %v706 = vsel %vm554, %v80, 0
    %v709 = vsel %vm554, %v81, 0
    %v712 = vsel %vm554, %v82, 0
    %v715 = vsel %vm554, %v83, 0
    %v718 = vsel %vm554, %v84, 0
    %v721 = vsel %vm554, %v85, 0
    %v724 = vsel %vm554, %v86, 0
    %v727 = vsel %vm554, %v87, 0
    %v730 = vsel %vm554, %v88, 0
    %v733 = vsel %vm554, %v89, 0
    %v736 = vsel %vm554, %v90, 0
    %v739 = vsel %vm554, %v91, 0
    %v742 = vsel %vm554, %v92, 0
    %v745 = vsel %vm554, %v93, 0
    %v748 = vsel %vm554, %v94, 0
    %v751 = vsel %vm554, %v95, 0
    %v754 = vsel %vm554, %v96, 0
    %v757 = vsel %vm554, %v97, 0
    %v760 = vsel %vm554, %v98, 0
    %v763 = vsel %vm554, %v99, 0
    %v766 = vsel %vm554, %v100, 0
    %v769 = vsel %vm554, %v101, 0
    %v772 = vsel %vm554, %v102, 0
    %v775 = vsel %vm554, %v103, 0
    %v778 = vsel %vm554, %v104, 0
    %v781 = vsel %vm554, %v105, 0
    %v784 = vsel %vm554, %v106, 0
    %v787 = vsel %vm554, %v107, 0
    %v790 = vsel %vm554, %v108, 0
    %v793 = vsel %vm554, %v109, 0
    %v796 = vsel %vm554, %v110, 0
    %v799 = vsel %vm554, %v111, 0
    %v802 = vsel %vm554, %v112, 0
    %v805 = vsel %vm554, %v113, 0
    %v808 = vsel %vm554, %v114, 0
    %v811 = vsel %vm554, %v115, 0
    %v814 = vsel %vm554, %v116, 0
    %v817 = vsel %vm554, %v117, 0
    %v820 = vsel %vm554, %v118, 0
    %v823 = vsel %vm554, %v119, 0
    %v826 = vsel %vm554, %v120, 0
    %v829 = vsel %vm554, %v121, 0
    %v832 = vsel %vm554, %v122, 0
    %v835 = vsel %vm554, %v123, 0
    %v838 = vsel %vm554, %v124, 0
    %v841 = vsel %vm554, %v125, 0
    %v844 = vsel %vm554, %v126, 0
    %v847 = vsel %vm554, %v127, 0
    %v850 = vsel %vm554, %v128, 0
    %v853 = vsel %vm554, %v129, 0
    %v856 = vsel %vm554, %v130, 0
    %v859 = vsel %vm554, %v131, 0
    %v862 = vsel %vm554, %v132, 0
    %v865 = vsel %vm554, %v133, 0
    %v868 = vsel %vm554, %v134, 0
    %v871 = vsel %vm554, %v135, 0
    %v874 = vsel %vm554, %v136, 0
    %v877 = vsel %vm554, %v137, 0
    %v880 = vsel %vm554, %v138, 0
    %v883 = vsel %vm554, %v139, 0
    %v886 = vsel %vm554, %v140, 0
    %v889 = vsel %vm554, %v141, 0
    %v892 = vsel %vm554, %v142, 0
    %v895 = vsel %vm554, %v143, 0
    %v898 = vsel %vm554, %v144, 0
    %v901 = vsel %vm554, %v145, 0
    %v904 = vsel %vm554, %v146, 0
    %v907 = vsel %vm554, %v147, 0
    %v910 = vsel %vm554, %v148, 0
    %v913 = vsel %vm554, %v149, 0
    %v916 = vsel %vm554, %v150, 0
    %v919 = vsel %vm554, %v151, 0
    %v922 = vsel %vm554, %v152, 0
    %v925 = vsel %vm554, %v153, 0
    %v928 = vsel %vm554, %v154, 0
    %v931 = vsel %vm554, %v155, 0
    %v934 = vsel %vm554, %v156, 0
    %v937 = vsel %vm554, %v157, 0
    %v940 = vsel %vm554, %v158, 0
    %v943 = vsel %vm554, %v159, 0
    %v946 = vsel %vm554, %v160, 0
    %v949 = vsel %vm554, %v161, 0
    %v952 = vsel %vm554, %v162, 0
    %v955 = vsel %vm554, %v163, 0
    %v958 = vsel %vm554, %v164, 0
    %v961 = vsel %vm554, %v165, 0
    %v964 = vsel %vm554, %v166, 0
    %v967 = vsel %vm554, %v167, 0
    %v970 = vsel %vm554, %v168, 0
    %v973 = vsel %vm554, %v169, 0
    %v976 = vsel %vm554, %v170, 0
    %v979 = vsel %vm554, %v171, 0
    %v982 = vsel %vm554, %v172, 0
    %v985 = vsel %vm554, %v173, 0
    %v988 = vsel %vm554, %v174, 0
    %v991 = vsel %vm554, %v175, 0
    %v994 = vsel %vm554, %v176, 0
    %v997 = vsel %vm554, %v177, 0
    %v1000 = vsel %vm554, %v178, 0
    %v1003 = vsel %vm554, %v179, 0
    %v1006 = vsel %vm554, %v180, 0
    %v1009 = vsel %vm554, %v181, 0
    %v1012 = vsel %vm554, %v182, 0
    %v1015 = vsel %vm554, %v183, 0
    %v1018 = vsel %vm554, %v184, 0
    %v1021 = vsel %vm554, %v185, 0
    %v1024 = vsel %vm554, %v186, 0
    %v1027 = vsel %vm554, %v187, 0
    %v1030 = vsel %vm554, %v188, 0
    %v1033 = vsel %vm554, %v189, 0
    %v1036 = vsel %vm554, %v190, 0
    %v1039 = vsel %vm554, %v191, 0
    %v1042 = vsel %vm554, %v192, 0
    %v1045 = vsel %vm554, %v193, 0
    %v1048 = vsel %vm554, %v194, 0
    %v1051 = vsel %vm554, %v195, 0
    %v1054 = vsel %vm554, %v196, 0
    %v1057 = vsel %vm554, %v197, 0
    %v1060 = vsel %vm554, %v198, 0
    %v1063 = vsel %vm554, %v199, 0
    %v1066 = vsel %vm554, %v200, 0
    %v1069 = vsel %vm554, %v201, 0
    %v1072 = vsel %vm554, %v202, 0
    %v1075 = vsel %vm554, %v203, 0
    %v1078 = vsel %vm554, %v204, 0
    %v1081 = vsel %vm554, %v205, 0
    %v1084 = vsel %vm554, %v206, 0
    %v1087 = vsel %vm554, %v207, 0
    %v1090 = vsel %vm554, %v208, 0
    %v1093 = vsel %vm554, %v209, 0
    %v1096 = vsel %vm554, %v210, 0
    %v1099 = vsel %vm554, %v211, 0
    %v1102 = vsel %vm554, %v212, 0
    %v1105 = vsel %vm554, %v213, 0
    %v1108 = vsel %vm554, %v214, 0
    %v1111 = vsel %vm554, %v215, 0
    %v1114 = vsel %vm554, %v216, 0
    %v1117 = vsel %vm554, %v217, 0
    %v1120 = vsel %vm554, %v218, 0
    %v1123 = vsel %vm554, %v219, 0
    %v1126 = vsel %vm554, %v220, 0
    %v1129 = vsel %vm554, %v221, 0
    %v1132 = vsel %vm554, %v222, 0
    %v1135 = vsel %vm554, %v223, 0
    %v1138 = vsel %vm554, %v224, 0
    %v1141 = vsel %vm554, %v225, 0
    %v1144 = vsel %vm554, %v226, 0
    %v1147 = vsel %vm554, %v227, 0
    %v1150 = vsel %vm554, %v228, 0
    %v1153 = vsel %vm554, %v229, 0
    %v1156 = vsel %vm554, %v230, 0
    %v1159 = vsel %vm554, %v231, 0
    %v1162 = vsel %vm554, %v232, 0
    %v1165 = vsel %vm554, %v233, 0
    %v1168 = vsel %vm554, %v234, 0
    %v1171 = vsel %vm554, %v235, 0
    %v1174 = vsel %vm554, %v236, 0
    %v1177 = vsel %vm554, %v237, 0
    %v1180 = vsel %vm554, %v238, 0
    %v1183 = vsel %vm554, %v239, 0
    %v1186 = vsel %vm554, %v240, 0
    %v1189 = vsel %vm554, %v241, 0
    %v1192 = vsel %vm554, %v242, 0
    %v1195 = vsel %vm554, %v243, 0
    %v1198 = vsel %vm554, %v244, 0
    %v1201 = vsel %vm554, %v245, 0
    %v1204 = vsel %vm554, %v246, 0
    %v1207 = vsel %vm554, %v247, 0
    %v1210 = vsel %vm554, %v248, 0
    %v1213 = vsel %vm554, %v249, 0
    %v1216 = vsel %vm554, %v250, 0
    %v1219 = vsel %vm554, %v251, 0
    %v1222 = vsel %vm554, %v252, 0
    %v1225 = vsel %vm554, %v253, 0
    %v1228 = vsel %vm554, %v254, 0
    %v1231 = vsel %vm554, %v255, 0
    %v1234 = vsel %vm554, %v256, 0
    %v1237 = vsel %vm554, %v257, 0
    %v1240 = vsel %vm554, %v258, 0
    %v1243 = vsel %vm554, %v259, 0
    %v1246 = vsel %vm554, %v260, 0
    %v1249 = vsel %vm554, %v261, 0
    %v1252 = vsel %vm554, %v262, 0
    %v1255 = vsel %vm554, %v263, 0
    %v1258 = vsel %vm554, %v264, 0
    %v1261 = vsel %vm554, %v265, 0
    %v1264 = vsel %vm554, %v266, 0
    %v1267 = vsel %vm554, %v267, 0
    %v1270 = vsel %vm554, %v268, 0
    %v1273 = vsel %vm554, %v269, 0
    %v1276 = vsel %vm554, %v270, 0
    %v1279 = vsel %vm554, %v271, 0
    %v1282 = vsel %vm554, %v272, 0
    %v1285 = vsel %vm554, %v273, 0
    %v1288 = vsel %vm554, %v274, 0
    %v1291 = vsel %vm554, %v275, 0
    %v1294 = vsel %vm554, %v276, 0
    %v1297 = vsel %vm554, %v277, 0
    %v1300 = vsel %vm554, %v278, 0
    %v1303 = vsel %vm554, %v279, 0
    %v1306 = vsel %vm554, %v280, 0
    %v1309 = vsel %vm554, %v281, 0
    %v1312 = vsel %vm554, %v282, 0
    %v1315 = vsel %vm554, %v283, 0
    %v1318 = vsel %vm554, %v284, 0
    %v1321 = vsel %vm554, %v285, 0
    %v1324 = vsel %vm554, %v286, 0
    %v1327 = vsel %vm554, %v287, 0
    %v1330 = vsel %vm554, %v288, 0
    %v1333 = vsel %vm554, %v289, 0
    %v1336 = vsel %vm554, %v290, 0
    %v1339 = vsel %vm554, %v291, 0
    %v1342 = vsel %vm554, %v292, 0
    %v1345 = vsel %vm554, %v293, 0
    %v1348 = vsel %vm554, %v294, 0
    %v1351 = vsel %vm554, %v295, 0
    %v1354 = vsel %vm554, %v296, 0
    %v1357 = vsel %vm554, %v297, 0
    %v1360 = vsel %vm554, %v298, 0
    %v1363 = vsel %vm554, %v299, 0
    %v1366 = vsel %vm554, %v300, 0
    %v1369 = vsel %vm554, %v301, 0
    %v1372 = vsel %vm554, %v302, 0
    %v1375 = vsel %vm554, %v303, 0
    %v1378 = vsel %vm554, %v304, 0
    %v1381 = vsel %vm554, %v305, 0
    %v1384 = vsel %vm554, %v306, 0
    %v1387 = vsel %vm554, %v307, 0
    %v1390 = vsel %vm554, %v308, 0
    %v1393 = vsel %vm554, %v309, 0
    %v1396 = vsel %vm554, %v310, 0
    %v1399 = vsel %vm554, %v311, 0
    %v1402 = vsel %vm554, %v312, 0
    %v1405 = vsel %vm554, %v313, 0
    %v1408 = vsel %vm554, %v314, 0
    %v1411 = vsel %vm554, %v315, 0
    %v1414 = vsel %vm554, %v316, 0
    %v1417 = vsel %vm554, %v317, 0
    %v1420 = vsel %vm554, %v318, 0
    %v1423 = vsel %vm554, %v319, 0
    %v1426 = vsel %vm554, %v320, 0
    %v1429 = vsel %vm554, %v321, 0
    %v1432 = vsel %vm554, %v322, 0
    %v1435 = vsel %vm554, %v323, 0
    %v1438 = vsel %vm554, %v324, 0
    %v1441 = vsel %vm554, %v325, 0
    %v1444 = vsel %vm554, %v326, 0
    %v1447 = vsel %vm554, %v327, 0
    %v1450 = vsel %vm554, %v328, 0
    %v1453 = vsel %vm554, %v329, 0
    %v1456 = vsel %vm554, %v330, 0
    %v1459 = vsel %vm554, %v331, 0
    %v1462 = vsel %vm554, %v332, 0
    %v1465 = vsel %vm554, %v333, 0
    %v1468 = vsel %vm554, %v334, 0
    %v1471 = vsel %vm554, %v335, 0
    %v1474 = vsel %vm554, %v336, 0
    %v1477 = vsel %vm554, %v337, 0
    %v1480 = vsel %vm554, %v338, 0
    %v1483 = vsel %vm554, %v339, 0
    %v1486 = vsel %vm554, %v340, 0
    %v1489 = vsel %vm554, %v341, 0
    %v1492 = vsel %vm554, %v342, 0
    %v1495 = vsel %vm554, %v343, 0
    %v1498 = vsel %vm554, %v344, 0
    %v1501 = vsel %vm554, %v345, 0
    %v1504 = vsel %vm554, %v346, 0
    %v1507 = vsel %vm554, %v347, 0
    %v1510 = vsel %vm554, %v348, 0
    %v1513 = vsel %vm554, %v349, 0
    %v1516 = vsel %vm554, %v350, 0
    %v1519 = vsel %vm554, %v351, 0
    %v1522 = vsel %vm554, %v352, 0
    %v1525 = vsel %vm554, %v353, 0
    %v1528 = vsel %vm554, %v354, 0
    %v1531 = vsel %vm554, %v355, 0
    %v1534 = vsel %vm554, %v356, 0
    %v1537 = vsel %vm554, %v357, 0
    %v1540 = vsel %vm554, %v358, 0
    %v1543 = vsel %vm554, %v359, 0
    %v1546 = vsel %vm554, %v360, 0
    %v1549 = vsel %vm554, %v361, 0
    %v1552 = vsel %vm554, %v362, 0
    %v1555 = vsel %vm554, %v363, 0
    %v1558 = vsel %vm554, %v364, 0
    %v1561 = vsel %vm554, %v365, 0
    %v1564 = vsel %vm554, %v366, 0
    %v1567 = vsel %vm554, %v367, 0
    %v1570 = vsel %vm554, %v368, 0
    %v1573 = vsel %vm554, %v369, 0
    %v1576 = vsel %vm554, %v370, 0
    %v1579 = vsel %vm554, %v371, 0
    %v1582 = vsel %vm554, %v372, 0
    %v1585 = vsel %vm554, %v373, 0
    %v1588 = vsel %vm554, %v374, 0
    %v1591 = vsel %vm554, %v375, 0
    %v1594 = vsel %vm554, %v376, 0
    %v1597 = vsel %vm554, %v377, 0
    %v1600 = vsel %vm554, %v378, 0
    %v1603 = vsel %vm554, %v379, 0
    %v1606 = vsel %vm554, %v380, 0
    %v1609 = vsel %vm554, %v381, 0
    %v1612 = vsel %vm554, %v382, 0
    %v1615 = vsel %vm554, %v383, 0
    %v1618 = vsel %vm554, %v384, 0
    %v1621 = vsel %vm554, %v385, 0
    %v1624 = vsel %vm554, %v386, 0
    %v1627 = vsel %vm554, %v387, 0
    %v1630 = vsel %vm554, %v388, 0
    %v1633 = vsel %vm554, %v389, 0
    %v1636 = vsel %vm554, %v390, 0
    %v1639 = vsel %vm554, %v391, 0
    %v1642 = vsel %vm554, %v392, 0
    %v1645 = vsel %vm554, %v393, 0
    %v1648 = vsel %vm554, %v394, 0
    %v1651 = vsel %vm554, %v395, 0
    %v1654 = vsel %vm554, %v396, 0
    %v1657 = vsel %vm554, %v397, 0
    %v1660 = vsel %vm554, %v398, 0
    %v1663 = vsel %vm554, %v399, 0
    %v1666 = vsel %vm554, %v400, 0
    %v1669 = vsel %vm554, %v401, 0
    %v1672 = vsel %vm554, %v402, 0
    %v1675 = vsel %vm554, %v403, 0
    %v1678 = vsel %vm554, %v404, 0
    %v1681 = vsel %vm554, %v405, 0
    %v1684 = vsel %vm554, %v406, 0
    %v1687 = vsel %vm554, %v407, 0
    %v1690 = vsel %vm554, %v408, 0
    %v1693 = vsel %vm554, %v409, 0
    %v1696 = vsel %vm554, %v410, 0
    %v1699 = vsel %vm554, %v411, 0
    %v1702 = vsel %vm554, %v412, 0
    %v1705 = vsel %vm554, %v413, 0
    %v1708 = vsel %vm554, %v414, 0
    %v1711 = vsel %vm554, %v415, 0
    %v1714 = vsel %vm554, %v416, 0
    %v1717 = vsel %vm554, %v417, 0
    %v1720 = vsel %vm554, %v418, 0
    %v1723 = vsel %vm554, %v419, 0
    %v1726 = vsel %vm554, %v420, 0
    %v1729 = vsel %vm554, %v421, 0
    %v1732 = vsel %vm554, %v422, 0
    %v1735 = vsel %vm554, %v423, 0
    %v1738 = vsel %vm554, %v424, 0
    %v1741 = vsel %vm554, %v425, 0
    %v1744 = vsel %vm554, %v426, 0
    %v1747 = vsel %vm554, %v427, 0
    %v1750 = vsel %vm554, %v428, 0
    %v1753 = vsel %vm554, %v429, 0
    %v1756 = vsel %vm554, %v430, 0
    %v1759 = vsel %vm554, %v431, 0
    %v1762 = vsel %vm554, %v432, 0
    %v1765 = vsel %vm554, %v433, 0
    %v1768 = vsel %vm554, %v434, 0
    %v1771 = vsel %vm554, %v435, 0
    %v1774 = vsel %vm554, %v436, 0
    %v1777 = vsel %vm554, %v437, 0
    %v1780 = vsel %vm554, %v438, 0
    %v1783 = vsel %vm554, %v439, 0
    %v1786 = vsel %vm554, %v440, 0
    %v1789 = vsel %vm554, %v441, 0
    %v1792 = vsel %vm554, %v442, 0
    %v1795 = vsel %vm554, %v443, 0
    %v1798 = vsel %vm554, %v444, 0
    %v1801 = vsel %vm554, %v445, 0
    %v1804 = vsel %vm554, %v446, 0
    %v1807 = vsel %vm554, %v447, 0
    %v1810 = vsel %vm554, %v448, 0
    %v1813 = vsel %vm554, %v449, 0
    %v1816 = vsel %vm554, %v450, 0
    %v1819 = vsel %vm554, %v451, 0
    %v1822 = vsel %vm554, %v452, 0
    %v1825 = vsel %vm554, %v453, 0
    %v1828 = vsel %vm554, %v454, 0
    %v1831 = vsel %vm554, %v455, 0
    %v1834 = vsel %vm554, %v456, 0
    %v1837 = vsel %vm554, %v457, 0
    %v1840 = vsel %vm554, %v458, 0
    %v1843 = vsel %vm554, %v459, 0
    %v1846 = vsel %vm554, %v460, 0
    %v1849 = vsel %vm554, %v461, 0
    %v1852 = vsel %vm554, %v462, 0
    %v1855 = vsel %vm554, %v463, 0
    %v1858 = vsel %vm554, %v464, 0
    %v1861 = vsel %vm554, %v465, 0
    %v1864 = vsel %vm554, %v466, 0
    %v1867 = vsel %vm554, %v467, 0
    %v1870 = vsel %vm554, %v468, 0
    %v1873 = vsel %vm554, %v469, 0
    %v1876 = vsel %vm554, %v470, 0
    %v1879 = vsel %vm554, %v471, 0
    %v1882 = vsel %vm554, %v472, 0
    %v1885 = vsel %vm554, %v473, 0
    %v1888 = vsel %vm554, %v474, 0
    %v1891 = vsel %vm554, %v475, 0
    %v1894 = vsel %vm554, %v476, 0
    %v1897 = vsel %vm554, %v477, 0
    %v1900 = vsel %vm554, %v478, 0
    %v1903 = vsel %vm554, %v479, 0
    %v1906 = vsel %vm554, %v480, 0
    %v1909 = vsel %vm554, %v481, 0
    %v1912 = vsel %vm554, %v482, 0
    %v1915 = vsel %vm554, %v483, 0
    %v1918 = vsel %vm554, %v484, 0
    %v1921 = vsel %vm554, %v485, 0
    %v1924 = vsel %vm554, %v486, 0
    %v1927 = vsel %vm554, %v487, 0
    %v1930 = vsel %vm554, %v488, 0
    %v1933 = vsel %vm554, %v489, 0
    %v1936 = vsel %vm554, %v490, 0
    %v1939 = vsel %vm554, %v491, 0
    %v1942 = vsel %vm554, %v492, 0
    %v1945 = vsel %vm554, %v493, 0
    %v1948 = vsel %vm554, %v494, 0
    %v1951 = vsel %vm554, %v495, 0
    %v1954 = vsel %vm554, %v496, 0
    %v1957 = vsel %vm554, %v497, 0
    %v1960 = vsel %vm554, %v498, 0
    %v1963 = vsel %vm554, %v499, 0
    %v1966 = vsel %vm554, %v500, 0
    %v1969 = vsel %vm554, %v501, 0
    %v1972 = vsel %vm554, %v502, 0
    %v1975 = vsel %vm554, %v503, 0
    %v1978 = vsel %vm554, %v504, 0
    %v1981 = vsel %vm554, %v505, 0
    %v1984 = vsel %vm554, %v506, 0
    %v1987 = vsel %vm554, %v507, 0
    %v1990 = vsel %vm554, %v508, 0
    %v1993 = vsel %vm554, %v509, 0
    %v1996 = vsel %vm554, %v510, 0
    %v1999 = vsel %vm554, %v511, 0
    %v2002 = vsel %vm554, %v512, 0
    %v2005 = vsel %vm554, %v513, 0
    %v2008 = vsel %vm554, %v514, 0
    %v2011 = vsel %vm554, %v515, 0
    %v2014 = vsel %vm554, %v516, 0
    %v2017 = vsel %vm554, %v517, 0
    %v2020 = vsel %vm554, %v518, 0
    %v2023 = vsel %vm554, %v519, 0
    %v2026 = vsel %vm554, %v520, 0
    %v2029 = vsel %vm554, %v521, 0
    %v2032 = vsel %vm554, %v522, 0
    %v2035 = vsel %vm554, %v523, 0
    %v2038 = vsel %vm554, %v524, 0
    %v2041 = vsel %vm554, %v525, 0
    %v2044 = vsel %vm554, %v526, 0
    %v2047 = vsel %vm554, %v527, 0
    %v2050 = vsel %vm554, %v528, 0
    %v2053 = vsel %vm554, %v529, 0
    %v2056 = vsel %vm554, %v530, 0
    %v2059 = vsel %vm554, %v531, 0
    %v2062 = vsel %vm554, %v532, 0
    %v2065 = vsel %vm554, %v533, 0
    %v2068 = vsel %vm554, %v534, 0
    %v2071 = vsel %vm554, %v535, 0
    %v2074 = vsel %vm554, %v536, 0
    %v2077 = vsel %vm554, %v537, 0
    %v2080 = vsel %vm554, %v538, 0
    %v2083 = vsel %vm554, %v539, 0
    %v2086 = vsel %vm554, %v540, 0
    %v2089 = vsel %vm554, %v541, 0
    %vm2091 = vcmask 1043456
    %v2093 = vsel %vm2091, %v546, 0
    %2095 = vmatprep.subr.mxu0 0.0
    %2096 = vmatpush1.msra.mxu0 0.0
    %2097 = vmatprep.subr.mxu0 0.0
    %2098 = vmatpush1.msra.mxu0 0.0
    %2099 = vmatprep.subr.mxu0 0.0
    %2100 = vmatpush1.msra.mxu0 0.0
    %2101 = vmatprep.subr.mxu0 0.0
    %2102 = vmatpush1.msra.mxu0 0.0
    %2103 = vmatprep.subr.mxu0 0.0
    %2104 = vmatpush1.msra.mxu0 0.0
    %2105 = vmatprep.subr.mxu0 0.0
    %2106 = vmatpush1.msra.mxu0 0.0
    %2107 = vmatprep.subr.mxu0 0.0
    %2108 = vmatpush1.msra.mxu0 0.0
    %2109 = vmatprep.subr.mxu0 0.0
    %2110 = vmatpush1.msra.mxu0 0.0
    %2111 = vmatprep.subr.mxu0 0.0
    %2112 = vmatpush1.msra.mxu0 0.0
    %2113 = vmatprep.subr.mxu0 0.0
    %2114 = vmatpush1.msra.mxu0 0.0
    %2115 = vmatprep.subr.mxu0 0.0
    %2116 = vmatpush1.msra.mxu0 0.0
    %2117 = vmatprep.subr.mxu0 0.0
    %2118 = vmatpush1.msra.mxu0 %v2093
    %2119 = vmatprep.subr.mxu0 0.0
    %2120 = vmatpush1.msra.mxu0 %v545
    %2121 = vmatprep.subr.mxu0 0.0
    %2122 = vmatpush1.msra.mxu0 %v544
    %2123 = vmatprep.subr.mxu0 0.0
    %2124 = vmatpush1.msra.mxu0 %v543
    %2125 = vmatprep.subr.mxu0 0.0
    %2126 = vmatpush1.msra.mxu0 %v542
    %2127 = vmatprep.subr.mxu0 0.0
    %2128 = vmatpush2.msra.mxu0 0.0
    %2129 = vmatprep.subr.mxu0 0.0
    %2130 = vmatpush2.msra.mxu0 0.0
    %2131 = vmatprep.subr.mxu0 0.0
    %2132 = vmatpush2.msra.mxu0 0.0
    %2133 = vmatprep.subr.mxu0 0.0
    %2134 = vmatpush2.msra.mxu0 0.0
    %2135 = vmatprep.subr.mxu0 0.0
    %2136 = vmatpush2.msra.mxu0 0.0
    %2137 = vmatprep.subr.mxu0 0.0
    %2138 = vmatpush2.msra.mxu0 0.0
    %2139 = vmatprep.subr.mxu0 0.0
    %2140 = vmatpush2.msra.mxu0 0.0
    %2141 = vmatprep.subr.mxu0 0.0
    %2142 = vmatpush2.msra.mxu0 0.0
    %2143 = vmatprep.subr.mxu0 0.0
    %2144 = vmatpush2.msra.mxu0 0.0
    %2145 = vmatprep.subr.mxu0 0.0
    %2146 = vmatpush2.msra.mxu0 0.0
    %2147 = vmatprep.subr.mxu0 0.0
    %2148 = vmatpush2.msra.mxu0 0.0
    %2149 = vmatprep.subr.mxu0 0.0
    %2150 = vmatpush2.msra.mxu0 0.0
    %2151 = vmatprep.subr.mxu0 0.0
    %2152 = vmatpush2.msra.mxu0 0.0
    %2153 = vmatprep.subr.mxu0 0.0
    %2154 = vmatpush2.msra.mxu0 0.0
    %2155 = vmatprep.subr.mxu0 0.0
    %2156 = vmatpush2.msra.mxu0 0.0
    %2157 = vmatprep.subr.mxu0 0.0
    %2158 = vmatpush2.msra.mxu0 0.0
    %2159 = vmatprep.mubr.f32.mxu0 0.0
    %2160 = vmatmul.mubr.f32.gmra.mxu0 %v556
    %v2161 = vpop.f32.mrf.mxu0
    %v2162 = vadd.f32 %v552, %v2161
    %v2163 = vpop.f32.mrf.mxu0
    %2164 = vmatprep.mubr.f32.mxu0 0.0
    %2165 = vmatmul.mubr.f32.gmra.mxu0 %v559
    %v2166 = vpop.f32.mrf.mxu0
    %v2167 = vadd.f32 %v552, %v2166
    %v2168 = vpop.f32.mrf.mxu0
    %2169 = vmatprep.mubr.f32.mxu0 0.0
    %2170 = vmatmul.mubr.f32.gmra.mxu0 %v562
    %v2171 = vpop.f32.mrf.mxu0
    %v2172 = vadd.f32 %v552, %v2171
    %v2173 = vpop.f32.mrf.mxu0
    %2174 = vmatprep.mubr.f32.mxu0 0.0
    %2175 = vmatmul.mubr.f32.gmra.mxu0 %v565
    %v2176 = vpop.f32.mrf.mxu0
    %v2177 = vadd.f32 %v552, %v2176
    %v2178 = vpop.f32.mrf.mxu0
    %2179 = vmatprep.mubr.f32.mxu0 0.0
    %2180 = vmatmul.mubr.f32.gmra.mxu0 %v568
    %v2181 = vpop.f32.mrf.mxu0
    %v2182 = vadd.f32 %v552, %v2181
    %v2183 = vpop.f32.mrf.mxu0
    %2184 = vmatprep.mubr.f32.mxu0 0.0
    %2185 = vmatmul.mubr.f32.gmra.mxu0 %v571
    %v2186 = vpop.f32.mrf.mxu0
    %v2187 = vadd.f32 %v552, %v2186
    %v2188 = vpop.f32.mrf.mxu0
    %2189 = vmatprep.mubr.f32.mxu0 0.0
    %2190 = vmatmul.mubr.f32.gmra.mxu0 %v574
    %v2191 = vpop.f32.mrf.mxu0
    %v2192 = vadd.f32 %v552, %v2191
    %v2193 = vpop.f32.mrf.mxu0
    %2194 = vmatprep.mubr.f32.mxu0 0.0
    %2195 = vmatmul.mubr.f32.gmra.mxu0 %v577
    %v2196 = vpop.f32.mrf.mxu0
    %v2197 = vadd.f32 %v552, %v2196
    %v2198 = vpop.f32.mrf.mxu0
    %2199 = vmatprep.mubr.f32.mxu0 0.0
    %2200 = vmatmul.mubr.f32.gmra.mxu0 %v580
    %v2201 = vpop.f32.mrf.mxu0
    %v2202 = vadd.f32 %v552, %v2201
    %v2203 = vpop.f32.mrf.mxu0
    %2204 = vmatprep.mubr.f32.mxu0 0.0
    %2205 = vmatmul.mubr.f32.gmra.mxu0 %v583
    %v2206 = vpop.f32.mrf.mxu0
    %v2207 = vadd.f32 %v552, %v2206
    %v2208 = vpop.f32.mrf.mxu0
    %2209 = vmatprep.mubr.f32.mxu0 0.0
    %2210 = vmatmul.mubr.f32.gmra.mxu0 %v586
    %v2211 = vpop.f32.mrf.mxu0
    %v2212 = vadd.f32 %v552, %v2211
    %v2213 = vpop.f32.mrf.mxu0
    %2214 = vmatprep.mubr.f32.mxu0 0.0
    %2215 = vmatmul.mubr.f32.gmra.mxu0 %v589
    %v2216 = vpop.f32.mrf.mxu0
    %v2217 = vadd.f32 %v552, %v2216
    %v2218 = vpop.f32.mrf.mxu0
    %2219 = vmatprep.mubr.f32.mxu0 0.0
    %2220 = vmatmul.mubr.f32.gmra.mxu0 %v592
    %v2221 = vpop.f32.mrf.mxu0
    %v2222 = vadd.f32 %v552, %v2221
    %v2223 = vpop.f32.mrf.mxu0
    %2224 = vmatprep.mubr.f32.mxu0 0.0
    %2225 = vmatmul.mubr.f32.gmra.mxu0 %v595
    %v2226 = vpop.f32.mrf.mxu0
    %v2227 = vadd.f32 %v552, %v2226
    %v2228 = vpop.f32.mrf.mxu0
    %2229 = vmatprep.mubr.f32.mxu0 0.0
    %2230 = vmatmul.mubr.f32.gmra.mxu0 %v598
    %v2231 = vpop.f32.mrf.mxu0
    %v2232 = vadd.f32 %v552, %v2231
    %v2233 = vpop.f32.mrf.mxu0
    %2234 = vmatprep.mubr.f32.mxu0 0.0
    %2235 = vmatmul.mubr.f32.gmra.mxu0 %v601
    %v2236 = vpop.f32.mrf.mxu0
    %v2237 = vadd.f32 %v552, %v2236
    %v2238 = vpop.f32.mrf.mxu0
    %2239 = vmatprep.mubr.f32.mxu0 0.0
    %2240 = vmatmul.mubr.f32.gmra.mxu0 %v604
    %v2241 = vpop.f32.mrf.mxu0
    %v2242 = vadd.f32 %v552, %v2241
    %v2243 = vpop.f32.mrf.mxu0
    %2244 = vmatprep.mubr.f32.mxu0 0.0
    %2245 = vmatmul.mubr.f32.gmra.mxu0 %v607
    %v2246 = vpop.f32.mrf.mxu0
    %v2247 = vadd.f32 %v552, %v2246
    %v2248 = vpop.f32.mrf.mxu0
    %2249 = vmatprep.mubr.f32.mxu0 0.0
    %2250 = vmatmul.mubr.f32.gmra.mxu0 %v610
    %v2251 = vpop.f32.mrf.mxu0
    %v2252 = vadd.f32 %v552, %v2251
    %v2253 = vpop.f32.mrf.mxu0
    %2254 = vmatprep.mubr.f32.mxu0 0.0
    %2255 = vmatmul.mubr.f32.gmra.mxu0 %v613
    %v2256 = vpop.f32.mrf.mxu0
    %v2257 = vadd.f32 %v552, %v2256
    %v2258 = vpop.f32.mrf.mxu0
    %2259 = vmatprep.mubr.f32.mxu0 0.0
    %2260 = vmatmul.mubr.f32.gmra.mxu0 %v616
    %v2261 = vpop.f32.mrf.mxu0
    %v2262 = vadd.f32 %v552, %v2261
    %v2263 = vpop.f32.mrf.mxu0
    %2264 = vmatprep.mubr.f32.mxu0 0.0
    %2265 = vmatmul.mubr.f32.gmra.mxu0 %v619
    %v2266 = vpop.f32.mrf.mxu0
    %v2267 = vadd.f32 %v552, %v2266
    %v2268 = vpop.f32.mrf.mxu0
    %2269 = vmatprep.mubr.f32.mxu0 0.0
    %2270 = vmatmul.mubr.f32.gmra.mxu0 %v622
    %v2271 = vpop.f32.mrf.mxu0
    %v2272 = vadd.f32 %v552, %v2271
    %v2273 = vpop.f32.mrf.mxu0
    %2274 = vmatprep.mubr.f32.mxu0 0.0
    %2275 = vmatmul.mubr.f32.gmra.mxu0 %v625
    %v2276 = vpop.f32.mrf.mxu0
    %v2277 = vadd.f32 %v552, %v2276
    %v2278 = vpop.f32.mrf.mxu0
    %2279 = vmatprep.mubr.f32.mxu0 0.0
    %2280 = vmatmul.mubr.f32.gmra.mxu0 %v628
    %v2281 = vpop.f32.mrf.mxu0
    %v2282 = vadd.f32 %v552, %v2281
    %v2283 = vpop.f32.mrf.mxu0
    %2284 = vmatprep.mubr.f32.mxu0 0.0
    %2285 = vmatmul.mubr.f32.gmra.mxu0 %v631
    %v2286 = vpop.f32.mrf.mxu0
    %v2287 = vadd.f32 %v552, %v2286
    %v2288 = vpop.f32.mrf.mxu0
    %2289 = vmatprep.mubr.f32.mxu0 0.0
    %2290 = vmatmul.mubr.f32.gmra.mxu0 %v634
    %v2291 = vpop.f32.mrf.mxu0
    %v2292 = vadd.f32 %v552, %v2291
    %v2293 = vpop.f32.mrf.mxu0
    %2294 = vmatprep.mubr.f32.mxu0 0.0
    %2295 = vmatmul.mubr.f32.gmra.mxu0 %v637
    %v2296 = vpop.f32.mrf.mxu0
    %v2297 = vadd.f32 %v552, %v2296
    %v2298 = vpop.f32.mrf.mxu0
    %2299 = vmatprep.mubr.f32.mxu0 0.0
    %2300 = vmatmul.mubr.f32.gmra.mxu0 %v640
    %v2301 = vpop.f32.mrf.mxu0
    %v2302 = vadd.f32 %v552, %v2301
    %v2303 = vpop.f32.mrf.mxu0
    %2304 = vmatprep.mubr.f32.mxu0 0.0
    %2305 = vmatmul.mubr.f32.gmra.mxu0 %v643
    %v2306 = vpop.f32.mrf.mxu0
    %v2307 = vadd.f32 %v552, %v2306
    %v2308 = vpop.f32.mrf.mxu0
    %2309 = vmatprep.mubr.f32.mxu0 0.0
    %2310 = vmatmul.mubr.f32.gmra.mxu0 %v646
    %v2311 = vpop.f32.mrf.mxu0
    %v2312 = vadd.f32 %v552, %v2311
    %v2313 = vpop.f32.mrf.mxu0
    %2314 = vmatprep.mubr.f32.mxu0 0.0
    %2315 = vmatmul.mubr.f32.gmra.mxu0 %v649
    %v2316 = vpop.f32.mrf.mxu0
    %v2317 = vadd.f32 %v552, %v2316
    %v2318 = vpop.f32.mrf.mxu0
    %2319 = vmatprep.mubr.f32.mxu0 0.0
    %2320 = vmatmul.mubr.f32.gmra.mxu0 %v652
    %v2321 = vpop.f32.mrf.mxu0
    %v2322 = vadd.f32 %v552, %v2321
    %v2323 = vpop.f32.mrf.mxu0
    %2324 = vmatprep.mubr.f32.mxu0 0.0
    %2325 = vmatmul.mubr.f32.gmra.mxu0 %v655
    %v2326 = vpop.f32.mrf.mxu0
    %v2327 = vadd.f32 %v552, %v2326
    %v2328 = vpop.f32.mrf.mxu0
    %2329 = vmatprep.mubr.f32.mxu0 0.0
    %2330 = vmatmul.mubr.f32.gmra.mxu0 %v658
    %v2331 = vpop.f32.mrf.mxu0
    %v2332 = vadd.f32 %v552, %v2331
    %v2333 = vpop.f32.mrf.mxu0
    %2334 = vmatprep.mubr.f32.mxu0 0.0
    %2335 = vmatmul.mubr.f32.gmra.mxu0 %v661
    %v2336 = vpop.f32.mrf.mxu0
    %v2337 = vadd.f32 %v552, %v2336
    %v2338 = vpop.f32.mrf.mxu0
    %2339 = vmatprep.mubr.f32.mxu0 0.0
    %2340 = vmatmul.mubr.f32.gmra.mxu0 %v664
    %v2341 = vpop.f32.mrf.mxu0
    %v2342 = vadd.f32 %v552, %v2341
    %v2343 = vpop.f32.mrf.mxu0
    %2344 = vmatprep.mubr.f32.mxu0 0.0
    %2345 = vmatmul.mubr.f32.gmra.mxu0 %v667
    %v2346 = vpop.f32.mrf.mxu0
    %v2347 = vadd.f32 %v552, %v2346
    %v2348 = vpop.f32.mrf.mxu0
    %2349 = vmatprep.mubr.f32.mxu0 0.0
    %2350 = vmatmul.mubr.f32.gmra.mxu0 %v670
    %v2351 = vpop.f32.mrf.mxu0
    %v2352 = vadd.f32 %v552, %v2351
    %v2353 = vpop.f32.mrf.mxu0
    %2354 = vmatprep.mubr.f32.mxu0 0.0
    %2355 = vmatmul.mubr.f32.gmra.mxu0 %v673
    %v2356 = vpop.f32.mrf.mxu0
    %v2357 = vadd.f32 %v552, %v2356
    %v2358 = vpop.f32.mrf.mxu0
    %2359 = vmatprep.mubr.f32.mxu0 0.0
    %2360 = vmatmul.mubr.f32.gmra.mxu0 %v676
    %v2361 = vpop.f32.mrf.mxu0
    %v2362 = vadd.f32 %v552, %v2361
    %v2363 = vpop.f32.mrf.mxu0
    %2364 = vmatprep.mubr.f32.mxu0 0.0
    %2365 = vmatmul.mubr.f32.gmra.mxu0 %v679
    %v2366 = vpop.f32.mrf.mxu0
    %v2367 = vadd.f32 %v552, %v2366
    %v2368 = vpop.f32.mrf.mxu0
    %2369 = vmatprep.mubr.f32.mxu0 0.0
    %2370 = vmatmul.mubr.f32.gmra.mxu0 %v682
    %v2371 = vpop.f32.mrf.mxu0
    %v2372 = vadd.f32 %v552, %v2371
    %v2373 = vpop.f32.mrf.mxu0
    %2374 = vmatprep.mubr.f32.mxu0 0.0
    %2375 = vmatmul.mubr.f32.gmra.mxu0 %v685
    %v2376 = vpop.f32.mrf.mxu0
    %v2377 = vadd.f32 %v552, %v2376
    %v2378 = vpop.f32.mrf.mxu0
    %2379 = vmatprep.mubr.f32.mxu0 0.0
    %2380 = vmatmul.mubr.f32.gmra.mxu0 %v688
    %v2381 = vpop.f32.mrf.mxu0
    %v2382 = vadd.f32 %v552, %v2381
    %v2383 = vpop.f32.mrf.mxu0
    %2384 = vmatprep.mubr.f32.mxu0 0.0
    %2385 = vmatmul.mubr.f32.gmra.mxu0 %v691
    %v2386 = vpop.f32.mrf.mxu0
    %v2387 = vadd.f32 %v552, %v2386
    %v2388 = vpop.f32.mrf.mxu0
    %2389 = vmatprep.mubr.f32.mxu0 0.0
    %2390 = vmatmul.mubr.f32.gmra.mxu0 %v694
    %v2391 = vpop.f32.mrf.mxu0
    %v2392 = vadd.f32 %v552, %v2391
    %v2393 = vpop.f32.mrf.mxu0
    %2394 = vmatprep.mubr.f32.mxu0 0.0
    %2395 = vmatmul.mubr.f32.gmra.mxu0 %v697
    %v2396 = vpop.f32.mrf.mxu0
    %v2397 = vadd.f32 %v552, %v2396
    %v2398 = vpop.f32.mrf.mxu0
    %2399 = vmatprep.mubr.f32.mxu0 0.0
    %2400 = vmatmul.mubr.f32.gmra.mxu0 %v700
    %v2401 = vpop.f32.mrf.mxu0
    %v2402 = vadd.f32 %v552, %v2401
    %v2403 = vpop.f32.mrf.mxu0
    %2404 = vmatprep.mubr.f32.mxu0 0.0
    %2405 = vmatmul.mubr.f32.gmra.mxu0 %v703
    %v2406 = vpop.f32.mrf.mxu0
    %v2407 = vadd.f32 %v552, %v2406
    %v2408 = vpop.f32.mrf.mxu0
    %2409 = vmatprep.mubr.f32.mxu0 0.0
    %2410 = vmatmul.mubr.f32.gmra.mxu0 %v706
    %v2411 = vpop.f32.mrf.mxu0
    %v2412 = vadd.f32 %v552, %v2411
    %v2413 = vpop.f32.mrf.mxu0
    %2414 = vmatprep.mubr.f32.mxu0 0.0
    %2415 = vmatmul.mubr.f32.gmra.mxu0 %v709
    %v2416 = vpop.f32.mrf.mxu0
    %v2417 = vadd.f32 %v552, %v2416
    %v2418 = vpop.f32.mrf.mxu0
    %2419 = vmatprep.mubr.f32.mxu0 0.0
    %2420 = vmatmul.mubr.f32.gmra.mxu0 %v712
    %v2421 = vpop.f32.mrf.mxu0
    %v2422 = vadd.f32 %v552, %v2421
    %v2423 = vpop.f32.mrf.mxu0
    %2424 = vmatprep.mubr.f32.mxu0 0.0
    %2425 = vmatmul.mubr.f32.gmra.mxu0 %v715
    %v2426 = vpop.f32.mrf.mxu0
    %v2427 = vadd.f32 %v552, %v2426
    %v2428 = vpop.f32.mrf.mxu0
    %2429 = vmatprep.mubr.f32.mxu0 0.0
    %2430 = vmatmul.mubr.f32.gmra.mxu0 %v718
    %v2431 = vpop.f32.mrf.mxu0
    %v2432 = vadd.f32 %v552, %v2431
    %v2433 = vpop.f32.mrf.mxu0
    %2434 = vmatprep.mubr.f32.mxu0 0.0
    %2435 = vmatmul.mubr.f32.gmra.mxu0 %v721
    %v2436 = vpop.f32.mrf.mxu0
    %v2437 = vadd.f32 %v552, %v2436
    %v2438 = vpop.f32.mrf.mxu0
    %2439 = vmatprep.mubr.f32.mxu0 0.0
    %2440 = vmatmul.mubr.f32.gmra.mxu0 %v724
    %v2441 = vpop.f32.mrf.mxu0
    %v2442 = vadd.f32 %v552, %v2441
    %v2443 = vpop.f32.mrf.mxu0
    %2444 = vmatprep.mubr.f32.mxu0 0.0
    %2445 = vmatmul.mubr.f32.gmra.mxu0 %v727
    %v2446 = vpop.f32.mrf.mxu0
    %v2447 = vadd.f32 %v552, %v2446
    %v2448 = vpop.f32.mrf.mxu0
    %2449 = vmatprep.mubr.f32.mxu0 0.0
    %2450 = vmatmul.mubr.f32.gmra.mxu0 %v730
    %v2451 = vpop.f32.mrf.mxu0
    %v2452 = vadd.f32 %v552, %v2451
    %v2453 = vpop.f32.mrf.mxu0
    %2454 = vmatprep.mubr.f32.mxu0 0.0
    %2455 = vmatmul.mubr.f32.gmra.mxu0 %v733
    %v2456 = vpop.f32.mrf.mxu0
    %v2457 = vadd.f32 %v552, %v2456
    %v2458 = vpop.f32.mrf.mxu0
    %2459 = vmatprep.mubr.f32.mxu0 0.0
    %2460 = vmatmul.mubr.f32.gmra.mxu0 %v736
    %v2461 = vpop.f32.mrf.mxu0
    %v2462 = vadd.f32 %v552, %v2461
    %v2463 = vpop.f32.mrf.mxu0
    %2464 = vmatprep.mubr.f32.mxu0 0.0
    %2465 = vmatmul.mubr.f32.gmra.mxu0 %v739
    %v2466 = vpop.f32.mrf.mxu0
    %v2467 = vadd.f32 %v552, %v2466
    %v2468 = vpop.f32.mrf.mxu0
    %2469 = vmatprep.mubr.f32.mxu0 0.0
    %2470 = vmatmul.mubr.f32.gmra.mxu0 %v742
    %v2471 = vpop.f32.mrf.mxu0
    %v2472 = vadd.f32 %v552, %v2471
    %v2473 = vpop.f32.mrf.mxu0
    %2474 = vmatprep.mubr.f32.mxu0 0.0
    %2475 = vmatmul.mubr.f32.gmra.mxu0 %v745
    %v2476 = vpop.f32.mrf.mxu0
    %v2477 = vadd.f32 %v552, %v2476
    %v2478 = vpop.f32.mrf.mxu0
    %2479 = vmatprep.mubr.f32.mxu0 0.0
    %2480 = vmatmul.mubr.f32.gmra.mxu0 %v748
    %v2481 = vpop.f32.mrf.mxu0
    %v2482 = vadd.f32 %v552, %v2481
    %v2483 = vpop.f32.mrf.mxu0
    %2484 = vmatprep.mubr.f32.mxu0 0.0
    %2485 = vmatmul.mubr.f32.gmra.mxu0 %v751
    %v2486 = vpop.f32.mrf.mxu0
    %v2487 = vadd.f32 %v552, %v2486
    %v2488 = vpop.f32.mrf.mxu0
    %2489 = vmatprep.mubr.f32.mxu0 0.0
    %2490 = vmatmul.mubr.f32.gmra.mxu0 %v754
    %v2491 = vpop.f32.mrf.mxu0
    %v2492 = vadd.f32 %v552, %v2491
    %v2493 = vpop.f32.mrf.mxu0
    %2494 = vmatprep.mubr.f32.mxu0 0.0
    %2495 = vmatmul.mubr.f32.gmra.mxu0 %v757
    %v2496 = vpop.f32.mrf.mxu0
    %v2497 = vadd.f32 %v552, %v2496
    %v2498 = vpop.f32.mrf.mxu0
    %2499 = vmatprep.mubr.f32.mxu0 0.0
    %2500 = vmatmul.mubr.f32.gmra.mxu0 %v760
    %v2501 = vpop.f32.mrf.mxu0
    %v2502 = vadd.f32 %v552, %v2501
    %v2503 = vpop.f32.mrf.mxu0
    %2504 = vmatprep.mubr.f32.mxu0 0.0
    %2505 = vmatmul.mubr.f32.gmra.mxu0 %v763
    %v2506 = vpop.f32.mrf.mxu0
    %v2507 = vadd.f32 %v552, %v2506
    %v2508 = vpop.f32.mrf.mxu0
    %2509 = vmatprep.mubr.f32.mxu0 0.0
    %2510 = vmatmul.mubr.f32.gmra.mxu0 %v766
    %v2511 = vpop.f32.mrf.mxu0
    %v2512 = vadd.f32 %v552, %v2511
    %v2513 = vpop.f32.mrf.mxu0
    %2514 = vmatprep.mubr.f32.mxu0 0.0
    %2515 = vmatmul.mubr.f32.gmra.mxu0 %v769
    %v2516 = vpop.f32.mrf.mxu0
    %v2517 = vadd.f32 %v552, %v2516
    %v2518 = vpop.f32.mrf.mxu0
    %2519 = vmatprep.mubr.f32.mxu0 0.0
    %2520 = vmatmul.mubr.f32.gmra.mxu0 %v772
    %v2521 = vpop.f32.mrf.mxu0
    %v2522 = vadd.f32 %v552, %v2521
    %v2523 = vpop.f32.mrf.mxu0
    %2524 = vmatprep.mubr.f32.mxu0 0.0
    %2525 = vmatmul.mubr.f32.gmra.mxu0 %v775
    %v2526 = vpop.f32.mrf.mxu0
    %v2527 = vadd.f32 %v552, %v2526
    %v2528 = vpop.f32.mrf.mxu0
    %2529 = vmatprep.mubr.f32.mxu0 0.0
    %2530 = vmatmul.mubr.f32.gmra.mxu0 %v778
    %v2531 = vpop.f32.mrf.mxu0
    %v2532 = vadd.f32 %v552, %v2531
    %v2533 = vpop.f32.mrf.mxu0
    %2534 = vmatprep.mubr.f32.mxu0 0.0
    %2535 = vmatmul.mubr.f32.gmra.mxu0 %v781
    %v2536 = vpop.f32.mrf.mxu0
    %v2537 = vadd.f32 %v552, %v2536
    %v2538 = vpop.f32.mrf.mxu0
    %2539 = vmatprep.mubr.f32.mxu0 0.0
    %2540 = vmatmul.mubr.f32.gmra.mxu0 %v784
    %v2541 = vpop.f32.mrf.mxu0
    %v2542 = vadd.f32 %v552, %v2541
    %v2543 = vpop.f32.mrf.mxu0
    %2544 = vmatprep.mubr.f32.mxu0 0.0
    %2545 = vmatmul.mubr.f32.gmra.mxu0 %v787
    %v2546 = vpop.f32.mrf.mxu0
    %v2547 = vadd.f32 %v552, %v2546
    %v2548 = vpop.f32.mrf.mxu0
    %2549 = vmatprep.mubr.f32.mxu0 0.0
    %2550 = vmatmul.mubr.f32.gmra.mxu0 %v790
    %v2551 = vpop.f32.mrf.mxu0
    %v2552 = vadd.f32 %v552, %v2551
    %v2553 = vpop.f32.mrf.mxu0
    %2554 = vmatprep.mubr.f32.mxu0 0.0
    %2555 = vmatmul.mubr.f32.gmra.mxu0 %v793
    %v2556 = vpop.f32.mrf.mxu0
    %v2557 = vadd.f32 %v552, %v2556
    %v2558 = vpop.f32.mrf.mxu0
    %2559 = vmatprep.mubr.f32.mxu0 0.0
    %2560 = vmatmul.mubr.f32.gmra.mxu0 %v796
    %v2561 = vpop.f32.mrf.mxu0
    %v2562 = vadd.f32 %v552, %v2561
    %v2563 = vpop.f32.mrf.mxu0
    %2564 = vmatprep.mubr.f32.mxu0 0.0
    %2565 = vmatmul.mubr.f32.gmra.mxu0 %v799
    %v2566 = vpop.f32.mrf.mxu0
    %v2567 = vadd.f32 %v552, %v2566
    %v2568 = vpop.f32.mrf.mxu0
    %2569 = vmatprep.mubr.f32.mxu0 0.0
    %2570 = vmatmul.mubr.f32.gmra.mxu0 %v802
    %v2571 = vpop.f32.mrf.mxu0
    %v2572 = vadd.f32 %v552, %v2571
    %v2573 = vpop.f32.mrf.mxu0
    %2574 = vmatprep.mubr.f32.mxu0 0.0
    %2575 = vmatmul.mubr.f32.gmra.mxu0 %v805
    %v2576 = vpop.f32.mrf.mxu0
    %v2577 = vadd.f32 %v552, %v2576
    %v2578 = vpop.f32.mrf.mxu0
    %2579 = vmatprep.mubr.f32.mxu0 0.0
    %2580 = vmatmul.mubr.f32.gmra.mxu0 %v808
    %v2581 = vpop.f32.mrf.mxu0
    %v2582 = vadd.f32 %v552, %v2581
    %v2583 = vpop.f32.mrf.mxu0
    %2584 = vmatprep.mubr.f32.mxu0 0.0
    %2585 = vmatmul.mubr.f32.gmra.mxu0 %v811
    %v2586 = vpop.f32.mrf.mxu0
    %v2587 = vadd.f32 %v552, %v2586
    %v2588 = vpop.f32.mrf.mxu0
    %2589 = vmatprep.mubr.f32.mxu0 0.0
    %2590 = vmatmul.mubr.f32.gmra.mxu0 %v814
    %v2591 = vpop.f32.mrf.mxu0
    %v2592 = vadd.f32 %v552, %v2591
    %v2593 = vpop.f32.mrf.mxu0
    %2594 = vmatprep.mubr.f32.mxu0 0.0
    %2595 = vmatmul.mubr.f32.gmra.mxu0 %v817
    %v2596 = vpop.f32.mrf.mxu0
    %v2597 = vadd.f32 %v552, %v2596
    %v2598 = vpop.f32.mrf.mxu0
    %2599 = vmatprep.mubr.f32.mxu0 0.0
    %2600 = vmatmul.mubr.f32.gmra.mxu0 %v820
    %v2601 = vpop.f32.mrf.mxu0
    %v2602 = vadd.f32 %v552, %v2601
    %v2603 = vpop.f32.mrf.mxu0
    %2604 = vmatprep.mubr.f32.mxu0 0.0
    %2605 = vmatmul.mubr.f32.gmra.mxu0 %v823
    %v2606 = vpop.f32.mrf.mxu0
    %v2607 = vadd.f32 %v552, %v2606
    %v2608 = vpop.f32.mrf.mxu0
    %2609 = vmatprep.mubr.f32.mxu0 0.0
    %2610 = vmatmul.mubr.f32.gmra.mxu0 %v826
    %v2611 = vpop.f32.mrf.mxu0
    %v2612 = vadd.f32 %v552, %v2611
    %v2613 = vpop.f32.mrf.mxu0
    %2614 = vmatprep.mubr.f32.mxu0 0.0
    %2615 = vmatmul.mubr.f32.gmra.mxu0 %v829
    %v2616 = vpop.f32.mrf.mxu0
    %v2617 = vadd.f32 %v552, %v2616
    %v2618 = vpop.f32.mrf.mxu0
    %2619 = vmatprep.mubr.f32.mxu0 0.0
    %2620 = vmatmul.mubr.f32.gmra.mxu0 %v832
    %v2621 = vpop.f32.mrf.mxu0
    %v2622 = vadd.f32 %v552, %v2621
    %v2623 = vpop.f32.mrf.mxu0
    %2624 = vmatprep.mubr.f32.mxu0 0.0
    %2625 = vmatmul.mubr.f32.gmra.mxu0 %v835
    %v2626 = vpop.f32.mrf.mxu0
    %v2627 = vadd.f32 %v552, %v2626
    %v2628 = vpop.f32.mrf.mxu0
    %2629 = vmatprep.mubr.f32.mxu0 0.0
    %2630 = vmatmul.mubr.f32.gmra.mxu0 %v838
    %v2631 = vpop.f32.mrf.mxu0
    %v2632 = vadd.f32 %v552, %v2631
    %v2633 = vpop.f32.mrf.mxu0
    %2634 = vmatprep.mubr.f32.mxu0 0.0
    %2635 = vmatmul.mubr.f32.gmra.mxu0 %v841
    %v2636 = vpop.f32.mrf.mxu0
    %v2637 = vadd.f32 %v552, %v2636
    %v2638 = vpop.f32.mrf.mxu0
    %2639 = vmatprep.mubr.f32.mxu0 0.0
    %2640 = vmatmul.mubr.f32.gmra.mxu0 %v844
    %v2641 = vpop.f32.mrf.mxu0
    %v2642 = vadd.f32 %v552, %v2641
    %v2643 = vpop.f32.mrf.mxu0
    %2644 = vmatprep.mubr.f32.mxu0 0.0
    %2645 = vmatmul.mubr.f32.gmra.mxu0 %v847
    %v2646 = vpop.f32.mrf.mxu0
    %v2647 = vadd.f32 %v552, %v2646
    %v2648 = vpop.f32.mrf.mxu0
    %2649 = vmatprep.mubr.f32.mxu0 0.0
    %2650 = vmatmul.mubr.f32.gmra.mxu0 %v850
    %v2651 = vpop.f32.mrf.mxu0
    %v2652 = vadd.f32 %v552, %v2651
    %v2653 = vpop.f32.mrf.mxu0
    %2654 = vmatprep.mubr.f32.mxu0 0.0
    %2655 = vmatmul.mubr.f32.gmra.mxu0 %v853
    %v2656 = vpop.f32.mrf.mxu0
    %v2657 = vadd.f32 %v552, %v2656
    %v2658 = vpop.f32.mrf.mxu0
    %2659 = vmatprep.mubr.f32.mxu0 0.0
    %2660 = vmatmul.mubr.f32.gmra.mxu0 %v856
    %v2661 = vpop.f32.mrf.mxu0
    %v2662 = vadd.f32 %v552, %v2661
    %v2663 = vpop.f32.mrf.mxu0
    %2664 = vmatprep.mubr.f32.mxu0 0.0
    %2665 = vmatmul.mubr.f32.gmra.mxu0 %v859
    %v2666 = vpop.f32.mrf.mxu0
    %v2667 = vadd.f32 %v552, %v2666
    %v2668 = vpop.f32.mrf.mxu0
    %2669 = vmatprep.mubr.f32.mxu0 0.0
    %2670 = vmatmul.mubr.f32.gmra.mxu0 %v862
    %v2671 = vpop.f32.mrf.mxu0
    %v2672 = vadd.f32 %v552, %v2671
    %v2673 = vpop.f32.mrf.mxu0
    %2674 = vmatprep.mubr.f32.mxu0 0.0
    %2675 = vmatmul.mubr.f32.gmra.mxu0 %v865
    %v2676 = vpop.f32.mrf.mxu0
    %v2677 = vadd.f32 %v552, %v2676
    %v2678 = vpop.f32.mrf.mxu0
    %2679 = vmatprep.mubr.f32.mxu0 0.0
    %2680 = vmatmul.mubr.f32.gmra.mxu0 %v868
    %v2681 = vpop.f32.mrf.mxu0
    %v2682 = vadd.f32 %v552, %v2681
    %v2683 = vpop.f32.mrf.mxu0
    %2684 = vmatprep.mubr.f32.mxu0 0.0
    %2685 = vmatmul.mubr.f32.gmra.mxu0 %v871
    %v2686 = vpop.f32.mrf.mxu0
    %v2687 = vadd.f32 %v552, %v2686
    %v2688 = vpop.f32.mrf.mxu0
    %2689 = vmatprep.mubr.f32.mxu0 0.0
    %2690 = vmatmul.mubr.f32.gmra.mxu0 %v874
    %v2691 = vpop.f32.mrf.mxu0
    %v2692 = vadd.f32 %v552, %v2691
    %v2693 = vpop.f32.mrf.mxu0
    %2694 = vmatprep.mubr.f32.mxu0 0.0
    %2695 = vmatmul.mubr.f32.gmra.mxu0 %v877
    %v2696 = vpop.f32.mrf.mxu0
    %v2697 = vadd.f32 %v552, %v2696
    %v2698 = vpop.f32.mrf.mxu0
    %2699 = vmatprep.mubr.f32.mxu0 0.0
    %2700 = vmatmul.mubr.f32.gmra.mxu0 %v880
    %v2701 = vpop.f32.mrf.mxu0
    %v2702 = vadd.f32 %v552, %v2701
    %v2703 = vpop.f32.mrf.mxu0
    %2704 = vmatprep.mubr.f32.mxu0 0.0
    %2705 = vmatmul.mubr.f32.gmra.mxu0 %v883
    %v2706 = vpop.f32.mrf.mxu0
    %v2707 = vadd.f32 %v552, %v2706
    %v2708 = vpop.f32.mrf.mxu0
    %2709 = vmatprep.mubr.f32.mxu0 0.0
    %2710 = vmatmul.mubr.f32.gmra.mxu0 %v886
    %v2711 = vpop.f32.mrf.mxu0
    %v2712 = vadd.f32 %v552, %v2711
    %v2713 = vpop.f32.mrf.mxu0
    %2714 = vmatprep.mubr.f32.mxu0 0.0
    %2715 = vmatmul.mubr.f32.gmra.mxu0 %v889
    %v2716 = vpop.f32.mrf.mxu0
    %v2717 = vadd.f32 %v552, %v2716
    %v2718 = vpop.f32.mrf.mxu0
    %2719 = vmatprep.mubr.f32.mxu0 0.0
    %2720 = vmatmul.mubr.f32.gmra.mxu0 %v892
    %v2721 = vpop.f32.mrf.mxu0
    %v2722 = vadd.f32 %v552, %v2721
    %v2723 = vpop.f32.mrf.mxu0
    %2724 = vmatprep.mubr.f32.mxu0 0.0
    %2725 = vmatmul.mubr.f32.gmra.mxu0 %v895
    %v2726 = vpop.f32.mrf.mxu0
    %v2727 = vadd.f32 %v552, %v2726
    %v2728 = vpop.f32.mrf.mxu0
    %2729 = vmatprep.mubr.f32.mxu0 0.0
    %2730 = vmatmul.mubr.f32.gmra.mxu0 %v898
    %v2731 = vpop.f32.mrf.mxu0
    %v2732 = vadd.f32 %v552, %v2731
    %v2733 = vpop.f32.mrf.mxu0
    %2734 = vmatprep.mubr.f32.mxu0 0.0
    %2735 = vmatmul.mubr.f32.gmra.mxu0 %v901
    %v2736 = vpop.f32.mrf.mxu0
    %v2737 = vadd.f32 %v552, %v2736
    %v2738 = vpop.f32.mrf.mxu0
    %2739 = vmatprep.mubr.f32.mxu0 0.0
    %2740 = vmatmul.mubr.f32.gmra.mxu0 %v904
    %v2741 = vpop.f32.mrf.mxu0
    %v2742 = vadd.f32 %v552, %v2741
    %v2743 = vpop.f32.mrf.mxu0
    %2744 = vmatprep.mubr.f32.mxu0 0.0
    %2745 = vmatmul.mubr.f32.gmra.mxu0 %v907
    %v2746 = vpop.f32.mrf.mxu0
    %v2747 = vadd.f32 %v552, %v2746
    %v2748 = vpop.f32.mrf.mxu0
    %2749 = vmatprep.mubr.f32.mxu0 0.0
    %2750 = vmatmul.mubr.f32.gmra.mxu0 %v910
    %v2751 = vpop.f32.mrf.mxu0
    %v2752 = vadd.f32 %v552, %v2751
    %v2753 = vpop.f32.mrf.mxu0
    %2754 = vmatprep.mubr.f32.mxu0 0.0
    %2755 = vmatmul.mubr.f32.gmra.mxu0 %v913
    %v2756 = vpop.f32.mrf.mxu0
    %v2757 = vadd.f32 %v552, %v2756
    %v2758 = vpop.f32.mrf.mxu0
    %2759 = vmatprep.mubr.f32.mxu0 0.0
    %2760 = vmatmul.mubr.f32.gmra.mxu0 %v916
    %v2761 = vpop.f32.mrf.mxu0
    %v2762 = vadd.f32 %v552, %v2761
    %v2763 = vpop.f32.mrf.mxu0
    %2764 = vmatprep.mubr.f32.mxu0 0.0
    %2765 = vmatmul.mubr.f32.gmra.mxu0 %v919
    %v2766 = vpop.f32.mrf.mxu0
    %v2767 = vadd.f32 %v552, %v2766
    %v2768 = vpop.f32.mrf.mxu0
    %2769 = vmatprep.mubr.f32.mxu0 0.0
    %2770 = vmatmul.mubr.f32.gmra.mxu0 %v922
    %v2771 = vpop.f32.mrf.mxu0
    %v2772 = vadd.f32 %v552, %v2771
    %v2773 = vpop.f32.mrf.mxu0
    %2774 = vmatprep.mubr.f32.mxu0 0.0
    %2775 = vmatmul.mubr.f32.gmra.mxu0 %v925
    %v2776 = vpop.f32.mrf.mxu0
    %v2777 = vadd.f32 %v552, %v2776
    %v2778 = vpop.f32.mrf.mxu0
    %2779 = vmatprep.mubr.f32.mxu0 0.0
    %2780 = vmatmul.mubr.f32.gmra.mxu0 %v928
    %v2781 = vpop.f32.mrf.mxu0
    %v2782 = vadd.f32 %v552, %v2781
    %v2783 = vpop.f32.mrf.mxu0
    %2784 = vmatprep.mubr.f32.mxu0 0.0
    %2785 = vmatmul.mubr.f32.gmra.mxu0 %v931
    %v2786 = vpop.f32.mrf.mxu0
    %v2787 = vadd.f32 %v552, %v2786
    %v2788 = vpop.f32.mrf.mxu0
    %2789 = vmatprep.mubr.f32.mxu0 0.0
    %2790 = vmatmul.mubr.f32.gmra.mxu0 %v934
    %v2791 = vpop.f32.mrf.mxu0
    %v2792 = vadd.f32 %v552, %v2791
    %v2793 = vpop.f32.mrf.mxu0
    %2794 = vmatprep.mubr.f32.mxu0 0.0
    %2795 = vmatmul.mubr.f32.gmra.mxu0 %v937
    %v2796 = vpop.f32.mrf.mxu0
    %v2797 = vadd.f32 %v552, %v2796
    %v2798 = vpop.f32.mrf.mxu0
    %2799 = vmatprep.mubr.f32.mxu0 0.0
    %2800 = vmatmul.mubr.f32.gmra.mxu0 %v940
    %v2801 = vpop.f32.mrf.mxu0
    %v2802 = vadd.f32 %v552, %v2801
    %v2803 = vpop.f32.mrf.mxu0
    %2804 = vmatprep.mubr.f32.mxu0 0.0
    %2805 = vmatmul.mubr.f32.gmra.mxu0 %v943
    %v2806 = vpop.f32.mrf.mxu0
    %v2807 = vadd.f32 %v552, %v2806
    %v2808 = vpop.f32.mrf.mxu0
    %2809 = vmatprep.mubr.f32.mxu0 0.0
    %2810 = vmatmul.mubr.f32.gmra.mxu0 %v946
    %v2811 = vpop.f32.mrf.mxu0
    %v2812 = vadd.f32 %v552, %v2811
    %v2813 = vpop.f32.mrf.mxu0
    %2814 = vmatprep.mubr.f32.mxu0 0.0
    %2815 = vmatmul.mubr.f32.gmra.mxu0 %v949
    %v2816 = vpop.f32.mrf.mxu0
    %v2817 = vadd.f32 %v552, %v2816
    %v2818 = vpop.f32.mrf.mxu0
    %2819 = vmatprep.mubr.f32.mxu0 0.0
    %2820 = vmatmul.mubr.f32.gmra.mxu0 %v952
    %v2821 = vpop.f32.mrf.mxu0
    %v2822 = vadd.f32 %v552, %v2821
    %v2823 = vpop.f32.mrf.mxu0
    %2824 = vmatprep.mubr.f32.mxu0 0.0
    %2825 = vmatmul.mubr.f32.gmra.mxu0 %v955
    %v2826 = vpop.f32.mrf.mxu0
    %v2827 = vadd.f32 %v552, %v2826
    %v2828 = vpop.f32.mrf.mxu0
    %2829 = vmatprep.mubr.f32.mxu0 0.0
    %2830 = vmatmul.mubr.f32.gmra.mxu0 %v958
    %v2831 = vpop.f32.mrf.mxu0
    %v2832 = vadd.f32 %v552, %v2831
    %v2833 = vpop.f32.mrf.mxu0
    %2834 = vmatprep.mubr.f32.mxu0 0.0
    %2835 = vmatmul.mubr.f32.gmra.mxu0 %v961
    %v2836 = vpop.f32.mrf.mxu0
    %v2837 = vadd.f32 %v552, %v2836
    %v2838 = vpop.f32.mrf.mxu0
    %2839 = vmatprep.mubr.f32.mxu0 0.0
    %2840 = vmatmul.mubr.f32.gmra.mxu0 %v964
    %v2841 = vpop.f32.mrf.mxu0
    %v2842 = vadd.f32 %v552, %v2841
    %v2843 = vpop.f32.mrf.mxu0
    %2844 = vmatprep.mubr.f32.mxu0 0.0
    %2845 = vmatmul.mubr.f32.gmra.mxu0 %v967
    %v2846 = vpop.f32.mrf.mxu0
    %v2847 = vadd.f32 %v552, %v2846
    %v2848 = vpop.f32.mrf.mxu0
    %2849 = vmatprep.mubr.f32.mxu0 0.0
    %2850 = vmatmul.mubr.f32.gmra.mxu0 %v970
    %v2851 = vpop.f32.mrf.mxu0
    %v2852 = vadd.f32 %v552, %v2851
    %v2853 = vpop.f32.mrf.mxu0
    %2854 = vmatprep.mubr.f32.mxu0 0.0
    %2855 = vmatmul.mubr.f32.gmra.mxu0 %v973
    %v2856 = vpop.f32.mrf.mxu0
    %v2857 = vadd.f32 %v552, %v2856
    %v2858 = vpop.f32.mrf.mxu0
    %2859 = vmatprep.mubr.f32.mxu0 0.0
    %2860 = vmatmul.mubr.f32.gmra.mxu0 %v976
    %v2861 = vpop.f32.mrf.mxu0
    %v2862 = vadd.f32 %v552, %v2861
    %v2863 = vpop.f32.mrf.mxu0
    %2864 = vmatprep.mubr.f32.mxu0 0.0
    %2865 = vmatmul.mubr.f32.gmra.mxu0 %v979
    %v2866 = vpop.f32.mrf.mxu0
    %v2867 = vadd.f32 %v552, %v2866
    %v2868 = vpop.f32.mrf.mxu0
    %2869 = vmatprep.mubr.f32.mxu0 0.0
    %2870 = vmatmul.mubr.f32.gmra.mxu0 %v982
    %v2871 = vpop.f32.mrf.mxu0
    %v2872 = vadd.f32 %v552, %v2871
    %v2873 = vpop.f32.mrf.mxu0
    %2874 = vmatprep.mubr.f32.mxu0 0.0
    %2875 = vmatmul.mubr.f32.gmra.mxu0 %v985
    %v2876 = vpop.f32.mrf.mxu0
    %v2877 = vadd.f32 %v552, %v2876
    %v2878 = vpop.f32.mrf.mxu0
    %2879 = vmatprep.mubr.f32.mxu0 0.0
    %2880 = vmatmul.mubr.f32.gmra.mxu0 %v988
    %v2881 = vpop.f32.mrf.mxu0
    %v2882 = vadd.f32 %v552, %v2881
    %v2883 = vpop.f32.mrf.mxu0
    %2884 = vmatprep.mubr.f32.mxu0 0.0
    %2885 = vmatmul.mubr.f32.gmra.mxu0 %v991
    %v2886 = vpop.f32.mrf.mxu0
    %v2887 = vadd.f32 %v552, %v2886
    %v2888 = vpop.f32.mrf.mxu0
    %2889 = vmatprep.mubr.f32.mxu0 0.0
    %2890 = vmatmul.mubr.f32.gmra.mxu0 %v994
    %v2891 = vpop.f32.mrf.mxu0
    %v2892 = vadd.f32 %v552, %v2891
    %v2893 = vpop.f32.mrf.mxu0
    %2894 = vmatprep.mubr.f32.mxu0 0.0
    %2895 = vmatmul.mubr.f32.gmra.mxu0 %v997
    %v2896 = vpop.f32.mrf.mxu0
    %v2897 = vadd.f32 %v552, %v2896
    %v2898 = vpop.f32.mrf.mxu0
    %2899 = vmatprep.mubr.f32.mxu0 0.0
    %2900 = vmatmul.mubr.f32.gmra.mxu0 %v1000
    %v2901 = vpop.f32.mrf.mxu0
    %v2902 = vadd.f32 %v552, %v2901
    %v2903 = vpop.f32.mrf.mxu0
    %2904 = vmatprep.mubr.f32.mxu0 0.0
    %2905 = vmatmul.mubr.f32.gmra.mxu0 %v1003
    %v2906 = vpop.f32.mrf.mxu0
    %v2907 = vadd.f32 %v552, %v2906
    %v2908 = vpop.f32.mrf.mxu0
    %2909 = vmatprep.mubr.f32.mxu0 0.0
    %2910 = vmatmul.mubr.f32.gmra.mxu0 %v1006
    %v2911 = vpop.f32.mrf.mxu0
    %v2912 = vadd.f32 %v552, %v2911
    %v2913 = vpop.f32.mrf.mxu0
    %2914 = vmatprep.mubr.f32.mxu0 0.0
    %2915 = vmatmul.mubr.f32.gmra.mxu0 %v1009
    %v2916 = vpop.f32.mrf.mxu0
    %v2917 = vadd.f32 %v552, %v2916
    %v2918 = vpop.f32.mrf.mxu0
    %2919 = vmatprep.mubr.f32.mxu0 0.0
    %2920 = vmatmul.mubr.f32.gmra.mxu0 %v1012
    %v2921 = vpop.f32.mrf.mxu0
    %v2922 = vadd.f32 %v552, %v2921
    %v2923 = vpop.f32.mrf.mxu0
    %2924 = vmatprep.mubr.f32.mxu0 0.0
    %2925 = vmatmul.mubr.f32.gmra.mxu0 %v1015
    %v2926 = vpop.f32.mrf.mxu0
    %v2927 = vadd.f32 %v552, %v2926
    %v2928 = vpop.f32.mrf.mxu0
    %2929 = vmatprep.mubr.f32.mxu0 0.0
    %2930 = vmatmul.mubr.f32.gmra.mxu0 %v1018
    %v2931 = vpop.f32.mrf.mxu0
    %v2932 = vadd.f32 %v552, %v2931
    %v2933 = vpop.f32.mrf.mxu0
    %2934 = vmatprep.mubr.f32.mxu0 0.0
    %2935 = vmatmul.mubr.f32.gmra.mxu0 %v1021
    %v2936 = vpop.f32.mrf.mxu0
    %v2937 = vadd.f32 %v552, %v2936
    %v2938 = vpop.f32.mrf.mxu0
    %2939 = vmatprep.mubr.f32.mxu0 0.0
    %2940 = vmatmul.mubr.f32.gmra.mxu0 %v1024
    %v2941 = vpop.f32.mrf.mxu0
    %v2942 = vadd.f32 %v552, %v2941
    %v2943 = vpop.f32.mrf.mxu0
    %2944 = vmatprep.mubr.f32.mxu0 0.0
    %2945 = vmatmul.mubr.f32.gmra.mxu0 %v1027
    %v2946 = vpop.f32.mrf.mxu0
    %v2947 = vadd.f32 %v552, %v2946
    %v2948 = vpop.f32.mrf.mxu0
    %2949 = vmatprep.mubr.f32.mxu0 0.0
    %2950 = vmatmul.mubr.f32.gmra.mxu0 %v1030
    %v2951 = vpop.f32.mrf.mxu0
    %v2952 = vadd.f32 %v552, %v2951
    %v2953 = vpop.f32.mrf.mxu0
    %2954 = vmatprep.mubr.f32.mxu0 0.0
    %2955 = vmatmul.mubr.f32.gmra.mxu0 %v1033
    %v2956 = vpop.f32.mrf.mxu0
    %v2957 = vadd.f32 %v552, %v2956
    %v2958 = vpop.f32.mrf.mxu0
    %2959 = vmatprep.mubr.f32.mxu0 0.0
    %2960 = vmatmul.mubr.f32.gmra.mxu0 %v1036
    %v2961 = vpop.f32.mrf.mxu0
    %v2962 = vadd.f32 %v552, %v2961
    %v2963 = vpop.f32.mrf.mxu0
    %2964 = vmatprep.mubr.f32.mxu0 0.0
    %2965 = vmatmul.mubr.f32.gmra.mxu0 %v1039
    %v2966 = vpop.f32.mrf.mxu0
    %v2967 = vadd.f32 %v552, %v2966
    %v2968 = vpop.f32.mrf.mxu0
    %2969 = vmatprep.mubr.f32.mxu0 0.0
    %2970 = vmatmul.mubr.f32.gmra.mxu0 %v1042
    %v2971 = vpop.f32.mrf.mxu0
    %v2972 = vadd.f32 %v552, %v2971
    %v2973 = vpop.f32.mrf.mxu0
    %2974 = vmatprep.mubr.f32.mxu0 0.0
    %2975 = vmatmul.mubr.f32.gmra.mxu0 %v1045
    %v2976 = vpop.f32.mrf.mxu0
    %v2977 = vadd.f32 %v552, %v2976
    %v2978 = vpop.f32.mrf.mxu0
    %2979 = vmatprep.mubr.f32.mxu0 0.0
    %2980 = vmatmul.mubr.f32.gmra.mxu0 %v1048
    %v2981 = vpop.f32.mrf.mxu0
    %v2982 = vadd.f32 %v552, %v2981
    %v2983 = vpop.f32.mrf.mxu0
    %2984 = vmatprep.mubr.f32.mxu0 0.0
    %2985 = vmatmul.mubr.f32.gmra.mxu0 %v1051
    %v2986 = vpop.f32.mrf.mxu0
    %v2987 = vadd.f32 %v552, %v2986
    %v2988 = vpop.f32.mrf.mxu0
    %2989 = vmatprep.mubr.f32.mxu0 0.0
    %2990 = vmatmul.mubr.f32.gmra.mxu0 %v1054
    %v2991 = vpop.f32.mrf.mxu0
    %v2992 = vadd.f32 %v552, %v2991
    %v2993 = vpop.f32.mrf.mxu0
    %2994 = vmatprep.mubr.f32.mxu0 0.0
    %2995 = vmatmul.mubr.f32.gmra.mxu0 %v1057
    %v2996 = vpop.f32.mrf.mxu0
    %v2997 = vadd.f32 %v552, %v2996
    %v2998 = vpop.f32.mrf.mxu0
    %2999 = vmatprep.mubr.f32.mxu0 0.0
    %3000 = vmatmul.mubr.f32.gmra.mxu0 %v1060
    %v3001 = vpop.f32.mrf.mxu0
    %v3002 = vadd.f32 %v552, %v3001
    %v3003 = vpop.f32.mrf.mxu0
    %3004 = vmatprep.mubr.f32.mxu0 0.0
    %3005 = vmatmul.mubr.f32.gmra.mxu0 %v1063
    %v3006 = vpop.f32.mrf.mxu0
    %v3007 = vadd.f32 %v552, %v3006
    %v3008 = vpop.f32.mrf.mxu0
    %3009 = vmatprep.mubr.f32.mxu0 0.0
    %3010 = vmatmul.mubr.f32.gmra.mxu0 %v1066
    %v3011 = vpop.f32.mrf.mxu0
    %v3012 = vadd.f32 %v552, %v3011
    %v3013 = vpop.f32.mrf.mxu0
    %3014 = vmatprep.mubr.f32.mxu0 0.0
    %3015 = vmatmul.mubr.f32.gmra.mxu0 %v1069
    %v3016 = vpop.f32.mrf.mxu0
    %v3017 = vadd.f32 %v552, %v3016
    %v3018 = vpop.f32.mrf.mxu0
    %3019 = vmatprep.mubr.f32.mxu0 0.0
    %3020 = vmatmul.mubr.f32.gmra.mxu0 %v1072
    %v3021 = vpop.f32.mrf.mxu0
    %v3022 = vadd.f32 %v552, %v3021
    %v3023 = vpop.f32.mrf.mxu0
    %3024 = vmatprep.mubr.f32.mxu0 0.0
    %3025 = vmatmul.mubr.f32.gmra.mxu0 %v1075
    %v3026 = vpop.f32.mrf.mxu0
    %v3027 = vadd.f32 %v552, %v3026
    %v3028 = vpop.f32.mrf.mxu0
    %3029 = vmatprep.mubr.f32.mxu0 0.0
    %3030 = vmatmul.mubr.f32.gmra.mxu0 %v1078
    %v3031 = vpop.f32.mrf.mxu0
    %v3032 = vadd.f32 %v552, %v3031
    %v3033 = vpop.f32.mrf.mxu0
    %3034 = vmatprep.mubr.f32.mxu0 0.0
    %3035 = vmatmul.mubr.f32.gmra.mxu0 %v1081
    %v3036 = vpop.f32.mrf.mxu0
    %v3037 = vadd.f32 %v552, %v3036
    %v3038 = vpop.f32.mrf.mxu0
    %3039 = vmatprep.mubr.f32.mxu0 0.0
    %3040 = vmatmul.mubr.f32.gmra.mxu0 %v1084
    %v3041 = vpop.f32.mrf.mxu0
    %v3042 = vadd.f32 %v552, %v3041
    %v3043 = vpop.f32.mrf.mxu0
    %3044 = vmatprep.mubr.f32.mxu0 0.0
    %3045 = vmatmul.mubr.f32.gmra.mxu0 %v1087
    %v3046 = vpop.f32.mrf.mxu0
    %v3047 = vadd.f32 %v552, %v3046
    %v3048 = vpop.f32.mrf.mxu0
    %3049 = vmatprep.mubr.f32.mxu0 0.0
    %3050 = vmatmul.mubr.f32.gmra.mxu0 %v1090
    %v3051 = vpop.f32.mrf.mxu0
    %v3052 = vadd.f32 %v552, %v3051
    %v3053 = vpop.f32.mrf.mxu0
    %3054 = vmatprep.mubr.f32.mxu0 0.0
    %3055 = vmatmul.mubr.f32.gmra.mxu0 %v1093
    %v3056 = vpop.f32.mrf.mxu0
    %v3057 = vadd.f32 %v552, %v3056
    %v3058 = vpop.f32.mrf.mxu0
    %3059 = vmatprep.mubr.f32.mxu0 0.0
    %3060 = vmatmul.mubr.f32.gmra.mxu0 %v1096
    %v3061 = vpop.f32.mrf.mxu0
    %v3062 = vadd.f32 %v552, %v3061
    %v3063 = vpop.f32.mrf.mxu0
    %3064 = vmatprep.mubr.f32.mxu0 0.0
    %3065 = vmatmul.mubr.f32.gmra.mxu0 %v1099
    %v3066 = vpop.f32.mrf.mxu0
    %v3067 = vadd.f32 %v552, %v3066
    %v3068 = vpop.f32.mrf.mxu0
    %3069 = vmatprep.mubr.f32.mxu0 0.0
    %3070 = vmatmul.mubr.f32.gmra.mxu0 %v1102
    %v3071 = vpop.f32.mrf.mxu0
    %v3072 = vadd.f32 %v552, %v3071
    %v3073 = vpop.f32.mrf.mxu0
    %3074 = vmatprep.mubr.f32.mxu0 0.0
    %3075 = vmatmul.mubr.f32.gmra.mxu0 %v1105
    %v3076 = vpop.f32.mrf.mxu0
    %v3077 = vadd.f32 %v552, %v3076
    %v3078 = vpop.f32.mrf.mxu0
    %3079 = vmatprep.mubr.f32.mxu0 0.0
    %3080 = vmatmul.mubr.f32.gmra.mxu0 %v1108
    %v3081 = vpop.f32.mrf.mxu0
    %v3082 = vadd.f32 %v552, %v3081
    %v3083 = vpop.f32.mrf.mxu0
    %3084 = vmatprep.mubr.f32.mxu0 0.0
    %3085 = vmatmul.mubr.f32.gmra.mxu0 %v1111
    %v3086 = vpop.f32.mrf.mxu0
    %v3087 = vadd.f32 %v552, %v3086
    %v3088 = vpop.f32.mrf.mxu0
    %3089 = vmatprep.mubr.f32.mxu0 0.0
    %3090 = vmatmul.mubr.f32.gmra.mxu0 %v1114
    %v3091 = vpop.f32.mrf.mxu0
    %v3092 = vadd.f32 %v552, %v3091
    %v3093 = vpop.f32.mrf.mxu0
    %3094 = vmatprep.mubr.f32.mxu0 0.0
    %3095 = vmatmul.mubr.f32.gmra.mxu0 %v1117
    %v3096 = vpop.f32.mrf.mxu0
    %v3097 = vadd.f32 %v552, %v3096
    %v3098 = vpop.f32.mrf.mxu0
    %3099 = vmatprep.mubr.f32.mxu0 0.0
    %3100 = vmatmul.mubr.f32.gmra.mxu0 %v1120
    %v3101 = vpop.f32.mrf.mxu0
    %v3102 = vadd.f32 %v552, %v3101
    %v3103 = vpop.f32.mrf.mxu0
    %3104 = vmatprep.mubr.f32.mxu0 0.0
    %3105 = vmatmul.mubr.f32.gmra.mxu0 %v1123
    %v3106 = vpop.f32.mrf.mxu0
    %v3107 = vadd.f32 %v552, %v3106
    %v3108 = vpop.f32.mrf.mxu0
    %3109 = vmatprep.mubr.f32.mxu0 0.0
    %3110 = vmatmul.mubr.f32.gmra.mxu0 %v1126
    %v3111 = vpop.f32.mrf.mxu0
    %v3112 = vadd.f32 %v552, %v3111
    %v3113 = vpop.f32.mrf.mxu0
    %3114 = vmatprep.mubr.f32.mxu0 0.0
    %3115 = vmatmul.mubr.f32.gmra.mxu0 %v1129
    %v3116 = vpop.f32.mrf.mxu0
    %v3117 = vadd.f32 %v552, %v3116
    %v3118 = vpop.f32.mrf.mxu0
    %3119 = vmatprep.mubr.f32.mxu0 0.0
    %3120 = vmatmul.mubr.f32.gmra.mxu0 %v1132
    %v3121 = vpop.f32.mrf.mxu0
    %v3122 = vadd.f32 %v552, %v3121
    %v3123 = vpop.f32.mrf.mxu0
    %3124 = vmatprep.mubr.f32.mxu0 0.0
    %3125 = vmatmul.mubr.f32.gmra.mxu0 %v1135
    %v3126 = vpop.f32.mrf.mxu0
    %v3127 = vadd.f32 %v552, %v3126
    %v3128 = vpop.f32.mrf.mxu0
    %3129 = vmatprep.mubr.f32.mxu0 0.0
    %3130 = vmatmul.mubr.f32.gmra.mxu0 %v1138
    %v3131 = vpop.f32.mrf.mxu0
    %v3132 = vadd.f32 %v552, %v3131
    %v3133 = vpop.f32.mrf.mxu0
    %3134 = vmatprep.mubr.f32.mxu0 0.0
    %3135 = vmatmul.mubr.f32.gmra.mxu0 %v1141
    %v3136 = vpop.f32.mrf.mxu0
    %v3137 = vadd.f32 %v552, %v3136
    %v3138 = vpop.f32.mrf.mxu0
    %3139 = vmatprep.mubr.f32.mxu0 0.0
    %3140 = vmatmul.mubr.f32.gmra.mxu0 %v1144
    %v3141 = vpop.f32.mrf.mxu0
    %v3142 = vadd.f32 %v552, %v3141
    %v3143 = vpop.f32.mrf.mxu0
    %3144 = vmatprep.mubr.f32.mxu0 0.0
    %3145 = vmatmul.mubr.f32.gmra.mxu0 %v1147
    %v3146 = vpop.f32.mrf.mxu0
    %v3147 = vadd.f32 %v552, %v3146
    %v3148 = vpop.f32.mrf.mxu0
    %3149 = vmatprep.mubr.f32.mxu0 0.0
    %3150 = vmatmul.mubr.f32.gmra.mxu0 %v1150
    %v3151 = vpop.f32.mrf.mxu0
    %v3152 = vadd.f32 %v552, %v3151
    %v3153 = vpop.f32.mrf.mxu0
    %3154 = vmatprep.mubr.f32.mxu0 0.0
    %3155 = vmatmul.mubr.f32.gmra.mxu0 %v1153
    %v3156 = vpop.f32.mrf.mxu0
    %v3157 = vadd.f32 %v552, %v3156
    %v3158 = vpop.f32.mrf.mxu0
    %3159 = vmatprep.mubr.f32.mxu0 0.0
    %3160 = vmatmul.mubr.f32.gmra.mxu0 %v1156
    %v3161 = vpop.f32.mrf.mxu0
    %v3162 = vadd.f32 %v552, %v3161
    %v3163 = vpop.f32.mrf.mxu0
    %3164 = vmatprep.mubr.f32.mxu0 0.0
    %3165 = vmatmul.mubr.f32.gmra.mxu0 %v1159
    %v3166 = vpop.f32.mrf.mxu0
    %v3167 = vadd.f32 %v552, %v3166
    %v3168 = vpop.f32.mrf.mxu0
    %3169 = vmatprep.mubr.f32.mxu0 0.0
    %3170 = vmatmul.mubr.f32.gmra.mxu0 %v1162
    %v3171 = vpop.f32.mrf.mxu0
    %v3172 = vadd.f32 %v552, %v3171
    %v3173 = vpop.f32.mrf.mxu0
    %3174 = vmatprep.mubr.f32.mxu0 0.0
    %3175 = vmatmul.mubr.f32.gmra.mxu0 %v1165
    %v3176 = vpop.f32.mrf.mxu0
    %v3177 = vadd.f32 %v552, %v3176
    %v3178 = vpop.f32.mrf.mxu0
    %3179 = vmatprep.mubr.f32.mxu0 0.0
    %3180 = vmatmul.mubr.f32.gmra.mxu0 %v1168
    %v3181 = vpop.f32.mrf.mxu0
    %v3182 = vadd.f32 %v552, %v3181
    %v3183 = vpop.f32.mrf.mxu0
    %3184 = vmatprep.mubr.f32.mxu0 0.0
    %3185 = vmatmul.mubr.f32.gmra.mxu0 %v1171
    %v3186 = vpop.f32.mrf.mxu0
    %v3187 = vadd.f32 %v552, %v3186
    %v3188 = vpop.f32.mrf.mxu0
    %3189 = vmatprep.mubr.f32.mxu0 0.0
    %3190 = vmatmul.mubr.f32.gmra.mxu0 %v1174
    %v3191 = vpop.f32.mrf.mxu0
    %v3192 = vadd.f32 %v552, %v3191
    %v3193 = vpop.f32.mrf.mxu0
    %3194 = vmatprep.mubr.f32.mxu0 0.0
    %3195 = vmatmul.mubr.f32.gmra.mxu0 %v1177
    %v3196 = vpop.f32.mrf.mxu0
    %v3197 = vadd.f32 %v552, %v3196
    %v3198 = vpop.f32.mrf.mxu0
    %3199 = vmatprep.mubr.f32.mxu0 0.0
    %3200 = vmatmul.mubr.f32.gmra.mxu0 %v1180
    %v3201 = vpop.f32.mrf.mxu0
    %v3202 = vadd.f32 %v552, %v3201
    %v3203 = vpop.f32.mrf.mxu0
    %3204 = vmatprep.mubr.f32.mxu0 0.0
    %3205 = vmatmul.mubr.f32.gmra.mxu0 %v1183
    %v3206 = vpop.f32.mrf.mxu0
    %v3207 = vadd.f32 %v552, %v3206
    %v3208 = vpop.f32.mrf.mxu0
    %3209 = vmatprep.mubr.f32.mxu0 0.0
    %3210 = vmatmul.mubr.f32.gmra.mxu0 %v1186
    %v3211 = vpop.f32.mrf.mxu0
    %v3212 = vadd.f32 %v552, %v3211
    %v3213 = vpop.f32.mrf.mxu0
    %3214 = vmatprep.mubr.f32.mxu0 0.0
    %3215 = vmatmul.mubr.f32.gmra.mxu0 %v1189
    %v3216 = vpop.f32.mrf.mxu0
    %v3217 = vadd.f32 %v552, %v3216
    %v3218 = vpop.f32.mrf.mxu0
    %3219 = vmatprep.mubr.f32.mxu0 0.0
    %3220 = vmatmul.mubr.f32.gmra.mxu0 %v1192
    %v3221 = vpop.f32.mrf.mxu0
    %v3222 = vadd.f32 %v552, %v3221
    %v3223 = vpop.f32.mrf.mxu0
    %3224 = vmatprep.mubr.f32.mxu0 0.0
    %3225 = vmatmul.mubr.f32.gmra.mxu0 %v1195
    %v3226 = vpop.f32.mrf.mxu0
    %v3227 = vadd.f32 %v552, %v3226
    %v3228 = vpop.f32.mrf.mxu0
    %3229 = vmatprep.mubr.f32.mxu0 0.0
    %3230 = vmatmul.mubr.f32.gmra.mxu0 %v1198
    %v3231 = vpop.f32.mrf.mxu0
    %v3232 = vadd.f32 %v552, %v3231
    %v3233 = vpop.f32.mrf.mxu0
    %3234 = vmatprep.mubr.f32.mxu0 0.0
    %3235 = vmatmul.mubr.f32.gmra.mxu0 %v1201
    %v3236 = vpop.f32.mrf.mxu0
    %v3237 = vadd.f32 %v552, %v3236
    %v3238 = vpop.f32.mrf.mxu0
    %3239 = vmatprep.mubr.f32.mxu0 0.0
    %3240 = vmatmul.mubr.f32.gmra.mxu0 %v1204
    %v3241 = vpop.f32.mrf.mxu0
    %v3242 = vadd.f32 %v552, %v3241
    %v3243 = vpop.f32.mrf.mxu0
    %3244 = vmatprep.mubr.f32.mxu0 0.0
    %3245 = vmatmul.mubr.f32.gmra.mxu0 %v1207
    %v3246 = vpop.f32.mrf.mxu0
    %v3247 = vadd.f32 %v552, %v3246
    %v3248 = vpop.f32.mrf.mxu0
    %3249 = vmatprep.mubr.f32.mxu0 0.0
    %3250 = vmatmul.mubr.f32.gmra.mxu0 %v1210
    %v3251 = vpop.f32.mrf.mxu0
    %v3252 = vadd.f32 %v552, %v3251
    %v3253 = vpop.f32.mrf.mxu0
    %3254 = vmatprep.mubr.f32.mxu0 0.0
    %3255 = vmatmul.mubr.f32.gmra.mxu0 %v1213
    %v3256 = vpop.f32.mrf.mxu0
    %v3257 = vadd.f32 %v552, %v3256
    %v3258 = vpop.f32.mrf.mxu0
    %3259 = vmatprep.mubr.f32.mxu0 0.0
    %3260 = vmatmul.mubr.f32.gmra.mxu0 %v1216
    %v3261 = vpop.f32.mrf.mxu0
    %v3262 = vadd.f32 %v552, %v3261
    %v3263 = vpop.f32.mrf.mxu0
    %3264 = vmatprep.mubr.f32.mxu0 0.0
    %3265 = vmatmul.mubr.f32.gmra.mxu0 %v1219
    %v3266 = vpop.f32.mrf.mxu0
    %v3267 = vadd.f32 %v552, %v3266
    %v3268 = vpop.f32.mrf.mxu0
    %3269 = vmatprep.mubr.f32.mxu0 0.0
    %3270 = vmatmul.mubr.f32.gmra.mxu0 %v1222
    %v3271 = vpop.f32.mrf.mxu0
    %v3272 = vadd.f32 %v552, %v3271
    %v3273 = vpop.f32.mrf.mxu0
    %3274 = vmatprep.mubr.f32.mxu0 0.0
    %3275 = vmatmul.mubr.f32.gmra.mxu0 %v1225
    %v3276 = vpop.f32.mrf.mxu0
    %v3277 = vadd.f32 %v552, %v3276
    %v3278 = vpop.f32.mrf.mxu0
    %3279 = vmatprep.mubr.f32.mxu0 0.0
    %3280 = vmatmul.mubr.f32.gmra.mxu0 %v1228
    %v3281 = vpop.f32.mrf.mxu0
    %v3282 = vadd.f32 %v552, %v3281
    %v3283 = vpop.f32.mrf.mxu0
    %3284 = vmatprep.mubr.f32.mxu0 0.0
    %3285 = vmatmul.mubr.f32.gmra.mxu0 %v1231
    %v3286 = vpop.f32.mrf.mxu0
    %v3287 = vadd.f32 %v552, %v3286
    %v3288 = vpop.f32.mrf.mxu0
    %3289 = vmatprep.mubr.f32.mxu0 0.0
    %3290 = vmatmul.mubr.f32.gmra.mxu0 %v1234
    %v3291 = vpop.f32.mrf.mxu0
    %v3292 = vadd.f32 %v552, %v3291
    %v3293 = vpop.f32.mrf.mxu0
    %3294 = vmatprep.mubr.f32.mxu0 0.0
    %3295 = vmatmul.mubr.f32.gmra.mxu0 %v1237
    %v3296 = vpop.f32.mrf.mxu0
    %v3297 = vadd.f32 %v552, %v3296
    %v3298 = vpop.f32.mrf.mxu0
    %3299 = vmatprep.mubr.f32.mxu0 0.0
    %3300 = vmatmul.mubr.f32.gmra.mxu0 %v1240
    %v3301 = vpop.f32.mrf.mxu0
    %v3302 = vadd.f32 %v552, %v3301
    %v3303 = vpop.f32.mrf.mxu0
    %3304 = vmatprep.mubr.f32.mxu0 0.0
    %3305 = vmatmul.mubr.f32.gmra.mxu0 %v1243
    %v3306 = vpop.f32.mrf.mxu0
    %v3307 = vadd.f32 %v552, %v3306
    %v3308 = vpop.f32.mrf.mxu0
    %3309 = vmatprep.mubr.f32.mxu0 0.0
    %3310 = vmatmul.mubr.f32.gmra.mxu0 %v1246
    %v3311 = vpop.f32.mrf.mxu0
    %v3312 = vadd.f32 %v552, %v3311
    %v3313 = vpop.f32.mrf.mxu0
    %3314 = vmatprep.mubr.f32.mxu0 0.0
    %3315 = vmatmul.mubr.f32.gmra.mxu0 %v1249
    %v3316 = vpop.f32.mrf.mxu0
    %v3317 = vadd.f32 %v552, %v3316
    %v3318 = vpop.f32.mrf.mxu0
    %3319 = vmatprep.mubr.f32.mxu0 0.0
    %3320 = vmatmul.mubr.f32.gmra.mxu0 %v1252
    %v3321 = vpop.f32.mrf.mxu0
    %v3322 = vadd.f32 %v552, %v3321
    %v3323 = vpop.f32.mrf.mxu0
    %3324 = vmatprep.mubr.f32.mxu0 0.0
    %3325 = vmatmul.mubr.f32.gmra.mxu0 %v1255
    %v3326 = vpop.f32.mrf.mxu0
    %v3327 = vadd.f32 %v552, %v3326
    %v3328 = vpop.f32.mrf.mxu0
    %3329 = vmatprep.mubr.f32.mxu0 0.0
    %3330 = vmatmul.mubr.f32.gmra.mxu0 %v1258
    %v3331 = vpop.f32.mrf.mxu0
    %v3332 = vadd.f32 %v552, %v3331
    %v3333 = vpop.f32.mrf.mxu0
    %3334 = vmatprep.mubr.f32.mxu0 0.0
    %3335 = vmatmul.mubr.f32.gmra.mxu0 %v1261
    %v3336 = vpop.f32.mrf.mxu0
    %v3337 = vadd.f32 %v552, %v3336
    %v3338 = vpop.f32.mrf.mxu0
    %3339 = vmatprep.mubr.f32.mxu0 0.0
    %3340 = vmatmul.mubr.f32.gmra.mxu0 %v1264
    %v3341 = vpop.f32.mrf.mxu0
    %v3342 = vadd.f32 %v552, %v3341
    %v3343 = vpop.f32.mrf.mxu0
    %3344 = vmatprep.mubr.f32.mxu0 0.0
    %3345 = vmatmul.mubr.f32.gmra.mxu0 %v1267
    %v3346 = vpop.f32.mrf.mxu0
    %v3347 = vadd.f32 %v552, %v3346
    %v3348 = vpop.f32.mrf.mxu0
    %3349 = vmatprep.mubr.f32.mxu0 0.0
    %3350 = vmatmul.mubr.f32.gmra.mxu0 %v1270
    %v3351 = vpop.f32.mrf.mxu0
    %v3352 = vadd.f32 %v552, %v3351
    %v3353 = vpop.f32.mrf.mxu0
    %3354 = vmatprep.mubr.f32.mxu0 0.0
    %3355 = vmatmul.mubr.f32.gmra.mxu0 %v1273
    %v3356 = vpop.f32.mrf.mxu0
    %v3357 = vadd.f32 %v552, %v3356
    %v3358 = vpop.f32.mrf.mxu0
    %3359 = vmatprep.mubr.f32.mxu0 0.0
    %3360 = vmatmul.mubr.f32.gmra.mxu0 %v1276
    %v3361 = vpop.f32.mrf.mxu0
    %v3362 = vadd.f32 %v552, %v3361
    %v3363 = vpop.f32.mrf.mxu0
    %3364 = vmatprep.mubr.f32.mxu0 0.0
    %3365 = vmatmul.mubr.f32.gmra.mxu0 %v1279
    %v3366 = vpop.f32.mrf.mxu0
    %v3367 = vadd.f32 %v552, %v3366
    %v3368 = vpop.f32.mrf.mxu0
    %3369 = vmatprep.mubr.f32.mxu0 0.0
    %3370 = vmatmul.mubr.f32.gmra.mxu0 %v1282
    %v3371 = vpop.f32.mrf.mxu0
    %v3372 = vadd.f32 %v552, %v3371
    %v3373 = vpop.f32.mrf.mxu0
    %3374 = vmatprep.mubr.f32.mxu0 0.0
    %3375 = vmatmul.mubr.f32.gmra.mxu0 %v1285
    %v3376 = vpop.f32.mrf.mxu0
    %v3377 = vadd.f32 %v552, %v3376
    %v3378 = vpop.f32.mrf.mxu0
    %3379 = vmatprep.mubr.f32.mxu0 0.0
    %3380 = vmatmul.mubr.f32.gmra.mxu0 %v1288
    %v3381 = vpop.f32.mrf.mxu0
    %v3382 = vadd.f32 %v552, %v3381
    %v3383 = vpop.f32.mrf.mxu0
    %3384 = vmatprep.mubr.f32.mxu0 0.0
    %3385 = vmatmul.mubr.f32.gmra.mxu0 %v1291
    %v3386 = vpop.f32.mrf.mxu0
    %v3387 = vadd.f32 %v552, %v3386
    %v3388 = vpop.f32.mrf.mxu0
    %3389 = vmatprep.mubr.f32.mxu0 0.0
    %3390 = vmatmul.mubr.f32.gmra.mxu0 %v1294
    %v3391 = vpop.f32.mrf.mxu0
    %v3392 = vadd.f32 %v552, %v3391
    %v3393 = vpop.f32.mrf.mxu0
    %3394 = vmatprep.mubr.f32.mxu0 0.0
    %3395 = vmatmul.mubr.f32.gmra.mxu0 %v1297
    %v3396 = vpop.f32.mrf.mxu0
    %v3397 = vadd.f32 %v552, %v3396
    %v3398 = vpop.f32.mrf.mxu0
    %3399 = vmatprep.mubr.f32.mxu0 0.0
    %3400 = vmatmul.mubr.f32.gmra.mxu0 %v1300
    %v3401 = vpop.f32.mrf.mxu0
    %v3402 = vadd.f32 %v552, %v3401
    %v3403 = vpop.f32.mrf.mxu0
    %3404 = vmatprep.mubr.f32.mxu0 0.0
    %3405 = vmatmul.mubr.f32.gmra.mxu0 %v1303
    %v3406 = vpop.f32.mrf.mxu0
    %v3407 = vadd.f32 %v552, %v3406
    %v3408 = vpop.f32.mrf.mxu0
    %3409 = vmatprep.mubr.f32.mxu0 0.0
    %3410 = vmatmul.mubr.f32.gmra.mxu0 %v1306
    %v3411 = vpop.f32.mrf.mxu0
    %v3412 = vadd.f32 %v552, %v3411
    %v3413 = vpop.f32.mrf.mxu0
    %3414 = vmatprep.mubr.f32.mxu0 0.0
    %3415 = vmatmul.mubr.f32.gmra.mxu0 %v1309
    %v3416 = vpop.f32.mrf.mxu0
    %v3417 = vadd.f32 %v552, %v3416
    %v3418 = vpop.f32.mrf.mxu0
    %3419 = vmatprep.mubr.f32.mxu0 0.0
    %3420 = vmatmul.mubr.f32.gmra.mxu0 %v1312
    %v3421 = vpop.f32.mrf.mxu0
    %v3422 = vadd.f32 %v552, %v3421
    %v3423 = vpop.f32.mrf.mxu0
    %3424 = vmatprep.mubr.f32.mxu0 0.0
    %3425 = vmatmul.mubr.f32.gmra.mxu0 %v1315
    %v3426 = vpop.f32.mrf.mxu0
    %v3427 = vadd.f32 %v552, %v3426
    %v3428 = vpop.f32.mrf.mxu0
    %3429 = vmatprep.mubr.f32.mxu0 0.0
    %3430 = vmatmul.mubr.f32.gmra.mxu0 %v1318
    %v3431 = vpop.f32.mrf.mxu0
    %v3432 = vadd.f32 %v552, %v3431
    %v3433 = vpop.f32.mrf.mxu0
    %3434 = vmatprep.mubr.f32.mxu0 0.0
    %3435 = vmatmul.mubr.f32.gmra.mxu0 %v1321
    %v3436 = vpop.f32.mrf.mxu0
    %v3437 = vadd.f32 %v552, %v3436
    %v3438 = vpop.f32.mrf.mxu0
    %3439 = vmatprep.mubr.f32.mxu0 0.0
    %3440 = vmatmul.mubr.f32.gmra.mxu0 %v1324
    %v3441 = vpop.f32.mrf.mxu0
    %v3442 = vadd.f32 %v552, %v3441
    %v3443 = vpop.f32.mrf.mxu0
    %3444 = vmatprep.mubr.f32.mxu0 0.0
    %3445 = vmatmul.mubr.f32.gmra.mxu0 %v1327
    %v3446 = vpop.f32.mrf.mxu0
    %v3447 = vadd.f32 %v552, %v3446
    %v3448 = vpop.f32.mrf.mxu0
    %3449 = vmatprep.mubr.f32.mxu0 0.0
    %3450 = vmatmul.mubr.f32.gmra.mxu0 %v1330
    %v3451 = vpop.f32.mrf.mxu0
    %v3452 = vadd.f32 %v552, %v3451
    %v3453 = vpop.f32.mrf.mxu0
    %3454 = vmatprep.mubr.f32.mxu0 0.0
    %3455 = vmatmul.mubr.f32.gmra.mxu0 %v1333
    %v3456 = vpop.f32.mrf.mxu0
    %v3457 = vadd.f32 %v552, %v3456
    %v3458 = vpop.f32.mrf.mxu0
    %3459 = vmatprep.mubr.f32.mxu0 0.0
    %3460 = vmatmul.mubr.f32.gmra.mxu0 %v1336
    %v3461 = vpop.f32.mrf.mxu0
    %v3462 = vadd.f32 %v552, %v3461
    %v3463 = vpop.f32.mrf.mxu0
    %3464 = vmatprep.mubr.f32.mxu0 0.0
    %3465 = vmatmul.mubr.f32.gmra.mxu0 %v1339
    %v3466 = vpop.f32.mrf.mxu0
    %v3467 = vadd.f32 %v552, %v3466
    %v3468 = vpop.f32.mrf.mxu0
    %3469 = vmatprep.mubr.f32.mxu0 0.0
    %3470 = vmatmul.mubr.f32.gmra.mxu0 %v1342
    %v3471 = vpop.f32.mrf.mxu0
    %v3472 = vadd.f32 %v552, %v3471
    %v3473 = vpop.f32.mrf.mxu0
    %3474 = vmatprep.mubr.f32.mxu0 0.0
    %3475 = vmatmul.mubr.f32.gmra.mxu0 %v1345
    %v3476 = vpop.f32.mrf.mxu0
    %v3477 = vadd.f32 %v552, %v3476
    %v3478 = vpop.f32.mrf.mxu0
    %3479 = vmatprep.mubr.f32.mxu0 0.0
    %3480 = vmatmul.mubr.f32.gmra.mxu0 %v1348
    %v3481 = vpop.f32.mrf.mxu0
    %v3482 = vadd.f32 %v552, %v3481
    %v3483 = vpop.f32.mrf.mxu0
    %3484 = vmatprep.mubr.f32.mxu0 0.0
    %3485 = vmatmul.mubr.f32.gmra.mxu0 %v1351
    %v3486 = vpop.f32.mrf.mxu0
    %v3487 = vadd.f32 %v552, %v3486
    %v3488 = vpop.f32.mrf.mxu0
    %3489 = vmatprep.mubr.f32.mxu0 0.0
    %3490 = vmatmul.mubr.f32.gmra.mxu0 %v1354
    %v3491 = vpop.f32.mrf.mxu0
    %v3492 = vadd.f32 %v552, %v3491
    %v3493 = vpop.f32.mrf.mxu0
    %3494 = vmatprep.mubr.f32.mxu0 0.0
    %3495 = vmatmul.mubr.f32.gmra.mxu0 %v1357
    %v3496 = vpop.f32.mrf.mxu0
    %v3497 = vadd.f32 %v552, %v3496
    %v3498 = vpop.f32.mrf.mxu0
    %3499 = vmatprep.mubr.f32.mxu0 0.0
    %3500 = vmatmul.mubr.f32.gmra.mxu0 %v1360
    %v3501 = vpop.f32.mrf.mxu0
    %v3502 = vadd.f32 %v552, %v3501
    %v3503 = vpop.f32.mrf.mxu0
    %3504 = vmatprep.mubr.f32.mxu0 0.0
    %3505 = vmatmul.mubr.f32.gmra.mxu0 %v1363
    %v3506 = vpop.f32.mrf.mxu0
    %v3507 = vadd.f32 %v552, %v3506
    %v3508 = vpop.f32.mrf.mxu0
    %3509 = vmatprep.mubr.f32.mxu0 0.0
    %3510 = vmatmul.mubr.f32.gmra.mxu0 %v1366
    %v3511 = vpop.f32.mrf.mxu0
    %v3512 = vadd.f32 %v552, %v3511
    %v3513 = vpop.f32.mrf.mxu0
    %3514 = vmatprep.mubr.f32.mxu0 0.0
    %3515 = vmatmul.mubr.f32.gmra.mxu0 %v1369
    %v3516 = vpop.f32.mrf.mxu0
    %v3517 = vadd.f32 %v552, %v3516
    %v3518 = vpop.f32.mrf.mxu0
    %3519 = vmatprep.mubr.f32.mxu0 0.0
    %3520 = vmatmul.mubr.f32.gmra.mxu0 %v1372
    %v3521 = vpop.f32.mrf.mxu0
    %v3522 = vadd.f32 %v552, %v3521
    %v3523 = vpop.f32.mrf.mxu0
    %3524 = vmatprep.mubr.f32.mxu0 0.0
    %3525 = vmatmul.mubr.f32.gmra.mxu0 %v1375
    %v3526 = vpop.f32.mrf.mxu0
    %v3527 = vadd.f32 %v552, %v3526
    %v3528 = vpop.f32.mrf.mxu0
    %3529 = vmatprep.mubr.f32.mxu0 0.0
    %3530 = vmatmul.mubr.f32.gmra.mxu0 %v1378
    %v3531 = vpop.f32.mrf.mxu0
    %v3532 = vadd.f32 %v552, %v3531
    %v3533 = vpop.f32.mrf.mxu0
    %3534 = vmatprep.mubr.f32.mxu0 0.0
    %3535 = vmatmul.mubr.f32.gmra.mxu0 %v1381
    %v3536 = vpop.f32.mrf.mxu0
    %v3537 = vadd.f32 %v552, %v3536
    %v3538 = vpop.f32.mrf.mxu0
    %3539 = vmatprep.mubr.f32.mxu0 0.0
    %3540 = vmatmul.mubr.f32.gmra.mxu0 %v1384
    %v3541 = vpop.f32.mrf.mxu0
    %v3542 = vadd.f32 %v552, %v3541
    %v3543 = vpop.f32.mrf.mxu0
    %3544 = vmatprep.mubr.f32.mxu0 0.0
    %3545 = vmatmul.mubr.f32.gmra.mxu0 %v1387
    %v3546 = vpop.f32.mrf.mxu0
    %v3547 = vadd.f32 %v552, %v3546
    %v3548 = vpop.f32.mrf.mxu0
    %3549 = vmatprep.mubr.f32.mxu0 0.0
    %3550 = vmatmul.mubr.f32.gmra.mxu0 %v1390
    %v3551 = vpop.f32.mrf.mxu0
    %v3552 = vadd.f32 %v552, %v3551
    %v3553 = vpop.f32.mrf.mxu0
    %3554 = vmatprep.mubr.f32.mxu0 0.0
    %3555 = vmatmul.mubr.f32.gmra.mxu0 %v1393
    %v3556 = vpop.f32.mrf.mxu0
    %v3557 = vadd.f32 %v552, %v3556
    %v3558 = vpop.f32.mrf.mxu0
    %3559 = vmatprep.mubr.f32.mxu0 0.0
    %3560 = vmatmul.mubr.f32.gmra.mxu0 %v1396
    %v3561 = vpop.f32.mrf.mxu0
    %v3562 = vadd.f32 %v552, %v3561
    %v3563 = vpop.f32.mrf.mxu0
    %3564 = vmatprep.mubr.f32.mxu0 0.0
    %3565 = vmatmul.mubr.f32.gmra.mxu0 %v1399
    %v3566 = vpop.f32.mrf.mxu0
    %v3567 = vadd.f32 %v552, %v3566
    %v3568 = vpop.f32.mrf.mxu0
    %3569 = vmatprep.mubr.f32.mxu0 0.0
    %3570 = vmatmul.mubr.f32.gmra.mxu0 %v1402
    %v3571 = vpop.f32.mrf.mxu0
    %v3572 = vadd.f32 %v552, %v3571
    %v3573 = vpop.f32.mrf.mxu0
    %3574 = vmatprep.mubr.f32.mxu0 0.0
    %3575 = vmatmul.mubr.f32.gmra.mxu0 %v1405
    %v3576 = vpop.f32.mrf.mxu0
    %v3577 = vadd.f32 %v552, %v3576
    %v3578 = vpop.f32.mrf.mxu0
    %3579 = vmatprep.mubr.f32.mxu0 0.0
    %3580 = vmatmul.mubr.f32.gmra.mxu0 %v1408
    %v3581 = vpop.f32.mrf.mxu0
    %v3582 = vadd.f32 %v552, %v3581
    %v3583 = vpop.f32.mrf.mxu0
    %3584 = vmatprep.mubr.f32.mxu0 0.0
    %3585 = vmatmul.mubr.f32.gmra.mxu0 %v1411
    %v3586 = vpop.f32.mrf.mxu0
    %v3587 = vadd.f32 %v552, %v3586
    %v3588 = vpop.f32.mrf.mxu0
    %3589 = vmatprep.mubr.f32.mxu0 0.0
    %3590 = vmatmul.mubr.f32.gmra.mxu0 %v1414
    %v3591 = vpop.f32.mrf.mxu0
    %v3592 = vadd.f32 %v552, %v3591
    %v3593 = vpop.f32.mrf.mxu0
    %3594 = vmatprep.mubr.f32.mxu0 0.0
    %3595 = vmatmul.mubr.f32.gmra.mxu0 %v1417
    %v3596 = vpop.f32.mrf.mxu0
    %v3597 = vadd.f32 %v552, %v3596
    %v3598 = vpop.f32.mrf.mxu0
    %3599 = vmatprep.mubr.f32.mxu0 0.0
    %3600 = vmatmul.mubr.f32.gmra.mxu0 %v1420
    %v3601 = vpop.f32.mrf.mxu0
    %v3602 = vadd.f32 %v552, %v3601
    %v3603 = vpop.f32.mrf.mxu0
    %3604 = vmatprep.mubr.f32.mxu0 0.0
    %3605 = vmatmul.mubr.f32.gmra.mxu0 %v1423
    %v3606 = vpop.f32.mrf.mxu0
    %v3607 = vadd.f32 %v552, %v3606
    %v3608 = vpop.f32.mrf.mxu0
    %3609 = vmatprep.mubr.f32.mxu0 0.0
    %3610 = vmatmul.mubr.f32.gmra.mxu0 %v1426
    %v3611 = vpop.f32.mrf.mxu0
    %v3612 = vadd.f32 %v552, %v3611
    %v3613 = vpop.f32.mrf.mxu0
    %3614 = vmatprep.mubr.f32.mxu0 0.0
    %3615 = vmatmul.mubr.f32.gmra.mxu0 %v1429
    %v3616 = vpop.f32.mrf.mxu0
    %v3617 = vadd.f32 %v552, %v3616
    %v3618 = vpop.f32.mrf.mxu0
    %3619 = vmatprep.mubr.f32.mxu0 0.0
    %3620 = vmatmul.mubr.f32.gmra.mxu0 %v1432
    %v3621 = vpop.f32.mrf.mxu0
    %v3622 = vadd.f32 %v552, %v3621
    %v3623 = vpop.f32.mrf.mxu0
    %3624 = vmatprep.mubr.f32.mxu0 0.0
    %3625 = vmatmul.mubr.f32.gmra.mxu0 %v1435
    %v3626 = vpop.f32.mrf.mxu0
    %v3627 = vadd.f32 %v552, %v3626
    %v3628 = vpop.f32.mrf.mxu0
    %3629 = vmatprep.mubr.f32.mxu0 0.0
    %3630 = vmatmul.mubr.f32.gmra.mxu0 %v1438
    %v3631 = vpop.f32.mrf.mxu0
    %v3632 = vadd.f32 %v552, %v3631
    %v3633 = vpop.f32.mrf.mxu0
    %3634 = vmatprep.mubr.f32.mxu0 0.0
    %3635 = vmatmul.mubr.f32.gmra.mxu0 %v1441
    %v3636 = vpop.f32.mrf.mxu0
    %v3637 = vadd.f32 %v552, %v3636
    %v3638 = vpop.f32.mrf.mxu0
    %3639 = vmatprep.mubr.f32.mxu0 0.0
    %3640 = vmatmul.mubr.f32.gmra.mxu0 %v1444
    %v3641 = vpop.f32.mrf.mxu0
    %v3642 = vadd.f32 %v552, %v3641
    %v3643 = vpop.f32.mrf.mxu0
    %3644 = vmatprep.mubr.f32.mxu0 0.0
    %3645 = vmatmul.mubr.f32.gmra.mxu0 %v1447
    %v3646 = vpop.f32.mrf.mxu0
    %v3647 = vadd.f32 %v552, %v3646
    %v3648 = vpop.f32.mrf.mxu0
    %3649 = vmatprep.mubr.f32.mxu0 0.0
    %3650 = vmatmul.mubr.f32.gmra.mxu0 %v1450
    %v3651 = vpop.f32.mrf.mxu0
    %v3652 = vadd.f32 %v552, %v3651
    %v3653 = vpop.f32.mrf.mxu0
    %3654 = vmatprep.mubr.f32.mxu0 0.0
    %3655 = vmatmul.mubr.f32.gmra.mxu0 %v1453
    %v3656 = vpop.f32.mrf.mxu0
    %v3657 = vadd.f32 %v552, %v3656
    %v3658 = vpop.f32.mrf.mxu0
    %3659 = vmatprep.mubr.f32.mxu0 0.0
    %3660 = vmatmul.mubr.f32.gmra.mxu0 %v1456
    %v3661 = vpop.f32.mrf.mxu0
    %v3662 = vadd.f32 %v552, %v3661
    %v3663 = vpop.f32.mrf.mxu0
    %3664 = vmatprep.mubr.f32.mxu0 0.0
    %3665 = vmatmul.mubr.f32.gmra.mxu0 %v1459
    %v3666 = vpop.f32.mrf.mxu0
    %v3667 = vadd.f32 %v552, %v3666
    %v3668 = vpop.f32.mrf.mxu0
    %3669 = vmatprep.mubr.f32.mxu0 0.0
    %3670 = vmatmul.mubr.f32.gmra.mxu0 %v1462
    %v3671 = vpop.f32.mrf.mxu0
    %v3672 = vadd.f32 %v552, %v3671
    %v3673 = vpop.f32.mrf.mxu0
    %3674 = vmatprep.mubr.f32.mxu0 0.0
    %3675 = vmatmul.mubr.f32.gmra.mxu0 %v1465
    %v3676 = vpop.f32.mrf.mxu0
    %v3677 = vadd.f32 %v552, %v3676
    %v3678 = vpop.f32.mrf.mxu0
    %3679 = vmatprep.mubr.f32.mxu0 0.0
    %3680 = vmatmul.mubr.f32.gmra.mxu0 %v1468
    %v3681 = vpop.f32.mrf.mxu0
    %v3682 = vadd.f32 %v552, %v3681
    %v3683 = vpop.f32.mrf.mxu0
    %3684 = vmatprep.mubr.f32.mxu0 0.0
    %3685 = vmatmul.mubr.f32.gmra.mxu0 %v1471
    %v3686 = vpop.f32.mrf.mxu0
    %v3687 = vadd.f32 %v552, %v3686
    %v3688 = vpop.f32.mrf.mxu0
    %3689 = vmatprep.mubr.f32.mxu0 0.0
    %3690 = vmatmul.mubr.f32.gmra.mxu0 %v1474
    %v3691 = vpop.f32.mrf.mxu0
    %v3692 = vadd.f32 %v552, %v3691
    %v3693 = vpop.f32.mrf.mxu0
    %3694 = vmatprep.mubr.f32.mxu0 0.0
    %3695 = vmatmul.mubr.f32.gmra.mxu0 %v1477
    %v3696 = vpop.f32.mrf.mxu0
    %v3697 = vadd.f32 %v552, %v3696
    %v3698 = vpop.f32.mrf.mxu0
    %3699 = vmatprep.mubr.f32.mxu0 0.0
    %3700 = vmatmul.mubr.f32.gmra.mxu0 %v1480
    %v3701 = vpop.f32.mrf.mxu0
    %v3702 = vadd.f32 %v552, %v3701
    %v3703 = vpop.f32.mrf.mxu0
    %3704 = vmatprep.mubr.f32.mxu0 0.0
    %3705 = vmatmul.mubr.f32.gmra.mxu0 %v1483
    %v3706 = vpop.f32.mrf.mxu0
    %v3707 = vadd.f32 %v552, %v3706
    %v3708 = vpop.f32.mrf.mxu0
    %3709 = vmatprep.mubr.f32.mxu0 0.0
    %3710 = vmatmul.mubr.f32.gmra.mxu0 %v1486
    %v3711 = vpop.f32.mrf.mxu0
    %v3712 = vadd.f32 %v552, %v3711
    %v3713 = vpop.f32.mrf.mxu0
    %3714 = vmatprep.mubr.f32.mxu0 0.0
    %3715 = vmatmul.mubr.f32.gmra.mxu0 %v1489
    %v3716 = vpop.f32.mrf.mxu0
    %v3717 = vadd.f32 %v552, %v3716
    %v3718 = vpop.f32.mrf.mxu0
    %3719 = vmatprep.mubr.f32.mxu0 0.0
    %3720 = vmatmul.mubr.f32.gmra.mxu0 %v1492
    %v3721 = vpop.f32.mrf.mxu0
    %v3722 = vadd.f32 %v552, %v3721
    %v3723 = vpop.f32.mrf.mxu0
    %3724 = vmatprep.mubr.f32.mxu0 0.0
    %3725 = vmatmul.mubr.f32.gmra.mxu0 %v1495
    %v3726 = vpop.f32.mrf.mxu0
    %v3727 = vadd.f32 %v552, %v3726
    %v3728 = vpop.f32.mrf.mxu0
    %3729 = vmatprep.mubr.f32.mxu0 0.0
    %3730 = vmatmul.mubr.f32.gmra.mxu0 %v1498
    %v3731 = vpop.f32.mrf.mxu0
    %v3732 = vadd.f32 %v552, %v3731
    %v3733 = vpop.f32.mrf.mxu0
    %3734 = vmatprep.mubr.f32.mxu0 0.0
    %3735 = vmatmul.mubr.f32.gmra.mxu0 %v1501
    %v3736 = vpop.f32.mrf.mxu0
    %v3737 = vadd.f32 %v552, %v3736
    %v3738 = vpop.f32.mrf.mxu0
    %3739 = vmatprep.mubr.f32.mxu0 0.0
    %3740 = vmatmul.mubr.f32.gmra.mxu0 %v1504
    %v3741 = vpop.f32.mrf.mxu0
    %v3742 = vadd.f32 %v552, %v3741
    %v3743 = vpop.f32.mrf.mxu0
    %3744 = vmatprep.mubr.f32.mxu0 0.0
    %3745 = vmatmul.mubr.f32.gmra.mxu0 %v1507
    %v3746 = vpop.f32.mrf.mxu0
    %v3747 = vadd.f32 %v552, %v3746
    %v3748 = vpop.f32.mrf.mxu0
    %3749 = vmatprep.mubr.f32.mxu0 0.0
    %3750 = vmatmul.mubr.f32.gmra.mxu0 %v1510
    %v3751 = vpop.f32.mrf.mxu0
    %v3752 = vadd.f32 %v552, %v3751
    %v3753 = vpop.f32.mrf.mxu0
    %3754 = vmatprep.mubr.f32.mxu0 0.0
    %3755 = vmatmul.mubr.f32.gmra.mxu0 %v1513
    %v3756 = vpop.f32.mrf.mxu0
    %v3757 = vadd.f32 %v552, %v3756
    %v3758 = vpop.f32.mrf.mxu0
    %3759 = vmatprep.mubr.f32.mxu0 0.0
    %3760 = vmatmul.mubr.f32.gmra.mxu0 %v1516
    %v3761 = vpop.f32.mrf.mxu0
    %v3762 = vadd.f32 %v552, %v3761
    %v3763 = vpop.f32.mrf.mxu0
    %3764 = vmatprep.mubr.f32.mxu0 0.0
    %3765 = vmatmul.mubr.f32.gmra.mxu0 %v1519
    %v3766 = vpop.f32.mrf.mxu0
    %v3767 = vadd.f32 %v552, %v3766
    %v3768 = vpop.f32.mrf.mxu0
    %3769 = vmatprep.mubr.f32.mxu0 0.0
    %3770 = vmatmul.mubr.f32.gmra.mxu0 %v1522
    %v3771 = vpop.f32.mrf.mxu0
    %v3772 = vadd.f32 %v552, %v3771
    %v3773 = vpop.f32.mrf.mxu0
    %3774 = vmatprep.mubr.f32.mxu0 0.0
    %3775 = vmatmul.mubr.f32.gmra.mxu0 %v1525
    %v3776 = vpop.f32.mrf.mxu0
    %v3777 = vadd.f32 %v552, %v3776
    %v3778 = vpop.f32.mrf.mxu0
    %3779 = vmatprep.mubr.f32.mxu0 0.0
    %3780 = vmatmul.mubr.f32.gmra.mxu0 %v1528
    %v3781 = vpop.f32.mrf.mxu0
    %v3782 = vadd.f32 %v552, %v3781
    %v3783 = vpop.f32.mrf.mxu0
    %3784 = vmatprep.mubr.f32.mxu0 0.0
    %3785 = vmatmul.mubr.f32.gmra.mxu0 %v1531
    %v3786 = vpop.f32.mrf.mxu0
    %v3787 = vadd.f32 %v552, %v3786
    %v3788 = vpop.f32.mrf.mxu0
    %3789 = vmatprep.mubr.f32.mxu0 0.0
    %3790 = vmatmul.mubr.f32.gmra.mxu0 %v1534
    %v3791 = vpop.f32.mrf.mxu0
    %v3792 = vadd.f32 %v552, %v3791
    %v3793 = vpop.f32.mrf.mxu0
    %3794 = vmatprep.mubr.f32.mxu0 0.0
    %3795 = vmatmul.mubr.f32.gmra.mxu0 %v1537
    %v3796 = vpop.f32.mrf.mxu0
    %v3797 = vadd.f32 %v552, %v3796
    %v3798 = vpop.f32.mrf.mxu0
    %3799 = vmatprep.mubr.f32.mxu0 0.0
    %3800 = vmatmul.mubr.f32.gmra.mxu0 %v1540
    %v3801 = vpop.f32.mrf.mxu0
    %v3802 = vadd.f32 %v552, %v3801
    %v3803 = vpop.f32.mrf.mxu0
    %3804 = vmatprep.mubr.f32.mxu0 0.0
    %3805 = vmatmul.mubr.f32.gmra.mxu0 %v1543
    %v3806 = vpop.f32.mrf.mxu0
    %v3807 = vadd.f32 %v552, %v3806
    %v3808 = vpop.f32.mrf.mxu0
    %3809 = vmatprep.mubr.f32.mxu0 0.0
    %3810 = vmatmul.mubr.f32.gmra.mxu0 %v1546
    %v3811 = vpop.f32.mrf.mxu0
    %v3812 = vadd.f32 %v552, %v3811
    %v3813 = vpop.f32.mrf.mxu0
    %3814 = vmatprep.mubr.f32.mxu0 0.0
    %3815 = vmatmul.mubr.f32.gmra.mxu0 %v1549
    %v3816 = vpop.f32.mrf.mxu0
    %v3817 = vadd.f32 %v552, %v3816
    %v3818 = vpop.f32.mrf.mxu0
    %3819 = vmatprep.mubr.f32.mxu0 0.0
    %3820 = vmatmul.mubr.f32.gmra.mxu0 %v1552
    %v3821 = vpop.f32.mrf.mxu0
    %v3822 = vadd.f32 %v552, %v3821
    %v3823 = vpop.f32.mrf.mxu0
    %3824 = vmatprep.mubr.f32.mxu0 0.0
    %3825 = vmatmul.mubr.f32.gmra.mxu0 %v1555
    %v3826 = vpop.f32.mrf.mxu0
    %v3827 = vadd.f32 %v552, %v3826
    %v3828 = vpop.f32.mrf.mxu0
    %3829 = vmatprep.mubr.f32.mxu0 0.0
    %3830 = vmatmul.mubr.f32.gmra.mxu0 %v1558
    %v3831 = vpop.f32.mrf.mxu0
    %v3832 = vadd.f32 %v552, %v3831
    %v3833 = vpop.f32.mrf.mxu0
    %3834 = vmatprep.mubr.f32.mxu0 0.0
    %3835 = vmatmul.mubr.f32.gmra.mxu0 %v1561
    %v3836 = vpop.f32.mrf.mxu0
    %v3837 = vadd.f32 %v552, %v3836
    %v3838 = vpop.f32.mrf.mxu0
    %3839 = vmatprep.mubr.f32.mxu0 0.0
    %3840 = vmatmul.mubr.f32.gmra.mxu0 %v1564
    %v3841 = vpop.f32.mrf.mxu0
    %v3842 = vadd.f32 %v552, %v3841
    %v3843 = vpop.f32.mrf.mxu0
    %3844 = vmatprep.mubr.f32.mxu0 0.0
    %3845 = vmatmul.mubr.f32.gmra.mxu0 %v1567
    %v3846 = vpop.f32.mrf.mxu0
    %v3847 = vadd.f32 %v552, %v3846
    %v3848 = vpop.f32.mrf.mxu0
    %3849 = vmatprep.mubr.f32.mxu0 0.0
    %3850 = vmatmul.mubr.f32.gmra.mxu0 %v1570
    %v3851 = vpop.f32.mrf.mxu0
    %v3852 = vadd.f32 %v552, %v3851
    %v3853 = vpop.f32.mrf.mxu0
    %3854 = vmatprep.mubr.f32.mxu0 0.0
    %3855 = vmatmul.mubr.f32.gmra.mxu0 %v1573
    %v3856 = vpop.f32.mrf.mxu0
    %v3857 = vadd.f32 %v552, %v3856
    %v3858 = vpop.f32.mrf.mxu0
    %3859 = vmatprep.mubr.f32.mxu0 0.0
    %3860 = vmatmul.mubr.f32.gmra.mxu0 %v1576
    %v3861 = vpop.f32.mrf.mxu0
    %v3862 = vadd.f32 %v552, %v3861
    %v3863 = vpop.f32.mrf.mxu0
    %3864 = vmatprep.mubr.f32.mxu0 0.0
    %3865 = vmatmul.mubr.f32.gmra.mxu0 %v1579
    %v3866 = vpop.f32.mrf.mxu0
    %v3867 = vadd.f32 %v552, %v3866
    %v3868 = vpop.f32.mrf.mxu0
    %3869 = vmatprep.mubr.f32.mxu0 0.0
    %3870 = vmatmul.mubr.f32.gmra.mxu0 %v1582
    %v3871 = vpop.f32.mrf.mxu0
    %v3872 = vadd.f32 %v552, %v3871
    %v3873 = vpop.f32.mrf.mxu0
    %3874 = vmatprep.mubr.f32.mxu0 0.0
    %3875 = vmatmul.mubr.f32.gmra.mxu0 %v1585
    %v3876 = vpop.f32.mrf.mxu0
    %v3877 = vadd.f32 %v552, %v3876
    %v3878 = vpop.f32.mrf.mxu0
    %3879 = vmatprep.mubr.f32.mxu0 0.0
    %3880 = vmatmul.mubr.f32.gmra.mxu0 %v1588
    %v3881 = vpop.f32.mrf.mxu0
    %v3882 = vadd.f32 %v552, %v3881
    %v3883 = vpop.f32.mrf.mxu0
    %3884 = vmatprep.mubr.f32.mxu0 0.0
    %3885 = vmatmul.mubr.f32.gmra.mxu0 %v1591
    %v3886 = vpop.f32.mrf.mxu0
    %v3887 = vadd.f32 %v552, %v3886
    %v3888 = vpop.f32.mrf.mxu0
    %3889 = vmatprep.mubr.f32.mxu0 0.0
    %3890 = vmatmul.mubr.f32.gmra.mxu0 %v1594
    %v3891 = vpop.f32.mrf.mxu0
    %v3892 = vadd.f32 %v552, %v3891
    %v3893 = vpop.f32.mrf.mxu0
    %3894 = vmatprep.mubr.f32.mxu0 0.0
    %3895 = vmatmul.mubr.f32.gmra.mxu0 %v1597
    %v3896 = vpop.f32.mrf.mxu0
    %v3897 = vadd.f32 %v552, %v3896
    %v3898 = vpop.f32.mrf.mxu0
    %3899 = vmatprep.mubr.f32.mxu0 0.0
    %3900 = vmatmul.mubr.f32.gmra.mxu0 %v1600
    %v3901 = vpop.f32.mrf.mxu0
    %v3902 = vadd.f32 %v552, %v3901
    %v3903 = vpop.f32.mrf.mxu0
    %3904 = vmatprep.mubr.f32.mxu0 0.0
    %3905 = vmatmul.mubr.f32.gmra.mxu0 %v1603
    %v3906 = vpop.f32.mrf.mxu0
    %v3907 = vadd.f32 %v552, %v3906
    %v3908 = vpop.f32.mrf.mxu0
    %3909 = vmatprep.mubr.f32.mxu0 0.0
    %3910 = vmatmul.mubr.f32.gmra.mxu0 %v1606
    %v3911 = vpop.f32.mrf.mxu0
    %v3912 = vadd.f32 %v552, %v3911
    %v3913 = vpop.f32.mrf.mxu0
    %3914 = vmatprep.mubr.f32.mxu0 0.0
    %3915 = vmatmul.mubr.f32.gmra.mxu0 %v1609
    %v3916 = vpop.f32.mrf.mxu0
    %v3917 = vadd.f32 %v552, %v3916
    %v3918 = vpop.f32.mrf.mxu0
    %3919 = vmatprep.mubr.f32.mxu0 0.0
    %3920 = vmatmul.mubr.f32.gmra.mxu0 %v1612
    %v3921 = vpop.f32.mrf.mxu0
    %v3922 = vadd.f32 %v552, %v3921
    %v3923 = vpop.f32.mrf.mxu0
    %3924 = vmatprep.mubr.f32.mxu0 0.0
    %3925 = vmatmul.mubr.f32.gmra.mxu0 %v1615
    %v3926 = vpop.f32.mrf.mxu0
    %v3927 = vadd.f32 %v552, %v3926
    %v3928 = vpop.f32.mrf.mxu0
    %3929 = vmatprep.mubr.f32.mxu0 0.0
    %3930 = vmatmul.mubr.f32.gmra.mxu0 %v1618
    %v3931 = vpop.f32.mrf.mxu0
    %v3932 = vadd.f32 %v552, %v3931
    %v3933 = vpop.f32.mrf.mxu0
    %3934 = vmatprep.mubr.f32.mxu0 0.0
    %3935 = vmatmul.mubr.f32.gmra.mxu0 %v1621
    %v3936 = vpop.f32.mrf.mxu0
    %v3937 = vadd.f32 %v552, %v3936
    %v3938 = vpop.f32.mrf.mxu0
    %3939 = vmatprep.mubr.f32.mxu0 0.0
    %3940 = vmatmul.mubr.f32.gmra.mxu0 %v1624
    %v3941 = vpop.f32.mrf.mxu0
    %v3942 = vadd.f32 %v552, %v3941
    %v3943 = vpop.f32.mrf.mxu0
    %3944 = vmatprep.mubr.f32.mxu0 0.0
    %3945 = vmatmul.mubr.f32.gmra.mxu0 %v1627
    %v3946 = vpop.f32.mrf.mxu0
    %v3947 = vadd.f32 %v552, %v3946
    %v3948 = vpop.f32.mrf.mxu0
    %3949 = vmatprep.mubr.f32.mxu0 0.0
    %3950 = vmatmul.mubr.f32.gmra.mxu0 %v1630
    %v3951 = vpop.f32.mrf.mxu0
    %v3952 = vadd.f32 %v552, %v3951
    %v3953 = vpop.f32.mrf.mxu0
    %3954 = vmatprep.mubr.f32.mxu0 0.0
    %3955 = vmatmul.mubr.f32.gmra.mxu0 %v1633
    %v3956 = vpop.f32.mrf.mxu0
    %v3957 = vadd.f32 %v552, %v3956
    %v3958 = vpop.f32.mrf.mxu0
    %3959 = vmatprep.mubr.f32.mxu0 0.0
    %3960 = vmatmul.mubr.f32.gmra.mxu0 %v1636
    %v3961 = vpop.f32.mrf.mxu0
    %v3962 = vadd.f32 %v552, %v3961
    %v3963 = vpop.f32.mrf.mxu0
    %3964 = vmatprep.mubr.f32.mxu0 0.0
    %3965 = vmatmul.mubr.f32.gmra.mxu0 %v1639
    %v3966 = vpop.f32.mrf.mxu0
    %v3967 = vadd.f32 %v552, %v3966
    %v3968 = vpop.f32.mrf.mxu0
    %3969 = vmatprep.mubr.f32.mxu0 0.0
    %3970 = vmatmul.mubr.f32.gmra.mxu0 %v1642
    %v3971 = vpop.f32.mrf.mxu0
    %v3972 = vadd.f32 %v552, %v3971
    %v3973 = vpop.f32.mrf.mxu0
    %3974 = vmatprep.mubr.f32.mxu0 0.0
    %3975 = vmatmul.mubr.f32.gmra.mxu0 %v1645
    %v3976 = vpop.f32.mrf.mxu0
    %v3977 = vadd.f32 %v552, %v3976
    %v3978 = vpop.f32.mrf.mxu0
    %3979 = vmatprep.mubr.f32.mxu0 0.0
    %3980 = vmatmul.mubr.f32.gmra.mxu0 %v1648
    %v3981 = vpop.f32.mrf.mxu0
    %v3982 = vadd.f32 %v552, %v3981
    %v3983 = vpop.f32.mrf.mxu0
    %3984 = vmatprep.mubr.f32.mxu0 0.0
    %3985 = vmatmul.mubr.f32.gmra.mxu0 %v1651
    %v3986 = vpop.f32.mrf.mxu0
    %v3987 = vadd.f32 %v552, %v3986
    %v3988 = vpop.f32.mrf.mxu0
    %3989 = vmatprep.mubr.f32.mxu0 0.0
    %3990 = vmatmul.mubr.f32.gmra.mxu0 %v1654
    %v3991 = vpop.f32.mrf.mxu0
    %v3992 = vadd.f32 %v552, %v3991
    %v3993 = vpop.f32.mrf.mxu0
    %3994 = vmatprep.mubr.f32.mxu0 0.0
    %3995 = vmatmul.mubr.f32.gmra.mxu0 %v1657
    %v3996 = vpop.f32.mrf.mxu0
    %v3997 = vadd.f32 %v552, %v3996
    %v3998 = vpop.f32.mrf.mxu0
    %3999 = vmatprep.mubr.f32.mxu0 0.0
    %4000 = vmatmul.mubr.f32.gmra.mxu0 %v1660
    %v4001 = vpop.f32.mrf.mxu0
    %v4002 = vadd.f32 %v552, %v4001
    %v4003 = vpop.f32.mrf.mxu0
    %4004 = vmatprep.mubr.f32.mxu0 0.0
    %4005 = vmatmul.mubr.f32.gmra.mxu0 %v1663
    %v4006 = vpop.f32.mrf.mxu0
    %v4007 = vadd.f32 %v552, %v4006
    %v4008 = vpop.f32.mrf.mxu0
    %4009 = vmatprep.mubr.f32.mxu0 0.0
    %4010 = vmatmul.mubr.f32.gmra.mxu0 %v1666
    %v4011 = vpop.f32.mrf.mxu0
    %v4012 = vadd.f32 %v552, %v4011
    %v4013 = vpop.f32.mrf.mxu0
    %4014 = vmatprep.mubr.f32.mxu0 0.0
    %4015 = vmatmul.mubr.f32.gmra.mxu0 %v1669
    %v4016 = vpop.f32.mrf.mxu0
    %v4017 = vadd.f32 %v552, %v4016
    %v4018 = vpop.f32.mrf.mxu0
    %4019 = vmatprep.mubr.f32.mxu0 0.0
    %4020 = vmatmul.mubr.f32.gmra.mxu0 %v1672
    %v4021 = vpop.f32.mrf.mxu0
    %v4022 = vadd.f32 %v552, %v4021
    %v4023 = vpop.f32.mrf.mxu0
    %4024 = vmatprep.mubr.f32.mxu0 0.0
    %4025 = vmatmul.mubr.f32.gmra.mxu0 %v1675
    %v4026 = vpop.f32.mrf.mxu0
    %v4027 = vadd.f32 %v552, %v4026
    %v4028 = vpop.f32.mrf.mxu0
    %4029 = vmatprep.mubr.f32.mxu0 0.0
    %4030 = vmatmul.mubr.f32.gmra.mxu0 %v1678
    %v4031 = vpop.f32.mrf.mxu0
    %v4032 = vadd.f32 %v552, %v4031
    %v4033 = vpop.f32.mrf.mxu0
    %4034 = vmatprep.mubr.f32.mxu0 0.0
    %4035 = vmatmul.mubr.f32.gmra.mxu0 %v1681
    %v4036 = vpop.f32.mrf.mxu0
    %v4037 = vadd.f32 %v552, %v4036
    %v4038 = vpop.f32.mrf.mxu0
    %4039 = vmatprep.mubr.f32.mxu0 0.0
    %4040 = vmatmul.mubr.f32.gmra.mxu0 %v1684
    %v4041 = vpop.f32.mrf.mxu0
    %v4042 = vadd.f32 %v552, %v4041
    %v4043 = vpop.f32.mrf.mxu0
    %4044 = vmatprep.mubr.f32.mxu0 0.0
    %4045 = vmatmul.mubr.f32.gmra.mxu0 %v1687
    %v4046 = vpop.f32.mrf.mxu0
    %v4047 = vadd.f32 %v552, %v4046
    %v4048 = vpop.f32.mrf.mxu0
    %4049 = vmatprep.mubr.f32.mxu0 0.0
    %4050 = vmatmul.mubr.f32.gmra.mxu0 %v1690
    %v4051 = vpop.f32.mrf.mxu0
    %v4052 = vadd.f32 %v552, %v4051
    %v4053 = vpop.f32.mrf.mxu0
    %4054 = vmatprep.mubr.f32.mxu0 0.0
    %4055 = vmatmul.mubr.f32.gmra.mxu0 %v1693
    %v4056 = vpop.f32.mrf.mxu0
    %v4057 = vadd.f32 %v552, %v4056
    %v4058 = vpop.f32.mrf.mxu0
    %4059 = vmatprep.mubr.f32.mxu0 0.0
    %4060 = vmatmul.mubr.f32.gmra.mxu0 %v1696
    %v4061 = vpop.f32.mrf.mxu0
    %v4062 = vadd.f32 %v552, %v4061
    %v4063 = vpop.f32.mrf.mxu0
    %4064 = vmatprep.mubr.f32.mxu0 0.0
    %4065 = vmatmul.mubr.f32.gmra.mxu0 %v1699
    %v4066 = vpop.f32.mrf.mxu0
    %v4067 = vadd.f32 %v552, %v4066
    %v4068 = vpop.f32.mrf.mxu0
    %4069 = vmatprep.mubr.f32.mxu0 0.0
    %4070 = vmatmul.mubr.f32.gmra.mxu0 %v1702
    %v4071 = vpop.f32.mrf.mxu0
    %v4072 = vadd.f32 %v552, %v4071
    %v4073 = vpop.f32.mrf.mxu0
    %4074 = vmatprep.mubr.f32.mxu0 0.0
    %4075 = vmatmul.mubr.f32.gmra.mxu0 %v1705
    %v4076 = vpop.f32.mrf.mxu0
    %v4077 = vadd.f32 %v552, %v4076
    %v4078 = vpop.f32.mrf.mxu0
    %4079 = vmatprep.mubr.f32.mxu0 0.0
    %4080 = vmatmul.mubr.f32.gmra.mxu0 %v1708
    %v4081 = vpop.f32.mrf.mxu0
    %v4082 = vadd.f32 %v552, %v4081
    %v4083 = vpop.f32.mrf.mxu0
    %4084 = vmatprep.mubr.f32.mxu0 0.0
    %4085 = vmatmul.mubr.f32.gmra.mxu0 %v1711
    %v4086 = vpop.f32.mrf.mxu0
    %v4087 = vadd.f32 %v552, %v4086
    %v4088 = vpop.f32.mrf.mxu0
    %4089 = vmatprep.mubr.f32.mxu0 0.0
    %4090 = vmatmul.mubr.f32.gmra.mxu0 %v1714
    %v4091 = vpop.f32.mrf.mxu0
    %v4092 = vadd.f32 %v552, %v4091
    %v4093 = vpop.f32.mrf.mxu0
    %4094 = vmatprep.mubr.f32.mxu0 0.0
    %4095 = vmatmul.mubr.f32.gmra.mxu0 %v1717
    %v4096 = vpop.f32.mrf.mxu0
    %v4097 = vadd.f32 %v552, %v4096
    %v4098 = vpop.f32.mrf.mxu0
    %4099 = vmatprep.mubr.f32.mxu0 0.0
    %4100 = vmatmul.mubr.f32.gmra.mxu0 %v1720
    %v4101 = vpop.f32.mrf.mxu0
    %v4102 = vadd.f32 %v552, %v4101
    %v4103 = vpop.f32.mrf.mxu0
    %4104 = vmatprep.mubr.f32.mxu0 0.0
    %4105 = vmatmul.mubr.f32.gmra.mxu0 %v1723
    %v4106 = vpop.f32.mrf.mxu0
    %v4107 = vadd.f32 %v552, %v4106
    %v4108 = vpop.f32.mrf.mxu0
    %4109 = vmatprep.mubr.f32.mxu0 0.0
    %4110 = vmatmul.mubr.f32.gmra.mxu0 %v1726
    %v4111 = vpop.f32.mrf.mxu0
    %v4112 = vadd.f32 %v552, %v4111
    %v4113 = vpop.f32.mrf.mxu0
    %4114 = vmatprep.mubr.f32.mxu0 0.0
    %4115 = vmatmul.mubr.f32.gmra.mxu0 %v1729
    %v4116 = vpop.f32.mrf.mxu0
    %v4117 = vadd.f32 %v552, %v4116
    %v4118 = vpop.f32.mrf.mxu0
    %4119 = vmatprep.mubr.f32.mxu0 0.0
    %4120 = vmatmul.mubr.f32.gmra.mxu0 %v1732
    %v4121 = vpop.f32.mrf.mxu0
    %v4122 = vadd.f32 %v552, %v4121
    %v4123 = vpop.f32.mrf.mxu0
    %4124 = vmatprep.mubr.f32.mxu0 0.0
    %4125 = vmatmul.mubr.f32.gmra.mxu0 %v1735
    %v4126 = vpop.f32.mrf.mxu0
    %v4127 = vadd.f32 %v552, %v4126
    %v4128 = vpop.f32.mrf.mxu0
    %4129 = vmatprep.mubr.f32.mxu0 0.0
    %4130 = vmatmul.mubr.f32.gmra.mxu0 %v1738
    %v4131 = vpop.f32.mrf.mxu0
    %v4132 = vadd.f32 %v552, %v4131
    %v4133 = vpop.f32.mrf.mxu0
    %4134 = vmatprep.mubr.f32.mxu0 0.0
    %4135 = vmatmul.mubr.f32.gmra.mxu0 %v1741
    %v4136 = vpop.f32.mrf.mxu0
    %v4137 = vadd.f32 %v552, %v4136
    %v4138 = vpop.f32.mrf.mxu0
    %4139 = vmatprep.mubr.f32.mxu0 0.0
    %4140 = vmatmul.mubr.f32.gmra.mxu0 %v1744
    %v4141 = vpop.f32.mrf.mxu0
    %v4142 = vadd.f32 %v552, %v4141
    %v4143 = vpop.f32.mrf.mxu0
    %4144 = vmatprep.mubr.f32.mxu0 0.0
    %4145 = vmatmul.mubr.f32.gmra.mxu0 %v1747
    %v4146 = vpop.f32.mrf.mxu0
    %v4147 = vadd.f32 %v552, %v4146
    %v4148 = vpop.f32.mrf.mxu0
    %4149 = vmatprep.mubr.f32.mxu0 0.0
    %4150 = vmatmul.mubr.f32.gmra.mxu0 %v1750
    %v4151 = vpop.f32.mrf.mxu0
    %v4152 = vadd.f32 %v552, %v4151
    %v4153 = vpop.f32.mrf.mxu0
    %4154 = vmatprep.mubr.f32.mxu0 0.0
    %4155 = vmatmul.mubr.f32.gmra.mxu0 %v1753
    %v4156 = vpop.f32.mrf.mxu0
    %v4157 = vadd.f32 %v552, %v4156
    %v4158 = vpop.f32.mrf.mxu0
    %4159 = vmatprep.mubr.f32.mxu0 0.0
    %4160 = vmatmul.mubr.f32.gmra.mxu0 %v1756
    %v4161 = vpop.f32.mrf.mxu0
    %v4162 = vadd.f32 %v552, %v4161
    %v4163 = vpop.f32.mrf.mxu0
    %4164 = vmatprep.mubr.f32.mxu0 0.0
    %4165 = vmatmul.mubr.f32.gmra.mxu0 %v1759
    %v4166 = vpop.f32.mrf.mxu0
    %v4167 = vadd.f32 %v552, %v4166
    %v4168 = vpop.f32.mrf.mxu0
    %4169 = vmatprep.mubr.f32.mxu0 0.0
    %4170 = vmatmul.mubr.f32.gmra.mxu0 %v1762
    %v4171 = vpop.f32.mrf.mxu0
    %v4172 = vadd.f32 %v552, %v4171
    %v4173 = vpop.f32.mrf.mxu0
    %4174 = vmatprep.mubr.f32.mxu0 0.0
    %4175 = vmatmul.mubr.f32.gmra.mxu0 %v1765
    %v4176 = vpop.f32.mrf.mxu0
    %v4177 = vadd.f32 %v552, %v4176
    %v4178 = vpop.f32.mrf.mxu0
    %4179 = vmatprep.mubr.f32.mxu0 0.0
    %4180 = vmatmul.mubr.f32.gmra.mxu0 %v1768
    %v4181 = vpop.f32.mrf.mxu0
    %v4182 = vadd.f32 %v552, %v4181
    %v4183 = vpop.f32.mrf.mxu0
    %4184 = vmatprep.mubr.f32.mxu0 0.0
    %4185 = vmatmul.mubr.f32.gmra.mxu0 %v1771
    %v4186 = vpop.f32.mrf.mxu0
    %v4187 = vadd.f32 %v552, %v4186
    %v4188 = vpop.f32.mrf.mxu0
    %4189 = vmatprep.mubr.f32.mxu0 0.0
    %4190 = vmatmul.mubr.f32.gmra.mxu0 %v1774
    %v4191 = vpop.f32.mrf.mxu0
    %v4192 = vadd.f32 %v552, %v4191
    %v4193 = vpop.f32.mrf.mxu0
    %4194 = vmatprep.mubr.f32.mxu0 0.0
    %4195 = vmatmul.mubr.f32.gmra.mxu0 %v1777
    %v4196 = vpop.f32.mrf.mxu0
    %v4197 = vadd.f32 %v552, %v4196
    %v4198 = vpop.f32.mrf.mxu0
    %4199 = vmatprep.mubr.f32.mxu0 0.0
    %4200 = vmatmul.mubr.f32.gmra.mxu0 %v1780
    %v4201 = vpop.f32.mrf.mxu0
    %v4202 = vadd.f32 %v552, %v4201
    %v4203 = vpop.f32.mrf.mxu0
    %4204 = vmatprep.mubr.f32.mxu0 0.0
    %4205 = vmatmul.mubr.f32.gmra.mxu0 %v1783
    %v4206 = vpop.f32.mrf.mxu0
    %v4207 = vadd.f32 %v552, %v4206
    %v4208 = vpop.f32.mrf.mxu0
    %4209 = vmatprep.mubr.f32.mxu0 0.0
    %4210 = vmatmul.mubr.f32.gmra.mxu0 %v1786
    %v4211 = vpop.f32.mrf.mxu0
    %v4212 = vadd.f32 %v552, %v4211
    %v4213 = vpop.f32.mrf.mxu0
    %4214 = vmatprep.mubr.f32.mxu0 0.0
    %4215 = vmatmul.mubr.f32.gmra.mxu0 %v1789
    %v4216 = vpop.f32.mrf.mxu0
    %v4217 = vadd.f32 %v552, %v4216
    %v4218 = vpop.f32.mrf.mxu0
    %4219 = vmatprep.mubr.f32.mxu0 0.0
    %4220 = vmatmul.mubr.f32.gmra.mxu0 %v1792
    %v4221 = vpop.f32.mrf.mxu0
    %v4222 = vadd.f32 %v552, %v4221
    %v4223 = vpop.f32.mrf.mxu0
    %4224 = vmatprep.mubr.f32.mxu0 0.0
    %4225 = vmatmul.mubr.f32.gmra.mxu0 %v1795
    %v4226 = vpop.f32.mrf.mxu0
    %v4227 = vadd.f32 %v552, %v4226
    %v4228 = vpop.f32.mrf.mxu0
    %4229 = vmatprep.mubr.f32.mxu0 0.0
    %4230 = vmatmul.mubr.f32.gmra.mxu0 %v1798
    %v4231 = vpop.f32.mrf.mxu0
    %v4232 = vadd.f32 %v552, %v4231
    %v4233 = vpop.f32.mrf.mxu0
    %4234 = vmatprep.mubr.f32.mxu0 0.0
    %4235 = vmatmul.mubr.f32.gmra.mxu0 %v1801
    %v4236 = vpop.f32.mrf.mxu0
    %v4237 = vadd.f32 %v552, %v4236
    %v4238 = vpop.f32.mrf.mxu0
    %4239 = vmatprep.mubr.f32.mxu0 0.0
    %4240 = vmatmul.mubr.f32.gmra.mxu0 %v1804
    %v4241 = vpop.f32.mrf.mxu0
    %v4242 = vadd.f32 %v552, %v4241
    %v4243 = vpop.f32.mrf.mxu0
    %4244 = vmatprep.mubr.f32.mxu0 0.0
    %4245 = vmatmul.mubr.f32.gmra.mxu0 %v1807
    %v4246 = vpop.f32.mrf.mxu0
    %v4247 = vadd.f32 %v552, %v4246
    %v4248 = vpop.f32.mrf.mxu0
    %4249 = vmatprep.mubr.f32.mxu0 0.0
    %4250 = vmatmul.mubr.f32.gmra.mxu0 %v1810
    %v4251 = vpop.f32.mrf.mxu0
    %v4252 = vadd.f32 %v552, %v4251
    %v4253 = vpop.f32.mrf.mxu0
    %4254 = vmatprep.mubr.f32.mxu0 0.0
    %4255 = vmatmul.mubr.f32.gmra.mxu0 %v1813
    %v4256 = vpop.f32.mrf.mxu0
    %v4257 = vadd.f32 %v552, %v4256
    %v4258 = vpop.f32.mrf.mxu0
    %4259 = vmatprep.mubr.f32.mxu0 0.0
    %4260 = vmatmul.mubr.f32.gmra.mxu0 %v1816
    %v4261 = vpop.f32.mrf.mxu0
    %v4262 = vadd.f32 %v552, %v4261
    %v4263 = vpop.f32.mrf.mxu0
    %4264 = vmatprep.mubr.f32.mxu0 0.0
    %4265 = vmatmul.mubr.f32.gmra.mxu0 %v1819
    %v4266 = vpop.f32.mrf.mxu0
    %v4267 = vadd.f32 %v552, %v4266
    %v4268 = vpop.f32.mrf.mxu0
    %4269 = vmatprep.mubr.f32.mxu0 0.0
    %4270 = vmatmul.mubr.f32.gmra.mxu0 %v1822
    %v4271 = vpop.f32.mrf.mxu0
    %v4272 = vadd.f32 %v552, %v4271
    %v4273 = vpop.f32.mrf.mxu0
    %4274 = vmatprep.mubr.f32.mxu0 0.0
    %4275 = vmatmul.mubr.f32.gmra.mxu0 %v1825
    %v4276 = vpop.f32.mrf.mxu0
    %v4277 = vadd.f32 %v552, %v4276
    %v4278 = vpop.f32.mrf.mxu0
    %4279 = vmatprep.mubr.f32.mxu0 0.0
    %4280 = vmatmul.mubr.f32.gmra.mxu0 %v1828
    %v4281 = vpop.f32.mrf.mxu0
    %v4282 = vadd.f32 %v552, %v4281
    %v4283 = vpop.f32.mrf.mxu0
    %4284 = vmatprep.mubr.f32.mxu0 0.0
    %4285 = vmatmul.mubr.f32.gmra.mxu0 %v1831
    %v4286 = vpop.f32.mrf.mxu0
    %v4287 = vadd.f32 %v552, %v4286
    %v4288 = vpop.f32.mrf.mxu0
    %4289 = vmatprep.mubr.f32.mxu0 0.0
    %4290 = vmatmul.mubr.f32.gmra.mxu0 %v1834
    %v4291 = vpop.f32.mrf.mxu0
    %v4292 = vadd.f32 %v552, %v4291
    %v4293 = vpop.f32.mrf.mxu0
    %4294 = vmatprep.mubr.f32.mxu0 0.0
    %4295 = vmatmul.mubr.f32.gmra.mxu0 %v1837
    %v4296 = vpop.f32.mrf.mxu0
    %v4297 = vadd.f32 %v552, %v4296
    %v4298 = vpop.f32.mrf.mxu0
    %4299 = vmatprep.mubr.f32.mxu0 0.0
    %4300 = vmatmul.mubr.f32.gmra.mxu0 %v1840
    %v4301 = vpop.f32.mrf.mxu0
    %v4302 = vadd.f32 %v552, %v4301
    %v4303 = vpop.f32.mrf.mxu0
    %4304 = vmatprep.mubr.f32.mxu0 0.0
    %4305 = vmatmul.mubr.f32.gmra.mxu0 %v1843
    %v4306 = vpop.f32.mrf.mxu0
    %v4307 = vadd.f32 %v552, %v4306
    %v4308 = vpop.f32.mrf.mxu0
    %4309 = vmatprep.mubr.f32.mxu0 0.0
    %4310 = vmatmul.mubr.f32.gmra.mxu0 %v1846
    %v4311 = vpop.f32.mrf.mxu0
    %v4312 = vadd.f32 %v552, %v4311
    %v4313 = vpop.f32.mrf.mxu0
    %4314 = vmatprep.mubr.f32.mxu0 0.0
    %4315 = vmatmul.mubr.f32.gmra.mxu0 %v1849
    %v4316 = vpop.f32.mrf.mxu0
    %v4317 = vadd.f32 %v552, %v4316
    %v4318 = vpop.f32.mrf.mxu0
    %4319 = vmatprep.mubr.f32.mxu0 0.0
    %4320 = vmatmul.mubr.f32.gmra.mxu0 %v1852
    %v4321 = vpop.f32.mrf.mxu0
    %v4322 = vadd.f32 %v552, %v4321
    %v4323 = vpop.f32.mrf.mxu0
    %4324 = vmatprep.mubr.f32.mxu0 0.0
    %4325 = vmatmul.mubr.f32.gmra.mxu0 %v1855
    %v4326 = vpop.f32.mrf.mxu0
    %v4327 = vadd.f32 %v552, %v4326
    %v4328 = vpop.f32.mrf.mxu0
    %4329 = vmatprep.mubr.f32.mxu0 0.0
    %4330 = vmatmul.mubr.f32.gmra.mxu0 %v1858
    %v4331 = vpop.f32.mrf.mxu0
    %v4332 = vadd.f32 %v552, %v4331
    %v4333 = vpop.f32.mrf.mxu0
    %4334 = vmatprep.mubr.f32.mxu0 0.0
    %4335 = vmatmul.mubr.f32.gmra.mxu0 %v1861
    %v4336 = vpop.f32.mrf.mxu0
    %v4337 = vadd.f32 %v552, %v4336
    %v4338 = vpop.f32.mrf.mxu0
    %4339 = vmatprep.mubr.f32.mxu0 0.0
    %4340 = vmatmul.mubr.f32.gmra.mxu0 %v1864
    %v4341 = vpop.f32.mrf.mxu0
    %v4342 = vadd.f32 %v552, %v4341
    %v4343 = vpop.f32.mrf.mxu0
    %4344 = vmatprep.mubr.f32.mxu0 0.0
    %4345 = vmatmul.mubr.f32.gmra.mxu0 %v1867
    %v4346 = vpop.f32.mrf.mxu0
    %v4347 = vadd.f32 %v552, %v4346
    %v4348 = vpop.f32.mrf.mxu0
    %4349 = vmatprep.mubr.f32.mxu0 0.0
    %4350 = vmatmul.mubr.f32.gmra.mxu0 %v1870
    %v4351 = vpop.f32.mrf.mxu0
    %v4352 = vadd.f32 %v552, %v4351
    %v4353 = vpop.f32.mrf.mxu0
    %4354 = vmatprep.mubr.f32.mxu0 0.0
    %4355 = vmatmul.mubr.f32.gmra.mxu0 %v1873
    %v4356 = vpop.f32.mrf.mxu0
    %v4357 = vadd.f32 %v552, %v4356
    %v4358 = vpop.f32.mrf.mxu0
    %4359 = vmatprep.mubr.f32.mxu0 0.0
    %4360 = vmatmul.mubr.f32.gmra.mxu0 %v1876
    %v4361 = vpop.f32.mrf.mxu0
    %v4362 = vadd.f32 %v552, %v4361
    %v4363 = vpop.f32.mrf.mxu0
    %4364 = vmatprep.mubr.f32.mxu0 0.0
    %4365 = vmatmul.mubr.f32.gmra.mxu0 %v1879
    %v4366 = vpop.f32.mrf.mxu0
    %v4367 = vadd.f32 %v552, %v4366
    %v4368 = vpop.f32.mrf.mxu0
    %4369 = vmatprep.mubr.f32.mxu0 0.0
    %4370 = vmatmul.mubr.f32.gmra.mxu0 %v1882
    %v4371 = vpop.f32.mrf.mxu0
    %v4372 = vadd.f32 %v552, %v4371
    %v4373 = vpop.f32.mrf.mxu0
    %4374 = vmatprep.mubr.f32.mxu0 0.0
    %4375 = vmatmul.mubr.f32.gmra.mxu0 %v1885
    %v4376 = vpop.f32.mrf.mxu0
    %v4377 = vadd.f32 %v552, %v4376
    %v4378 = vpop.f32.mrf.mxu0
    %4379 = vmatprep.mubr.f32.mxu0 0.0
    %4380 = vmatmul.mubr.f32.gmra.mxu0 %v1888
    %v4381 = vpop.f32.mrf.mxu0
    %v4382 = vadd.f32 %v552, %v4381
    %v4383 = vpop.f32.mrf.mxu0
    %4384 = vmatprep.mubr.f32.mxu0 0.0
    %4385 = vmatmul.mubr.f32.gmra.mxu0 %v1891
    %v4386 = vpop.f32.mrf.mxu0
    %v4387 = vadd.f32 %v552, %v4386
    %v4388 = vpop.f32.mrf.mxu0
    %4389 = vmatprep.mubr.f32.mxu0 0.0
    %4390 = vmatmul.mubr.f32.gmra.mxu0 %v1894
    %v4391 = vpop.f32.mrf.mxu0
    %v4392 = vadd.f32 %v552, %v4391
    %v4393 = vpop.f32.mrf.mxu0
    %4394 = vmatprep.mubr.f32.mxu0 0.0
    %4395 = vmatmul.mubr.f32.gmra.mxu0 %v1897
    %v4396 = vpop.f32.mrf.mxu0
    %v4397 = vadd.f32 %v552, %v4396
    %v4398 = vpop.f32.mrf.mxu0
    %4399 = vmatprep.mubr.f32.mxu0 0.0
    %4400 = vmatmul.mubr.f32.gmra.mxu0 %v1900
    %v4401 = vpop.f32.mrf.mxu0
    %v4402 = vadd.f32 %v552, %v4401
    %v4403 = vpop.f32.mrf.mxu0
    %4404 = vmatprep.mubr.f32.mxu0 0.0
    %4405 = vmatmul.mubr.f32.gmra.mxu0 %v1903
    %v4406 = vpop.f32.mrf.mxu0
    %v4407 = vadd.f32 %v552, %v4406
    %v4408 = vpop.f32.mrf.mxu0
    %4409 = vmatprep.mubr.f32.mxu0 0.0
    %4410 = vmatmul.mubr.f32.gmra.mxu0 %v1906
    %v4411 = vpop.f32.mrf.mxu0
    %v4412 = vadd.f32 %v552, %v4411
    %v4413 = vpop.f32.mrf.mxu0
    %4414 = vmatprep.mubr.f32.mxu0 0.0
    %4415 = vmatmul.mubr.f32.gmra.mxu0 %v1909
    %v4416 = vpop.f32.mrf.mxu0
    %v4417 = vadd.f32 %v552, %v4416
    %v4418 = vpop.f32.mrf.mxu0
    %4419 = vmatprep.mubr.f32.mxu0 0.0
    %4420 = vmatmul.mubr.f32.gmra.mxu0 %v1912
    %v4421 = vpop.f32.mrf.mxu0
    %v4422 = vadd.f32 %v552, %v4421
    %v4423 = vpop.f32.mrf.mxu0
    %4424 = vmatprep.mubr.f32.mxu0 0.0
    %4425 = vmatmul.mubr.f32.gmra.mxu0 %v1915
    %v4426 = vpop.f32.mrf.mxu0
    %v4427 = vadd.f32 %v552, %v4426
    %v4428 = vpop.f32.mrf.mxu0
    %4429 = vmatprep.mubr.f32.mxu0 0.0
    %4430 = vmatmul.mubr.f32.gmra.mxu0 %v1918
    %v4431 = vpop.f32.mrf.mxu0
    %v4432 = vadd.f32 %v552, %v4431
    %v4433 = vpop.f32.mrf.mxu0
    %4434 = vmatprep.mubr.f32.mxu0 0.0
    %4435 = vmatmul.mubr.f32.gmra.mxu0 %v1921
    %v4436 = vpop.f32.mrf.mxu0
    %v4437 = vadd.f32 %v552, %v4436
    %v4438 = vpop.f32.mrf.mxu0
    %4439 = vmatprep.mubr.f32.mxu0 0.0
    %4440 = vmatmul.mubr.f32.gmra.mxu0 %v1924
    %v4441 = vpop.f32.mrf.mxu0
    %v4442 = vadd.f32 %v552, %v4441
    %v4443 = vpop.f32.mrf.mxu0
    %4444 = vmatprep.mubr.f32.mxu0 0.0
    %4445 = vmatmul.mubr.f32.gmra.mxu0 %v1927
    %v4446 = vpop.f32.mrf.mxu0
    %v4447 = vadd.f32 %v552, %v4446
    %v4448 = vpop.f32.mrf.mxu0
    %4449 = vmatprep.mubr.f32.mxu0 0.0
    %4450 = vmatmul.mubr.f32.gmra.mxu0 %v1930
    %v4451 = vpop.f32.mrf.mxu0
    %v4452 = vadd.f32 %v552, %v4451
    %v4453 = vpop.f32.mrf.mxu0
    %4454 = vmatprep.mubr.f32.mxu0 0.0
    %4455 = vmatmul.mubr.f32.gmra.mxu0 %v1933
    %v4456 = vpop.f32.mrf.mxu0
    %v4457 = vadd.f32 %v552, %v4456
    %v4458 = vpop.f32.mrf.mxu0
    %4459 = vmatprep.mubr.f32.mxu0 0.0
    %4460 = vmatmul.mubr.f32.gmra.mxu0 %v1936
    %v4461 = vpop.f32.mrf.mxu0
    %v4462 = vadd.f32 %v552, %v4461
    %v4463 = vpop.f32.mrf.mxu0
    %4464 = vmatprep.mubr.f32.mxu0 0.0
    %4465 = vmatmul.mubr.f32.gmra.mxu0 %v1939
    %v4466 = vpop.f32.mrf.mxu0
    %v4467 = vadd.f32 %v552, %v4466
    %v4468 = vpop.f32.mrf.mxu0
    %4469 = vmatprep.mubr.f32.mxu0 0.0
    %4470 = vmatmul.mubr.f32.gmra.mxu0 %v1942
    %v4471 = vpop.f32.mrf.mxu0
    %v4472 = vadd.f32 %v552, %v4471
    %v4473 = vpop.f32.mrf.mxu0
    %4474 = vmatprep.mubr.f32.mxu0 0.0
    %4475 = vmatmul.mubr.f32.gmra.mxu0 %v1945
    %v4476 = vpop.f32.mrf.mxu0
    %v4477 = vadd.f32 %v552, %v4476
    %v4478 = vpop.f32.mrf.mxu0
    %4479 = vmatprep.mubr.f32.mxu0 0.0
    %4480 = vmatmul.mubr.f32.gmra.mxu0 %v1948
    %v4481 = vpop.f32.mrf.mxu0
    %v4482 = vadd.f32 %v552, %v4481
    %v4483 = vpop.f32.mrf.mxu0
    %4484 = vmatprep.mubr.f32.mxu0 0.0
    %4485 = vmatmul.mubr.f32.gmra.mxu0 %v1951
    %v4486 = vpop.f32.mrf.mxu0
    %v4487 = vadd.f32 %v552, %v4486
    %v4488 = vpop.f32.mrf.mxu0
    %4489 = vmatprep.mubr.f32.mxu0 0.0
    %4490 = vmatmul.mubr.f32.gmra.mxu0 %v1954
    %v4491 = vpop.f32.mrf.mxu0
    %v4492 = vadd.f32 %v552, %v4491
    %v4493 = vpop.f32.mrf.mxu0
    %4494 = vmatprep.mubr.f32.mxu0 0.0
    %4495 = vmatmul.mubr.f32.gmra.mxu0 %v1957
    %v4496 = vpop.f32.mrf.mxu0
    %v4497 = vadd.f32 %v552, %v4496
    %v4498 = vpop.f32.mrf.mxu0
    %4499 = vmatprep.mubr.f32.mxu0 0.0
    %4500 = vmatmul.mubr.f32.gmra.mxu0 %v1960
    %v4501 = vpop.f32.mrf.mxu0
    %v4502 = vadd.f32 %v552, %v4501
    %v4503 = vpop.f32.mrf.mxu0
    %4504 = vmatprep.mubr.f32.mxu0 0.0
    %4505 = vmatmul.mubr.f32.gmra.mxu0 %v1963
    %v4506 = vpop.f32.mrf.mxu0
    %v4507 = vadd.f32 %v552, %v4506
    %v4508 = vpop.f32.mrf.mxu0
    %4509 = vmatprep.mubr.f32.mxu0 0.0
    %4510 = vmatmul.mubr.f32.gmra.mxu0 %v1966
    %v4511 = vpop.f32.mrf.mxu0
    %v4512 = vadd.f32 %v552, %v4511
    %v4513 = vpop.f32.mrf.mxu0
    %4514 = vmatprep.mubr.f32.mxu0 0.0
    %4515 = vmatmul.mubr.f32.gmra.mxu0 %v1969
    %v4516 = vpop.f32.mrf.mxu0
    %v4517 = vadd.f32 %v552, %v4516
    %v4518 = vpop.f32.mrf.mxu0
    %4519 = vmatprep.mubr.f32.mxu0 0.0
    %4520 = vmatmul.mubr.f32.gmra.mxu0 %v1972
    %v4521 = vpop.f32.mrf.mxu0
    %v4522 = vadd.f32 %v552, %v4521
    %v4523 = vpop.f32.mrf.mxu0
    %4524 = vmatprep.mubr.f32.mxu0 0.0
    %4525 = vmatmul.mubr.f32.gmra.mxu0 %v1975
    %v4526 = vpop.f32.mrf.mxu0
    %v4527 = vadd.f32 %v552, %v4526
    %v4528 = vpop.f32.mrf.mxu0
    %4529 = vmatprep.mubr.f32.mxu0 0.0
    %4530 = vmatmul.mubr.f32.gmra.mxu0 %v1978
    %v4531 = vpop.f32.mrf.mxu0
    %v4532 = vadd.f32 %v552, %v4531
    %v4533 = vpop.f32.mrf.mxu0
    %4534 = vmatprep.mubr.f32.mxu0 0.0
    %4535 = vmatmul.mubr.f32.gmra.mxu0 %v1981
    %v4536 = vpop.f32.mrf.mxu0
    %v4537 = vadd.f32 %v552, %v4536
    %v4538 = vpop.f32.mrf.mxu0
    %4539 = vmatprep.mubr.f32.mxu0 0.0
    %4540 = vmatmul.mubr.f32.gmra.mxu0 %v1984
    %v4541 = vpop.f32.mrf.mxu0
    %v4542 = vadd.f32 %v552, %v4541
    %v4543 = vpop.f32.mrf.mxu0
    %4544 = vmatprep.mubr.f32.mxu0 0.0
    %4545 = vmatmul.mubr.f32.gmra.mxu0 %v1987
    %v4546 = vpop.f32.mrf.mxu0
    %v4547 = vadd.f32 %v552, %v4546
    %v4548 = vpop.f32.mrf.mxu0
    %4549 = vmatprep.mubr.f32.mxu0 0.0
    %4550 = vmatmul.mubr.f32.gmra.mxu0 %v1990
    %v4551 = vpop.f32.mrf.mxu0
    %v4552 = vadd.f32 %v552, %v4551
    %v4553 = vpop.f32.mrf.mxu0
    %4554 = vmatprep.mubr.f32.mxu0 0.0
    %4555 = vmatmul.mubr.f32.gmra.mxu0 %v1993
    %v4556 = vpop.f32.mrf.mxu0
    %v4557 = vadd.f32 %v552, %v4556
    %v4558 = vpop.f32.mrf.mxu0
    %4559 = vmatprep.mubr.f32.mxu0 0.0
    %4560 = vmatmul.mubr.f32.gmra.mxu0 %v1996
    %v4561 = vpop.f32.mrf.mxu0
    %v4562 = vadd.f32 %v552, %v4561
    %v4563 = vpop.f32.mrf.mxu0
    %4564 = vmatprep.mubr.f32.mxu0 0.0
    %4565 = vmatmul.mubr.f32.gmra.mxu0 %v1999
    %v4566 = vpop.f32.mrf.mxu0
    %v4567 = vadd.f32 %v552, %v4566
    %v4568 = vpop.f32.mrf.mxu0
    %4569 = vmatprep.mubr.f32.mxu0 0.0
    %4570 = vmatmul.mubr.f32.gmra.mxu0 %v2002
    %v4571 = vpop.f32.mrf.mxu0
    %v4572 = vadd.f32 %v552, %v4571
    %v4573 = vpop.f32.mrf.mxu0
    %4574 = vmatprep.mubr.f32.mxu0 0.0
    %4575 = vmatmul.mubr.f32.gmra.mxu0 %v2005
    %v4576 = vpop.f32.mrf.mxu0
    %v4577 = vadd.f32 %v552, %v4576
    %v4578 = vpop.f32.mrf.mxu0
    %4579 = vmatprep.mubr.f32.mxu0 0.0
    %4580 = vmatmul.mubr.f32.gmra.mxu0 %v2008
    %v4581 = vpop.f32.mrf.mxu0
    %v4582 = vadd.f32 %v552, %v4581
    %v4583 = vpop.f32.mrf.mxu0
    %4584 = vmatprep.mubr.f32.mxu0 0.0
    %4585 = vmatmul.mubr.f32.gmra.mxu0 %v2011
    %v4586 = vpop.f32.mrf.mxu0
    %v4587 = vadd.f32 %v552, %v4586
    %v4588 = vpop.f32.mrf.mxu0
    %4589 = vmatprep.mubr.f32.mxu0 0.0
    %4590 = vmatmul.mubr.f32.gmra.mxu0 %v2014
    %v4591 = vpop.f32.mrf.mxu0
    %v4592 = vadd.f32 %v552, %v4591
    %v4593 = vpop.f32.mrf.mxu0
    %4594 = vmatprep.mubr.f32.mxu0 0.0
    %4595 = vmatmul.mubr.f32.gmra.mxu0 %v2017
    %v4596 = vpop.f32.mrf.mxu0
    %v4597 = vadd.f32 %v552, %v4596
    %v4598 = vpop.f32.mrf.mxu0
    %4599 = vmatprep.mubr.f32.mxu0 0.0
    %4600 = vmatmul.mubr.f32.gmra.mxu0 %v2020
    %v4601 = vpop.f32.mrf.mxu0
    %v4602 = vadd.f32 %v552, %v4601
    %v4603 = vpop.f32.mrf.mxu0
    %4604 = vmatprep.mubr.f32.mxu0 0.0
    %4605 = vmatmul.mubr.f32.gmra.mxu0 %v2023
    %v4606 = vpop.f32.mrf.mxu0
    %v4607 = vadd.f32 %v552, %v4606
    %v4608 = vpop.f32.mrf.mxu0
    %4609 = vmatprep.mubr.f32.mxu0 0.0
    %4610 = vmatmul.mubr.f32.gmra.mxu0 %v2026
    %v4611 = vpop.f32.mrf.mxu0
    %v4612 = vadd.f32 %v552, %v4611
    %v4613 = vpop.f32.mrf.mxu0
    %4614 = vmatprep.mubr.f32.mxu0 0.0
    %4615 = vmatmul.mubr.f32.gmra.mxu0 %v2029
    %v4616 = vpop.f32.mrf.mxu0
    %v4617 = vadd.f32 %v552, %v4616
    %v4618 = vpop.f32.mrf.mxu0
    %4619 = vmatprep.mubr.f32.mxu0 0.0
    %4620 = vmatmul.mubr.f32.gmra.mxu0 %v2032
    %v4621 = vpop.f32.mrf.mxu0
    %v4622 = vadd.f32 %v552, %v4621
    %v4623 = vpop.f32.mrf.mxu0
    %4624 = vmatprep.mubr.f32.mxu0 0.0
    %4625 = vmatmul.mubr.f32.gmra.mxu0 %v2035
    %v4626 = vpop.f32.mrf.mxu0
    %v4627 = vadd.f32 %v552, %v4626
    %v4628 = vpop.f32.mrf.mxu0
    %4629 = vmatprep.mubr.f32.mxu0 0.0
    %4630 = vmatmul.mubr.f32.gmra.mxu0 %v2038
    %v4631 = vpop.f32.mrf.mxu0
    %v4632 = vadd.f32 %v552, %v4631
    %v4633 = vpop.f32.mrf.mxu0
    %4634 = vmatprep.mubr.f32.mxu0 0.0
    %4635 = vmatmul.mubr.f32.gmra.mxu0 %v2041
    %v4636 = vpop.f32.mrf.mxu0
    %v4637 = vadd.f32 %v552, %v4636
    %v4638 = vpop.f32.mrf.mxu0
    %4639 = vmatprep.mubr.f32.mxu0 0.0
    %4640 = vmatmul.mubr.f32.gmra.mxu0 %v2044
    %v4641 = vpop.f32.mrf.mxu0
    %v4642 = vadd.f32 %v552, %v4641
    %v4643 = vpop.f32.mrf.mxu0
    %4644 = vmatprep.mubr.f32.mxu0 0.0
    %4645 = vmatmul.mubr.f32.gmra.mxu0 %v2047
    %v4646 = vpop.f32.mrf.mxu0
    %v4647 = vadd.f32 %v552, %v4646
    %v4648 = vpop.f32.mrf.mxu0
    %4649 = vmatprep.mubr.f32.mxu0 0.0
    %4650 = vmatmul.mubr.f32.gmra.mxu0 %v2050
    %v4651 = vpop.f32.mrf.mxu0
    %v4652 = vadd.f32 %v552, %v4651
    %v4653 = vpop.f32.mrf.mxu0
    %4654 = vmatprep.mubr.f32.mxu0 0.0
    %4655 = vmatmul.mubr.f32.gmra.mxu0 %v2053
    %v4656 = vpop.f32.mrf.mxu0
    %v4657 = vadd.f32 %v552, %v4656
    %v4658 = vpop.f32.mrf.mxu0
    %4659 = vmatprep.mubr.f32.mxu0 0.0
    %4660 = vmatmul.mubr.f32.gmra.mxu0 %v2056
    %v4661 = vpop.f32.mrf.mxu0
    %v4662 = vadd.f32 %v552, %v4661
    %v4663 = vpop.f32.mrf.mxu0
    %4664 = vmatprep.mubr.f32.mxu0 0.0
    %4665 = vmatmul.mubr.f32.gmra.mxu0 %v2059
    %v4666 = vpop.f32.mrf.mxu0
    %v4667 = vadd.f32 %v552, %v4666
    %v4668 = vpop.f32.mrf.mxu0
    %4669 = vmatprep.mubr.f32.mxu0 0.0
    %4670 = vmatmul.mubr.f32.gmra.mxu0 %v2062
    %v4671 = vpop.f32.mrf.mxu0
    %v4672 = vadd.f32 %v552, %v4671
    %v4673 = vpop.f32.mrf.mxu0
    %4674 = vmatprep.mubr.f32.mxu0 0.0
    %4675 = vmatmul.mubr.f32.gmra.mxu0 %v2065
    %v4676 = vpop.f32.mrf.mxu0
    %v4677 = vadd.f32 %v552, %v4676
    %v4678 = vpop.f32.mrf.mxu0
    %4679 = vmatprep.mubr.f32.mxu0 0.0
    %4680 = vmatmul.mubr.f32.gmra.mxu0 %v2068
    %v4681 = vpop.f32.mrf.mxu0
    %v4682 = vadd.f32 %v552, %v4681
    %v4683 = vpop.f32.mrf.mxu0
    %4684 = vmatprep.mubr.f32.mxu0 0.0
    %4685 = vmatmul.mubr.f32.gmra.mxu0 %v2071
    %v4686 = vpop.f32.mrf.mxu0
    %v4687 = vadd.f32 %v552, %v4686
    %v4688 = vpop.f32.mrf.mxu0
    %4689 = vmatprep.mubr.f32.mxu0 0.0
    %4690 = vmatmul.mubr.f32.gmra.mxu0 %v2074
    %v4691 = vpop.f32.mrf.mxu0
    %v4692 = vadd.f32 %v552, %v4691
    %v4693 = vpop.f32.mrf.mxu0
    %4694 = vmatprep.mubr.f32.mxu0 0.0
    %4695 = vmatmul.mubr.f32.gmra.mxu0 %v2077
    %v4696 = vpop.f32.mrf.mxu0
    %v4697 = vadd.f32 %v552, %v4696
    %v4698 = vpop.f32.mrf.mxu0
    %4699 = vmatprep.mubr.f32.mxu0 0.0
    %4700 = vmatmul.mubr.f32.gmra.mxu0 %v2080
    %v4701 = vpop.f32.mrf.mxu0
    %v4702 = vadd.f32 %v552, %v4701
    %v4703 = vpop.f32.mrf.mxu0
    %4704 = vmatprep.mubr.f32.mxu0 0.0
    %4705 = vmatmul.mubr.f32.gmra.mxu0 %v2083
    %v4706 = vpop.f32.mrf.mxu0
    %v4707 = vadd.f32 %v552, %v4706
    %v4708 = vpop.f32.mrf.mxu0
    %4709 = vmatprep.mubr.f32.mxu0 0.0
    %4710 = vmatmul.mubr.f32.gmra.mxu0 %v2086
    %v4711 = vpop.f32.mrf.mxu0
    %v4712 = vadd.f32 %v552, %v4711
    %v4713 = vpop.f32.mrf.mxu0
    %4714 = vmatprep.mubr.f32.mxu0 0.0
    %4715 = vmatmul.mubr.f32.gmra.mxu0 %v2089
    %v4716 = vpop.f32.mrf.mxu0
    %v4717 = vadd.f32 %v552, %v4716
    %v4718 = vpop.f32.mrf.mxu0
    %4719 = vdwg.mxu0
    %v4720 = vmax.f32 %v2162, 0.0
    %v4721 = vmax.f32 %v2167, 0.0
    %v4722 = vmax.f32 %v2172, 0.0
    %v4723 = vmax.f32 %v2177, 0.0
    %v4724 = vmax.f32 %v2182, 0.0
    %v4725 = vmax.f32 %v2187, 0.0
    %v4726 = vmax.f32 %v2192, 0.0
    %v4727 = vmax.f32 %v2197, 0.0
    %v4728 = vmax.f32 %v2202, 0.0
    %v4729 = vmax.f32 %v2207, 0.0
    %v4730 = vmax.f32 %v2212, 0.0
    %v4731 = vmax.f32 %v2217, 0.0
    %v4732 = vmax.f32 %v2222, 0.0
    %v4733 = vmax.f32 %v2227, 0.0
    %v4734 = vmax.f32 %v2232, 0.0
    %v4735 = vmax.f32 %v2237, 0.0
    %v4736 = vmax.f32 %v2242, 0.0
    %v4737 = vmax.f32 %v2247, 0.0
    %v4738 = vmax.f32 %v2252, 0.0
    %v4739 = vmax.f32 %v2257, 0.0
    %v4740 = vmax.f32 %v2262, 0.0
    %v4741 = vmax.f32 %v2267, 0.0
    %v4742 = vmax.f32 %v2272, 0.0
    %v4743 = vmax.f32 %v2277, 0.0
    %v4744 = vmax.f32 %v2282, 0.0
    %v4745 = vmax.f32 %v2287, 0.0
    %v4746 = vmax.f32 %v2292, 0.0
    %v4747 = vmax.f32 %v2297, 0.0
    %v4748 = vmax.f32 %v2302, 0.0
    %v4749 = vmax.f32 %v2307, 0.0
    %v4750 = vmax.f32 %v2312, 0.0
    %v4751 = vmax.f32 %v2317, 0.0
    %v4752 = vmax.f32 %v2322, 0.0
    %v4753 = vmax.f32 %v2327, 0.0
    %v4754 = vmax.f32 %v2332, 0.0
    %v4755 = vmax.f32 %v2337, 0.0
    %v4756 = vmax.f32 %v2342, 0.0
    %v4757 = vmax.f32 %v2347, 0.0
    %v4758 = vmax.f32 %v2352, 0.0
    %v4759 = vmax.f32 %v2357, 0.0
    %v4760 = vmax.f32 %v2362, 0.0
    %v4761 = vmax.f32 %v2367, 0.0
    %v4762 = vmax.f32 %v2372, 0.0
    %v4763 = vmax.f32 %v2377, 0.0
    %v4764 = vmax.f32 %v2382, 0.0
    %v4765 = vmax.f32 %v2387, 0.0
    %v4766 = vmax.f32 %v2392, 0.0
    %v4767 = vmax.f32 %v2397, 0.0
    %v4768 = vmax.f32 %v2402, 0.0
    %v4769 = vmax.f32 %v2407, 0.0
    %v4770 = vmax.f32 %v2412, 0.0
    %v4771 = vmax.f32 %v2417, 0.0
    %v4772 = vmax.f32 %v2422, 0.0
    %v4773 = vmax.f32 %v2427, 0.0
    %v4774 = vmax.f32 %v2432, 0.0
    %v4775 = vmax.f32 %v2437, 0.0
    %v4776 = vmax.f32 %v2442, 0.0
    %v4777 = vmax.f32 %v2447, 0.0
    %v4778 = vmax.f32 %v2452, 0.0
    %v4779 = vmax.f32 %v2457, 0.0
    %v4780 = vmax.f32 %v2462, 0.0
    %v4781 = vmax.f32 %v2467, 0.0
    %v4782 = vmax.f32 %v2472, 0.0
    %v4783 = vmax.f32 %v2477, 0.0
    %v4784 = vmax.f32 %v2482, 0.0
    %v4785 = vmax.f32 %v2487, 0.0
    %v4786 = vmax.f32 %v2492, 0.0
    %v4787 = vmax.f32 %v2497, 0.0
    %v4788 = vmax.f32 %v2502, 0.0
    %v4789 = vmax.f32 %v2507, 0.0
    %v4790 = vmax.f32 %v2512, 0.0
    %v4791 = vmax.f32 %v2517, 0.0
    %v4792 = vmax.f32 %v2522, 0.0
    %v4793 = vmax.f32 %v2527, 0.0
    %v4794 = vmax.f32 %v2532, 0.0
    %v4795 = vmax.f32 %v2537, 0.0
    %v4796 = vmax.f32 %v2542, 0.0
    %v4797 = vmax.f32 %v2547, 0.0
    %v4798 = vmax.f32 %v2552, 0.0
    %v4799 = vmax.f32 %v2557, 0.0
    %v4800 = vmax.f32 %v2562, 0.0
    %v4801 = vmax.f32 %v2567, 0.0
    %v4802 = vmax.f32 %v2572, 0.0
    %v4803 = vmax.f32 %v2577, 0.0
    %v4804 = vmax.f32 %v2582, 0.0
    %v4805 = vmax.f32 %v2587, 0.0
    %v4806 = vmax.f32 %v2592, 0.0
    %v4807 = vmax.f32 %v2597, 0.0
    %v4808 = vmax.f32 %v2602, 0.0
    %v4809 = vmax.f32 %v2607, 0.0
    %v4810 = vmax.f32 %v2612, 0.0
    %v4811 = vmax.f32 %v2617, 0.0
    %v4812 = vmax.f32 %v2622, 0.0
    %v4813 = vmax.f32 %v2627, 0.0
    %v4814 = vmax.f32 %v2632, 0.0
    %v4815 = vmax.f32 %v2637, 0.0
    %v4816 = vmax.f32 %v2642, 0.0
    %v4817 = vmax.f32 %v2647, 0.0
    %v4818 = vmax.f32 %v2652, 0.0
    %v4819 = vmax.f32 %v2657, 0.0
    %v4820 = vmax.f32 %v2662, 0.0
    %v4821 = vmax.f32 %v2667, 0.0
    %v4822 = vmax.f32 %v2672, 0.0
    %v4823 = vmax.f32 %v2677, 0.0
    %v4824 = vmax.f32 %v2682, 0.0
    %v4825 = vmax.f32 %v2687, 0.0
    %v4826 = vmax.f32 %v2692, 0.0
    %v4827 = vmax.f32 %v2697, 0.0
    %v4828 = vmax.f32 %v2702, 0.0
    %v4829 = vmax.f32 %v2707, 0.0
    %v4830 = vmax.f32 %v2712, 0.0
    %v4831 = vmax.f32 %v2717, 0.0
    %v4832 = vmax.f32 %v2722, 0.0
    %v4833 = vmax.f32 %v2727, 0.0
    %v4834 = vmax.f32 %v2732, 0.0
    %v4835 = vmax.f32 %v2737, 0.0
    %v4836 = vmax.f32 %v2742, 0.0
    %v4837 = vmax.f32 %v2747, 0.0
    %v4838 = vmax.f32 %v2752, 0.0
    %v4839 = vmax.f32 %v2757, 0.0
    %v4840 = vmax.f32 %v2762, 0.0
    %v4841 = vmax.f32 %v2767, 0.0
    %v4842 = vmax.f32 %v2772, 0.0
    %v4843 = vmax.f32 %v2777, 0.0
    %v4844 = vmax.f32 %v2782, 0.0
    %v4845 = vmax.f32 %v2787, 0.0
    %v4846 = vmax.f32 %v2792, 0.0
    %v4847 = vmax.f32 %v2797, 0.0
    %v4848 = vmax.f32 %v2802, 0.0
    %v4849 = vmax.f32 %v2807, 0.0
    %v4850 = vmax.f32 %v2812, 0.0
    %v4851 = vmax.f32 %v2817, 0.0
    %v4852 = vmax.f32 %v2822, 0.0
    %v4853 = vmax.f32 %v2827, 0.0
    %v4854 = vmax.f32 %v2832, 0.0
    %v4855 = vmax.f32 %v2837, 0.0
    %v4856 = vmax.f32 %v2842, 0.0
    %v4857 = vmax.f32 %v2847, 0.0
    %v4858 = vmax.f32 %v2852, 0.0
    %v4859 = vmax.f32 %v2857, 0.0
    %v4860 = vmax.f32 %v2862, 0.0
    %v4861 = vmax.f32 %v2867, 0.0
    %v4862 = vmax.f32 %v2872, 0.0
    %v4863 = vmax.f32 %v2877, 0.0
    %v4864 = vmax.f32 %v2882, 0.0
    %v4865 = vmax.f32 %v2887, 0.0
    %v4866 = vmax.f32 %v2892, 0.0
    %v4867 = vmax.f32 %v2897, 0.0
    %v4868 = vmax.f32 %v2902, 0.0
    %v4869 = vmax.f32 %v2907, 0.0
    %v4870 = vmax.f32 %v2912, 0.0
    %v4871 = vmax.f32 %v2917, 0.0
    %v4872 = vmax.f32 %v2922, 0.0
    %v4873 = vmax.f32 %v2927, 0.0
    %v4874 = vmax.f32 %v2932, 0.0
    %v4875 = vmax.f32 %v2937, 0.0
    %v4876 = vmax.f32 %v2942, 0.0
    %v4877 = vmax.f32 %v2947, 0.0
    %v4878 = vmax.f32 %v2952, 0.0
    %v4879 = vmax.f32 %v2957, 0.0
    %v4880 = vmax.f32 %v2962, 0.0
    %v4881 = vmax.f32 %v2967, 0.0
    %v4882 = vmax.f32 %v2972, 0.0
    %v4883 = vmax.f32 %v2977, 0.0
    %v4884 = vmax.f32 %v2982, 0.0
    %v4885 = vmax.f32 %v2987, 0.0
    %v4886 = vmax.f32 %v2992, 0.0
    %v4887 = vmax.f32 %v2997, 0.0
    %v4888 = vmax.f32 %v3002, 0.0
    %v4889 = vmax.f32 %v3007, 0.0
    %v4890 = vmax.f32 %v3012, 0.0
    %v4891 = vmax.f32 %v3017, 0.0
    %v4892 = vmax.f32 %v3022, 0.0
    %v4893 = vmax.f32 %v3027, 0.0
    %v4894 = vmax.f32 %v3032, 0.0
    %v4895 = vmax.f32 %v3037, 0.0
    %v4896 = vmax.f32 %v3042, 0.0
    %v4897 = vmax.f32 %v3047, 0.0
    %v4898 = vmax.f32 %v3052, 0.0
    %v4899 = vmax.f32 %v3057, 0.0
    %v4900 = vmax.f32 %v3062, 0.0
    %v4901 = vmax.f32 %v3067, 0.0
    %v4902 = vmax.f32 %v3072, 0.0
    %v4903 = vmax.f32 %v3077, 0.0
    %v4904 = vmax.f32 %v3082, 0.0
    %v4905 = vmax.f32 %v3087, 0.0
    %v4906 = vmax.f32 %v3092, 0.0
    %v4907 = vmax.f32 %v3097, 0.0
    %v4908 = vmax.f32 %v3102, 0.0
    %v4909 = vmax.f32 %v3107, 0.0
    %v4910 = vmax.f32 %v3112, 0.0
    %v4911 = vmax.f32 %v3117, 0.0
    %v4912 = vmax.f32 %v3122, 0.0
    %v4913 = vmax.f32 %v3127, 0.0
    %v4914 = vmax.f32 %v3132, 0.0
    %v4915 = vmax.f32 %v3137, 0.0
    %v4916 = vmax.f32 %v3142, 0.0
    %v4917 = vmax.f32 %v3147, 0.0
    %v4918 = vmax.f32 %v3152, 0.0
    %v4919 = vmax.f32 %v3157, 0.0
    %v4920 = vmax.f32 %v3162, 0.0
    %v4921 = vmax.f32 %v3167, 0.0
    %v4922 = vmax.f32 %v3172, 0.0
    %v4923 = vmax.f32 %v3177, 0.0
    %v4924 = vmax.f32 %v3182, 0.0
    %v4925 = vmax.f32 %v3187, 0.0
    %v4926 = vmax.f32 %v3192, 0.0
    %v4927 = vmax.f32 %v3197, 0.0
    %v4928 = vmax.f32 %v3202, 0.0
    %v4929 = vmax.f32 %v3207, 0.0
    %v4930 = vmax.f32 %v3212, 0.0
    %v4931 = vmax.f32 %v3217, 0.0
    %v4932 = vmax.f32 %v3222, 0.0
    %v4933 = vmax.f32 %v3227, 0.0
    %v4934 = vmax.f32 %v3232, 0.0
    %v4935 = vmax.f32 %v3237, 0.0
    %v4936 = vmax.f32 %v3242, 0.0
    %v4937 = vmax.f32 %v3247, 0.0
    %v4938 = vmax.f32 %v3252, 0.0
    %v4939 = vmax.f32 %v3257, 0.0
    %v4940 = vmax.f32 %v3262, 0.0
    %v4941 = vmax.f32 %v3267, 0.0
    %v4942 = vmax.f32 %v3272, 0.0
    %v4943 = vmax.f32 %v3277, 0.0
    %v4944 = vmax.f32 %v3282, 0.0
    %v4945 = vmax.f32 %v3287, 0.0
    %v4946 = vmax.f32 %v3292, 0.0
    %v4947 = vmax.f32 %v3297, 0.0
    %v4948 = vmax.f32 %v3302, 0.0
    %v4949 = vmax.f32 %v3307, 0.0
    %v4950 = vmax.f32 %v3312, 0.0
    %v4951 = vmax.f32 %v3317, 0.0
    %v4952 = vmax.f32 %v3322, 0.0
    %v4953 = vmax.f32 %v3327, 0.0
    %v4954 = vmax.f32 %v3332, 0.0
    %v4955 = vmax.f32 %v3337, 0.0
    %v4956 = vmax.f32 %v3342, 0.0
    %v4957 = vmax.f32 %v3347, 0.0
    %v4958 = vmax.f32 %v3352, 0.0
    %v4959 = vmax.f32 %v3357, 0.0
    %v4960 = vmax.f32 %v3362, 0.0
    %v4961 = vmax.f32 %v3367, 0.0
    %v4962 = vmax.f32 %v3372, 0.0
    %v4963 = vmax.f32 %v3377, 0.0
    %v4964 = vmax.f32 %v3382, 0.0
    %v4965 = vmax.f32 %v3387, 0.0
    %v4966 = vmax.f32 %v3392, 0.0
    %v4967 = vmax.f32 %v3397, 0.0
    %v4968 = vmax.f32 %v3402, 0.0
    %v4969 = vmax.f32 %v3407, 0.0
    %v4970 = vmax.f32 %v3412, 0.0
    %v4971 = vmax.f32 %v3417, 0.0
    %v4972 = vmax.f32 %v3422, 0.0
    %v4973 = vmax.f32 %v3427, 0.0
    %v4974 = vmax.f32 %v3432, 0.0
    %v4975 = vmax.f32 %v3437, 0.0
    %v4976 = vmax.f32 %v3442, 0.0
    %v4977 = vmax.f32 %v3447, 0.0
    %v4978 = vmax.f32 %v3452, 0.0
    %v4979 = vmax.f32 %v3457, 0.0
    %v4980 = vmax.f32 %v3462, 0.0
    %v4981 = vmax.f32 %v3467, 0.0
    %v4982 = vmax.f32 %v3472, 0.0
    %v4983 = vmax.f32 %v3477, 0.0
    %v4984 = vmax.f32 %v3482, 0.0
    %v4985 = vmax.f32 %v3487, 0.0
    %v4986 = vmax.f32 %v3492, 0.0
    %v4987 = vmax.f32 %v3497, 0.0
    %v4988 = vmax.f32 %v3502, 0.0
    %v4989 = vmax.f32 %v3507, 0.0
    %v4990 = vmax.f32 %v3512, 0.0
    %v4991 = vmax.f32 %v3517, 0.0
    %v4992 = vmax.f32 %v3522, 0.0
    %v4993 = vmax.f32 %v3527, 0.0
    %v4994 = vmax.f32 %v3532, 0.0
    %v4995 = vmax.f32 %v3537, 0.0
    %v4996 = vmax.f32 %v3542, 0.0
    %v4997 = vmax.f32 %v3547, 0.0
    %v4998 = vmax.f32 %v3552, 0.0
    %v4999 = vmax.f32 %v3557, 0.0
    %v5000 = vmax.f32 %v3562, 0.0
    %v5001 = vmax.f32 %v3567, 0.0
    %v5002 = vmax.f32 %v3572, 0.0
    %v5003 = vmax.f32 %v3577, 0.0
    %v5004 = vmax.f32 %v3582, 0.0
    %v5005 = vmax.f32 %v3587, 0.0
    %v5006 = vmax.f32 %v3592, 0.0
    %v5007 = vmax.f32 %v3597, 0.0
    %v5008 = vmax.f32 %v3602, 0.0
    %v5009 = vmax.f32 %v3607, 0.0
    %v5010 = vmax.f32 %v3612, 0.0
    %v5011 = vmax.f32 %v3617, 0.0
    %v5012 = vmax.f32 %v3622, 0.0
    %v5013 = vmax.f32 %v3627, 0.0
    %v5014 = vmax.f32 %v3632, 0.0
    %v5015 = vmax.f32 %v3637, 0.0
    %v5016 = vmax.f32 %v3642, 0.0
    %v5017 = vmax.f32 %v3647, 0.0
    %v5018 = vmax.f32 %v3652, 0.0
    %v5019 = vmax.f32 %v3657, 0.0
    %v5020 = vmax.f32 %v3662, 0.0
    %v5021 = vmax.f32 %v3667, 0.0
    %v5022 = vmax.f32 %v3672, 0.0
    %v5023 = vmax.f32 %v3677, 0.0
    %v5024 = vmax.f32 %v3682, 0.0
    %v5025 = vmax.f32 %v3687, 0.0
    %v5026 = vmax.f32 %v3692, 0.0
    %v5027 = vmax.f32 %v3697, 0.0
    %v5028 = vmax.f32 %v3702, 0.0
    %v5029 = vmax.f32 %v3707, 0.0
    %v5030 = vmax.f32 %v3712, 0.0
    %v5031 = vmax.f32 %v3717, 0.0
    %v5032 = vmax.f32 %v3722, 0.0
    %v5033 = vmax.f32 %v3727, 0.0
    %v5034 = vmax.f32 %v3732, 0.0
    %v5035 = vmax.f32 %v3737, 0.0
    %v5036 = vmax.f32 %v3742, 0.0
    %v5037 = vmax.f32 %v3747, 0.0
    %v5038 = vmax.f32 %v3752, 0.0
    %v5039 = vmax.f32 %v3757, 0.0
    %v5040 = vmax.f32 %v3762, 0.0
    %v5041 = vmax.f32 %v3767, 0.0
    %v5042 = vmax.f32 %v3772, 0.0
    %v5043 = vmax.f32 %v3777, 0.0
    %v5044 = vmax.f32 %v3782, 0.0
    %v5045 = vmax.f32 %v3787, 0.0
    %v5046 = vmax.f32 %v3792, 0.0
    %v5047 = vmax.f32 %v3797, 0.0
    %v5048 = vmax.f32 %v3802, 0.0
    %v5049 = vmax.f32 %v3807, 0.0
    %v5050 = vmax.f32 %v3812, 0.0
    %v5051 = vmax.f32 %v3817, 0.0
    %v5052 = vmax.f32 %v3822, 0.0
    %v5053 = vmax.f32 %v3827, 0.0
    %v5054 = vmax.f32 %v3832, 0.0
    %v5055 = vmax.f32 %v3837, 0.0
    %v5056 = vmax.f32 %v3842, 0.0
    %v5057 = vmax.f32 %v3847, 0.0
    %v5058 = vmax.f32 %v3852, 0.0
    %v5059 = vmax.f32 %v3857, 0.0
    %v5060 = vmax.f32 %v3862, 0.0
    %v5061 = vmax.f32 %v3867, 0.0
    %v5062 = vmax.f32 %v3872, 0.0
    %v5063 = vmax.f32 %v3877, 0.0
    %v5064 = vmax.f32 %v3882, 0.0
    %v5065 = vmax.f32 %v3887, 0.0
    %v5066 = vmax.f32 %v3892, 0.0
    %v5067 = vmax.f32 %v3897, 0.0
    %v5068 = vmax.f32 %v3902, 0.0
    %v5069 = vmax.f32 %v3907, 0.0
    %v5070 = vmax.f32 %v3912, 0.0
    %v5071 = vmax.f32 %v3917, 0.0
    %v5072 = vmax.f32 %v3922, 0.0
    %v5073 = vmax.f32 %v3927, 0.0
    %v5074 = vmax.f32 %v3932, 0.0
    %v5075 = vmax.f32 %v3937, 0.0
    %v5076 = vmax.f32 %v3942, 0.0
    %v5077 = vmax.f32 %v3947, 0.0
    %v5078 = vmax.f32 %v3952, 0.0
    %v5079 = vmax.f32 %v3957, 0.0
    %v5080 = vmax.f32 %v3962, 0.0
    %v5081 = vmax.f32 %v3967, 0.0
    %v5082 = vmax.f32 %v3972, 0.0
    %v5083 = vmax.f32 %v3977, 0.0
    %v5084 = vmax.f32 %v3982, 0.0
    %v5085 = vmax.f32 %v3987, 0.0
    %v5086 = vmax.f32 %v3992, 0.0
    %v5087 = vmax.f32 %v3997, 0.0
    %v5088 = vmax.f32 %v4002, 0.0
    %v5089 = vmax.f32 %v4007, 0.0
    %v5090 = vmax.f32 %v4012, 0.0
    %v5091 = vmax.f32 %v4017, 0.0
    %v5092 = vmax.f32 %v4022, 0.0
    %v5093 = vmax.f32 %v4027, 0.0
    %v5094 = vmax.f32 %v4032, 0.0
    %v5095 = vmax.f32 %v4037, 0.0
    %v5096 = vmax.f32 %v4042, 0.0
    %v5097 = vmax.f32 %v4047, 0.0
    %v5098 = vmax.f32 %v4052, 0.0
    %v5099 = vmax.f32 %v4057, 0.0
    %v5100 = vmax.f32 %v4062, 0.0
    %v5101 = vmax.f32 %v4067, 0.0
    %v5102 = vmax.f32 %v4072, 0.0
    %v5103 = vmax.f32 %v4077, 0.0
    %v5104 = vmax.f32 %v4082, 0.0
    %v5105 = vmax.f32 %v4087, 0.0
    %v5106 = vmax.f32 %v4092, 0.0
    %v5107 = vmax.f32 %v4097, 0.0
    %v5108 = vmax.f32 %v4102, 0.0
    %v5109 = vmax.f32 %v4107, 0.0
    %v5110 = vmax.f32 %v4112, 0.0
    %v5111 = vmax.f32 %v4117, 0.0
    %v5112 = vmax.f32 %v4122, 0.0
    %v5113 = vmax.f32 %v4127, 0.0
    %v5114 = vmax.f32 %v4132, 0.0
    %v5115 = vmax.f32 %v4137, 0.0
    %v5116 = vmax.f32 %v4142, 0.0
    %v5117 = vmax.f32 %v4147, 0.0
    %v5118 = vmax.f32 %v4152, 0.0
    %v5119 = vmax.f32 %v4157, 0.0
    %v5120 = vmax.f32 %v4162, 0.0
    %v5121 = vmax.f32 %v4167, 0.0
    %v5122 = vmax.f32 %v4172, 0.0
    %v5123 = vmax.f32 %v4177, 0.0
    %v5124 = vmax.f32 %v4182, 0.0
    %v5125 = vmax.f32 %v4187, 0.0
    %v5126 = vmax.f32 %v4192, 0.0
    %v5127 = vmax.f32 %v4197, 0.0
    %v5128 = vmax.f32 %v4202, 0.0
    %v5129 = vmax.f32 %v4207, 0.0
    %v5130 = vmax.f32 %v4212, 0.0
    %v5131 = vmax.f32 %v4217, 0.0
    %v5132 = vmax.f32 %v4222, 0.0
    %v5133 = vmax.f32 %v4227, 0.0
    %v5134 = vmax.f32 %v4232, 0.0
    %v5135 = vmax.f32 %v4237, 0.0
    %v5136 = vmax.f32 %v4242, 0.0
    %v5137 = vmax.f32 %v4247, 0.0
    %v5138 = vmax.f32 %v4252, 0.0
    %v5139 = vmax.f32 %v4257, 0.0
    %v5140 = vmax.f32 %v4262, 0.0
    %v5141 = vmax.f32 %v4267, 0.0
    %v5142 = vmax.f32 %v4272, 0.0
    %v5143 = vmax.f32 %v4277, 0.0
    %v5144 = vmax.f32 %v4282, 0.0
    %v5145 = vmax.f32 %v4287, 0.0
    %v5146 = vmax.f32 %v4292, 0.0
    %v5147 = vmax.f32 %v4297, 0.0
    %v5148 = vmax.f32 %v4302, 0.0
    %v5149 = vmax.f32 %v4307, 0.0
    %v5150 = vmax.f32 %v4312, 0.0
    %v5151 = vmax.f32 %v4317, 0.0
    %v5152 = vmax.f32 %v4322, 0.0
    %v5153 = vmax.f32 %v4327, 0.0
    %v5154 = vmax.f32 %v4332, 0.0
    %v5155 = vmax.f32 %v4337, 0.0
    %v5156 = vmax.f32 %v4342, 0.0
    %v5157 = vmax.f32 %v4347, 0.0
    %v5158 = vmax.f32 %v4352, 0.0
    %v5159 = vmax.f32 %v4357, 0.0
    %v5160 = vmax.f32 %v4362, 0.0
    %v5161 = vmax.f32 %v4367, 0.0
    %v5162 = vmax.f32 %v4372, 0.0
    %v5163 = vmax.f32 %v4377, 0.0
    %v5164 = vmax.f32 %v4382, 0.0
    %v5165 = vmax.f32 %v4387, 0.0
    %v5166 = vmax.f32 %v4392, 0.0
    %v5167 = vmax.f32 %v4397, 0.0
    %v5168 = vmax.f32 %v4402, 0.0
    %v5169 = vmax.f32 %v4407, 0.0
    %v5170 = vmax.f32 %v4412, 0.0
    %v5171 = vmax.f32 %v4417, 0.0
    %v5172 = vmax.f32 %v4422, 0.0
    %v5173 = vmax.f32 %v4427, 0.0
    %v5174 = vmax.f32 %v4432, 0.0
    %v5175 = vmax.f32 %v4437, 0.0
    %v5176 = vmax.f32 %v4442, 0.0
    %v5177 = vmax.f32 %v4447, 0.0
    %v5178 = vmax.f32 %v4452, 0.0
    %v5179 = vmax.f32 %v4457, 0.0
    %v5180 = vmax.f32 %v4462, 0.0
    %v5181 = vmax.f32 %v4467, 0.0
    %v5182 = vmax.f32 %v4472, 0.0
    %v5183 = vmax.f32 %v4477, 0.0
    %v5184 = vmax.f32 %v4482, 0.0
    %v5185 = vmax.f32 %v4487, 0.0
    %v5186 = vmax.f32 %v4492, 0.0
    %v5187 = vmax.f32 %v4497, 0.0
    %v5188 = vmax.f32 %v4502, 0.0
    %v5189 = vmax.f32 %v4507, 0.0
    %v5190 = vmax.f32 %v4512, 0.0
    %v5191 = vmax.f32 %v4517, 0.0
    %v5192 = vmax.f32 %v4522, 0.0
    %v5193 = vmax.f32 %v4527, 0.0
    %v5194 = vmax.f32 %v4532, 0.0
    %v5195 = vmax.f32 %v4537, 0.0
    %v5196 = vmax.f32 %v4542, 0.0
    %v5197 = vmax.f32 %v4547, 0.0
    %v5198 = vmax.f32 %v4552, 0.0
    %v5199 = vmax.f32 %v4557, 0.0
    %v5200 = vmax.f32 %v4562, 0.0
    %v5201 = vmax.f32 %v4567, 0.0
    %v5202 = vmax.f32 %v4572, 0.0
    %v5203 = vmax.f32 %v4577, 0.0
    %v5204 = vmax.f32 %v4582, 0.0
    %v5205 = vmax.f32 %v4587, 0.0
    %v5206 = vmax.f32 %v4592, 0.0
    %v5207 = vmax.f32 %v4597, 0.0
    %v5208 = vmax.f32 %v4602, 0.0
    %v5209 = vmax.f32 %v4607, 0.0
    %v5210 = vmax.f32 %v4612, 0.0
    %v5211 = vmax.f32 %v4617, 0.0
    %v5212 = vmax.f32 %v4622, 0.0
    %v5213 = vmax.f32 %v4627, 0.0
    %v5214 = vmax.f32 %v4632, 0.0
    %v5215 = vmax.f32 %v4637, 0.0
    %v5216 = vmax.f32 %v4642, 0.0
    %v5217 = vmax.f32 %v4647, 0.0
    %v5218 = vmax.f32 %v4652, 0.0
    %v5219 = vmax.f32 %v4657, 0.0
    %v5220 = vmax.f32 %v4662, 0.0
    %v5221 = vmax.f32 %v4667, 0.0
    %v5222 = vmax.f32 %v4672, 0.0
    %v5223 = vmax.f32 %v4677, 0.0
    %v5224 = vmax.f32 %v4682, 0.0
    %v5225 = vmax.f32 %v4687, 0.0
    %v5226 = vmax.f32 %v4692, 0.0
    %v5227 = vmax.f32 %v4697, 0.0
    %v5228 = vmax.f32 %v4702, 0.0
    %v5229 = vmax.f32 %v4707, 0.0
    %v5230 = vmax.f32 %v4712, 0.0
    %v5231 = vmax.f32 %v4717, 0.0
    %v5232 = vld [vmem:[%s1] sm:$0xff]
    %v5233 = vld [vmem:[%s1 + $0x8] sm:$0xff]
    %v5234 = vld [vmem:[%s1 + $0x10] sm:$0xff]
    %v5235 = vld [vmem:[%s1 + $0x18] sm:$0xff]
    %v5236 = vld [vmem:[%s1 + $0x20] sm:$0xff]
    %v5237 = vld [vmem:[%s1 + $0x28] sm:$0xff]
    %v5238 = vld [vmem:[%s1 + $0x30] sm:$0xff]
    %v5239 = vld [vmem:[%s1 + $0x38] sm:$0xff]
    %v5240 = vld [vmem:[%s1 + $0x40] sm:$0xff]
    %v5241 = vld [vmem:[%s1 + $0x48] sm:$0xff]
    %v5242 = vld [vmem:[%s1 + $0x50] sm:$0xff]
    %v5243 = vld [vmem:[%s1 + $0x58] sm:$0xff]
    %v5244 = vld [vmem:[%s1 + $0x60] sm:$0xff]
    %v5245 = vld [vmem:[%s1 + $0x68] sm:$0xff]
    %v5246 = vld [vmem:[%s1 + $0x70] sm:$0xff]
    %v5247 = vld [vmem:[%s1 + $0x78] sm:$0xff]
    %v5248 = vld [vmem:[%s1 + $0x80] sm:$0xff]
    %v5249 = vld [vmem:[%s1 + $0x88] sm:$0xff]
    %v5250 = vld [vmem:[%s1 + $0x90] sm:$0xff]
    %v5251 = vld [vmem:[%s1 + $0x98] sm:$0xff]
    %v5252 = vld [vmem:[%s1 + $0xa0] sm:$0xff]
    %v5253 = vld [vmem:[%s1 + $0xa8] sm:$0xff]
    %v5254 = vld [vmem:[%s1 + $0xb0] sm:$0xff]
    %v5255 = vld [vmem:[%s1 + $0xb8] sm:$0xff]
    %v5256 = vld [vmem:[%s1 + $0xc0] sm:$0xff]
    %v5257 = vld [vmem:[%s1 + $0xc8] sm:$0xff]
    %v5258 = vld [vmem:[%s1 + $0xd0] sm:$0xff]
    %v5259 = vld [vmem:[%s1 + $0xd8] sm:$0xff]
    %v5260 = vld [vmem:[%s1 + $0xe0] sm:$0xff]
    %v5261 = vld [vmem:[%s1 + $0xe8] sm:$0xff]
    %v5262 = vld [vmem:[%s1 + $0xf0] sm:$0xff]
    %v5263 = vld [vmem:[%s1 + $0xf8] sm:$0xff]
    %v5264 = vld [vmem:[%s1 + $0x100] sm:$0xff]
    %v5265 = vld [vmem:[%s1 + $0x108] sm:$0xff]
    %v5266 = vld [vmem:[%s1 + $0x110] sm:$0xff]
    %v5267 = vld [vmem:[%s1 + $0x118] sm:$0xff]
    %v5268 = vld [vmem:[%s1 + $0x120] sm:$0xff]
    %v5269 = vld [vmem:[%s1 + $0x128] sm:$0xff]
    %v5270 = vld [vmem:[%s1 + $0x130] sm:$0xff]
    %v5271 = vld [vmem:[%s1 + $0x138] sm:$0xff]
    %v5272 = vld [vmem:[%s1 + $0x140] sm:$0xff]
    %v5273 = vld [vmem:[%s1 + $0x148] sm:$0xff]
    %v5274 = vld [vmem:[%s1 + $0x150] sm:$0xff]
    %v5275 = vld [vmem:[%s1 + $0x158] sm:$0xff]
    %v5276 = vld [vmem:[%s1 + $0x160] sm:$0xff]
    %v5277 = vld [vmem:[%s1 + $0x168] sm:$0xff]
    %v5278 = vld [vmem:[%s1 + $0x170] sm:$0xff]
    %v5279 = vld [vmem:[%s1 + $0x178] sm:$0xff]
    %v5280 = vld [vmem:[%s1 + $0x180] sm:$0xff]
    %v5281 = vld [vmem:[%s1 + $0x188] sm:$0xff]
    %v5282 = vld [vmem:[%s1 + $0x190] sm:$0xff]
    %v5283 = vld [vmem:[%s1 + $0x198] sm:$0xff]
    %v5284 = vld [vmem:[%s1 + $0x1a0] sm:$0xff]
    %v5285 = vld [vmem:[%s1 + $0x1a8] sm:$0xff]
    %v5286 = vld [vmem:[%s1 + $0x1b0] sm:$0xff]
    %v5287 = vld [vmem:[%s1 + $0x1b8] sm:$0xff]
    %v5288 = vld [vmem:[%s1 + $0x1c0] sm:$0xff]
    %v5289 = vld [vmem:[%s1 + $0x1c8] sm:$0xff]
    %v5290 = vld [vmem:[%s1 + $0x1d0] sm:$0xff]
    %v5291 = vld [vmem:[%s1 + $0x1d8] sm:$0xff]
    %v5292 = vld [vmem:[%s1 + $0x1e0] sm:$0xff]
    %v5293 = vld [vmem:[%s1 + $0x1e8] sm:$0xff]
    %v5294 = vld [vmem:[%s1 + $0x1f0] sm:$0xff]
    %v5295 = vld [vmem:[%s1 + $0x1f8] sm:$0xff]
    %5296 = vmatprep.subr.mxu0 0.0
    %5297 = vmatpush1.msra.mxu0 %v4735
    %5298 = vmatprep.subr.mxu0 0.0
    %5299 = vmatpush1.msra.mxu0 %v4734
    %5300 = vmatprep.subr.mxu0 0.0
    %5301 = vmatpush1.msra.mxu0 %v4733
    %5302 = vmatprep.subr.mxu0 0.0
    %5303 = vmatpush1.msra.mxu0 %v4732
    %5304 = vmatprep.subr.mxu0 0.0
    %5305 = vmatpush1.msra.mxu0 %v4731
    %5306 = vmatprep.subr.mxu0 0.0
    %5307 = vmatpush1.msra.mxu0 %v4730
    %5308 = vmatprep.subr.mxu0 0.0
    %5309 = vmatpush1.msra.mxu0 %v4729
    %5310 = vmatprep.subr.mxu0 0.0
    %5311 = vmatpush1.msra.mxu0 %v4728
    %5312 = vmatprep.subr.mxu0 0.0
    %5313 = vmatpush1.msra.mxu0 %v4727
    %5314 = vmatprep.subr.mxu0 0.0
    %5315 = vmatpush1.msra.mxu0 %v4726
    %5316 = vmatprep.subr.mxu0 0.0
    %5317 = vmatpush1.msra.mxu0 %v4725
    %5318 = vmatprep.subr.mxu0 0.0
    %5319 = vmatpush1.msra.mxu0 %v4724
    %5320 = vmatprep.subr.mxu0 0.0
    %5321 = vmatpush1.msra.mxu0 %v4723
    %5322 = vmatprep.subr.mxu0 0.0
    %5323 = vmatpush1.msra.mxu0 %v4722
    %5324 = vmatprep.subr.mxu0 0.0
    %5325 = vmatpush1.msra.mxu0 %v4721
    %5326 = vmatprep.subr.mxu0 0.0
    %5327 = vmatpush1.msra.mxu0 %v4720
    %5328 = vmatprep.subr.mxu0 0.0
    %5329 = vmatpush2.msra.mxu0 %v4751
    %5330 = vmatprep.subr.mxu0 0.0
    %5331 = vmatpush2.msra.mxu0 %v4750
    %5332 = vmatprep.subr.mxu0 0.0
    %5333 = vmatpush2.msra.mxu0 %v4749
    %5334 = vmatprep.subr.mxu0 0.0
    %5335 = vmatpush2.msra.mxu0 %v4748
    %5336 = vmatprep.subr.mxu0 0.0
    %5337 = vmatpush2.msra.mxu0 %v4747
    %5338 = vmatprep.subr.mxu0 0.0
    %5339 = vmatpush2.msra.mxu0 %v4746
    %5340 = vmatprep.subr.mxu0 0.0
    %5341 = vmatpush2.msra.mxu0 %v4745
    %5342 = vmatprep.subr.mxu0 0.0
    %5343 = vmatpush2.msra.mxu0 %v4744
    %5344 = vmatprep.subr.mxu0 0.0
    %5345 = vmatpush2.msra.mxu0 %v4743
    %5346 = vmatprep.subr.mxu0 0.0
    %5347 = vmatpush2.msra.mxu0 %v4742
    %5348 = vmatprep.subr.mxu0 0.0
    %5349 = vmatpush2.msra.mxu0 %v4741
    %5350 = vmatprep.subr.mxu0 0.0
    %5351 = vmatpush2.msra.mxu0 %v4740
    %5352 = vmatprep.subr.mxu0 0.0
    %5353 = vmatpush2.msra.mxu0 %v4739
    %5354 = vmatprep.subr.mxu0 0.0
    %5355 = vmatpush2.msra.mxu0 %v4738
    %5356 = vmatprep.subr.mxu0 0.0
    %5357 = vmatpush2.msra.mxu0 %v4737
    %5358 = vmatprep.subr.mxu0 0.0
    %5359 = vmatpush2.msra.mxu0 %v4736
    %5360 = vmatprep.mubr.f32.mxu0 %v5233
    %5361 = vmatmul.mubr.f32.gmra.mxu0 %v5232
    %v5362 = vpop.f32.mrf.mxu0
    %v5363 = vadd.f32 0.0, %v5362
    %v5364 = vpop.f32.mrf.mxu0
    %5365 = vmatprep.mubr.f32.mxu0 %v5265
    %5366 = vmatmul.mubr.f32.gmra.mxu0 %v5264
    %v5367 = vpop.f32.mrf.mxu0
    %v5368 = vadd.f32 0.0, %v5367
    %v5369 = vpop.f32.mrf.mxu0
    %5370 = vdwg.mxu0
    %5371 = vmatprep.subr.mxu0 0.0
    %5372 = vmatpush1.msra.mxu0 %v4767
    %5373 = vmatprep.subr.mxu0 0.0
    %5374 = vmatpush1.msra.mxu0 %v4766
    %5375 = vmatprep.subr.mxu0 0.0
    %5376 = vmatpush1.msra.mxu0 %v4765
    %5377 = vmatprep.subr.mxu0 0.0
    %5378 = vmatpush1.msra.mxu0 %v4764
    %5379 = vmatprep.subr.mxu0 0.0
    %5380 = vmatpush1.msra.mxu0 %v4763
    %5381 = vmatprep.subr.mxu0 0.0
    %5382 = vmatpush1.msra.mxu0 %v4762
    %5383 = vmatprep.subr.mxu0 0.0
    %5384 = vmatpush1.msra.mxu0 %v4761
    %5385 = vmatprep.subr.mxu0 0.0
    %5386 = vmatpush1.msra.mxu0 %v4760
    %5387 = vmatprep.subr.mxu0 0.0
    %5388 = vmatpush1.msra.mxu0 %v4759
    %5389 = vmatprep.subr.mxu0 0.0
    %5390 = vmatpush1.msra.mxu0 %v4758
    %5391 = vmatprep.subr.mxu0 0.0
    %5392 = vmatpush1.msra.mxu0 %v4757
    %5393 = vmatprep.subr.mxu0 0.0
    %5394 = vmatpush1.msra.mxu0 %v4756
    %5395 = vmatprep.subr.mxu0 0.0
    %5396 = vmatpush1.msra.mxu0 %v4755
    %5397 = vmatprep.subr.mxu0 0.0
    %5398 = vmatpush1.msra.mxu0 %v4754
    %5399 = vmatprep.subr.mxu0 0.0
    %5400 = vmatpush1.msra.mxu0 %v4753
    %5401 = vmatprep.subr.mxu0 0.0
    %5402 = vmatpush1.msra.mxu0 %v4752
    %5403 = vmatprep.subr.mxu0 0.0
    %5404 = vmatpush2.msra.mxu0 %v4783
    %5405 = vmatprep.subr.mxu0 0.0
    %5406 = vmatpush2.msra.mxu0 %v4782
    %5407 = vmatprep.subr.mxu0 0.0
    %5408 = vmatpush2.msra.mxu0 %v4781
    %5409 = vmatprep.subr.mxu0 0.0
    %5410 = vmatpush2.msra.mxu0 %v4780
    %5411 = vmatprep.subr.mxu0 0.0
    %5412 = vmatpush2.msra.mxu0 %v4779
    %5413 = vmatprep.subr.mxu0 0.0
    %5414 = vmatpush2.msra.mxu0 %v4778
    %5415 = vmatprep.subr.mxu0 0.0
    %5416 = vmatpush2.msra.mxu0 %v4777
    %5417 = vmatprep.subr.mxu0 0.0
    %5418 = vmatpush2.msra.mxu0 %v4776
    %5419 = vmatprep.subr.mxu0 0.0
    %5420 = vmatpush2.msra.mxu0 %v4775
    %5421 = vmatprep.subr.mxu0 0.0
    %5422 = vmatpush2.msra.mxu0 %v4774
    %5423 = vmatprep.subr.mxu0 0.0
    %5424 = vmatpush2.msra.mxu0 %v4773
    %5425 = vmatprep.subr.mxu0 0.0
    %5426 = vmatpush2.msra.mxu0 %v4772
    %5427 = vmatprep.subr.mxu0 0.0
    %5428 = vmatpush2.msra.mxu0 %v4771
    %5429 = vmatprep.subr.mxu0 0.0
    %5430 = vmatpush2.msra.mxu0 %v4770
    %5431 = vmatprep.subr.mxu0 0.0
    %5432 = vmatpush2.msra.mxu0 %v4769
    %5433 = vmatprep.subr.mxu0 0.0
    %5434 = vmatpush2.msra.mxu0 %v4768
    %5435 = vmatprep.mubr.f32.mxu0 %v5235
    %5436 = vmatmul.mubr.f32.gmra.mxu0 %v5234
    %v5437 = vpop.f32.mrf.mxu0
    %v5438 = vadd.f32 %v5363, %v5437
    %v5439 = vpop.f32.mrf.mxu0
    %5440 = vmatprep.mubr.f32.mxu0 %v5267
    %5441 = vmatmul.mubr.f32.gmra.mxu0 %v5266
    %v5442 = vpop.f32.mrf.mxu0
    %v5443 = vadd.f32 %v5368, %v5442
    %v5444 = vpop.f32.mrf.mxu0
    %5445 = vdwg.mxu0
    %5446 = vmatprep.subr.mxu0 0.0
    %5447 = vmatpush1.msra.mxu0 %v4799
    %5448 = vmatprep.subr.mxu0 0.0
    %5449 = vmatpush1.msra.mxu0 %v4798
    %5450 = vmatprep.subr.mxu0 0.0
    %5451 = vmatpush1.msra.mxu0 %v4797
    %5452 = vmatprep.subr.mxu0 0.0
    %5453 = vmatpush1.msra.mxu0 %v4796
    %5454 = vmatprep.subr.mxu0 0.0
    %5455 = vmatpush1.msra.mxu0 %v4795
    %5456 = vmatprep.subr.mxu0 0.0
    %5457 = vmatpush1.msra.mxu0 %v4794
    %5458 = vmatprep.subr.mxu0 0.0
    %5459 = vmatpush1.msra.mxu0 %v4793
    %5460 = vmatprep.subr.mxu0 0.0
    %5461 = vmatpush1.msra.mxu0 %v4792
    %5462 = vmatprep.subr.mxu0 0.0
    %5463 = vmatpush1.msra.mxu0 %v4791
    %5464 = vmatprep.subr.mxu0 0.0
    %5465 = vmatpush1.msra.mxu0 %v4790
    %5466 = vmatprep.subr.mxu0 0.0
    %5467 = vmatpush1.msra.mxu0 %v4789
    %5468 = vmatprep.subr.mxu0 0.0
    %5469 = vmatpush1.msra.mxu0 %v4788
    %5470 = vmatprep.subr.mxu0 0.0
    %5471 = vmatpush1.msra.mxu0 %v4787
    %5472 = vmatprep.subr.mxu0 0.0
    %5473 = vmatpush1.msra.mxu0 %v4786
    %5474 = vmatprep.subr.mxu0 0.0
    %5475 = vmatpush1.msra.mxu0 %v4785
    %5476 = vmatprep.subr.mxu0 0.0
    %5477 = vmatpush1.msra.mxu0 %v4784
    %5478 = vmatprep.subr.mxu0 0.0
    %5479 = vmatpush2.msra.mxu0 %v4815
    %5480 = vmatprep.subr.mxu0 0.0
    %5481 = vmatpush2.msra.mxu0 %v4814
    %5482 = vmatprep.subr.mxu0 0.0
    %5483 = vmatpush2.msra.mxu0 %v4813
    %5484 = vmatprep.subr.mxu0 0.0
    %5485 = vmatpush2.msra.mxu0 %v4812
    %5486 = vmatprep.subr.mxu0 0.0
    %5487 = vmatpush2.msra.mxu0 %v4811
    %5488 = vmatprep.subr.mxu0 0.0
    %5489 = vmatpush2.msra.mxu0 %v4810
    %5490 = vmatprep.subr.mxu0 0.0
    %5491 = vmatpush2.msra.mxu0 %v4809
    %5492 = vmatprep.subr.mxu0 0.0
    %5493 = vmatpush2.msra.mxu0 %v4808
    %5494 = vmatprep.subr.mxu0 0.0
    %5495 = vmatpush2.msra.mxu0 %v4807
    %5496 = vmatprep.subr.mxu0 0.0
    %5497 = vmatpush2.msra.mxu0 %v4806
    %5498 = vmatprep.subr.mxu0 0.0
    %5499 = vmatpush2.msra.mxu0 %v4805
    %5500 = vmatprep.subr.mxu0 0.0
    %5501 = vmatpush2.msra.mxu0 %v4804
    %5502 = vmatprep.subr.mxu0 0.0
    %5503 = vmatpush2.msra.mxu0 %v4803
    %5504 = vmatprep.subr.mxu0 0.0
    %5505 = vmatpush2.msra.mxu0 %v4802
    %5506 = vmatprep.subr.mxu0 0.0
    %5507 = vmatpush2.msra.mxu0 %v4801
    %5508 = vmatprep.subr.mxu0 0.0
    %5509 = vmatpush2.msra.mxu0 %v4800
    %5510 = vmatprep.mubr.f32.mxu0 %v5237
    %5511 = vmatmul.mubr.f32.gmra.mxu0 %v5236
    %v5512 = vpop.f32.mrf.mxu0
    %v5513 = vadd.f32 %v5438, %v5512
    %v5514 = vpop.f32.mrf.mxu0
    %5515 = vmatprep.mubr.f32.mxu0 %v5269
    %5516 = vmatmul.mubr.f32.gmra.mxu0 %v5268
    %v5517 = vpop.f32.mrf.mxu0
    %v5518 = vadd.f32 %v5443, %v5517
    %v5519 = vpop.f32.mrf.mxu0
    %5520 = vdwg.mxu0
    %5521 = vmatprep.subr.mxu0 0.0
    %5522 = vmatpush1.msra.mxu0 %v4831
    %5523 = vmatprep.subr.mxu0 0.0
    %5524 = vmatpush1.msra.mxu0 %v4830
    %5525 = vmatprep.subr.mxu0 0.0
    %5526 = vmatpush1.msra.mxu0 %v4829
    %5527 = vmatprep.subr.mxu0 0.0
    %5528 = vmatpush1.msra.mxu0 %v4828
    %5529 = vmatprep.subr.mxu0 0.0
    %5530 = vmatpush1.msra.mxu0 %v4827
    %5531 = vmatprep.subr.mxu0 0.0
    %5532 = vmatpush1.msra.mxu0 %v4826
    %5533 = vmatprep.subr.mxu0 0.0
    %5534 = vmatpush1.msra.mxu0 %v4825
    %5535 = vmatprep.subr.mxu0 0.0
    %5536 = vmatpush1.msra.mxu0 %v4824
    %5537 = vmatprep.subr.mxu0 0.0
    %5538 = vmatpush1.msra.mxu0 %v4823
    %5539 = vmatprep.subr.mxu0 0.0
    %5540 = vmatpush1.msra.mxu0 %v4822
    %5541 = vmatprep.subr.mxu0 0.0
    %5542 = vmatpush1.msra.mxu0 %v4821
    %5543 = vmatprep.subr.mxu0 0.0
    %5544 = vmatpush1.msra.mxu0 %v4820
    %5545 = vmatprep.subr.mxu0 0.0
    %5546 = vmatpush1.msra.mxu0 %v4819
    %5547 = vmatprep.subr.mxu0 0.0
    %5548 = vmatpush1.msra.mxu0 %v4818
    %5549 = vmatprep.subr.mxu0 0.0
    %5550 = vmatpush1.msra.mxu0 %v4817
    %5551 = vmatprep.subr.mxu0 0.0
    %5552 = vmatpush1.msra.mxu0 %v4816
    %5553 = vmatprep.subr.mxu0 0.0
    %5554 = vmatpush2.msra.mxu0 %v4847
    %5555 = vmatprep.subr.mxu0 0.0
    %5556 = vmatpush2.msra.mxu0 %v4846
    %5557 = vmatprep.subr.mxu0 0.0
    %5558 = vmatpush2.msra.mxu0 %v4845
    %5559 = vmatprep.subr.mxu0 0.0
    %5560 = vmatpush2.msra.mxu0 %v4844
    %5561 = vmatprep.subr.mxu0 0.0
    %5562 = vmatpush2.msra.mxu0 %v4843
    %5563 = vmatprep.subr.mxu0 0.0
    %5564 = vmatpush2.msra.mxu0 %v4842
    %5565 = vmatprep.subr.mxu0 0.0
    %5566 = vmatpush2.msra.mxu0 %v4841
    %5567 = vmatprep.subr.mxu0 0.0
    %5568 = vmatpush2.msra.mxu0 %v4840
    %5569 = vmatprep.subr.mxu0 0.0
    %5570 = vmatpush2.msra.mxu0 %v4839
    %5571 = vmatprep.subr.mxu0 0.0
    %5572 = vmatpush2.msra.mxu0 %v4838
    %5573 = vmatprep.subr.mxu0 0.0
    %5574 = vmatpush2.msra.mxu0 %v4837
    %5575 = vmatprep.subr.mxu0 0.0
    %5576 = vmatpush2.msra.mxu0 %v4836
    %5577 = vmatprep.subr.mxu0 0.0
    %5578 = vmatpush2.msra.mxu0 %v4835
    %5579 = vmatprep.subr.mxu0 0.0
    %5580 = vmatpush2.msra.mxu0 %v4834
    %5581 = vmatprep.subr.mxu0 0.0
    %5582 = vmatpush2.msra.mxu0 %v4833
    %5583 = vmatprep.subr.mxu0 0.0
    %5584 = vmatpush2.msra.mxu0 %v4832
    %5585 = vmatprep.mubr.f32.mxu0 %v5239
    %5586 = vmatmul.mubr.f32.gmra.mxu0 %v5238
    %v5587 = vpop.f32.mrf.mxu0
    %v5588 = vadd.f32 %v5513, %v5587
    %v5589 = vpop.f32.mrf.mxu0
    %5590 = vmatprep.mubr.f32.mxu0 %v5271
    %5591 = vmatmul.mubr.f32.gmra.mxu0 %v5270
    %v5592 = vpop.f32.mrf.mxu0
    %v5593 = vadd.f32 %v5518, %v5592
    %v5594 = vpop.f32.mrf.mxu0
    %5595 = vdwg.mxu0
    %5596 = vmatprep.subr.mxu0 0.0
    %5597 = vmatpush1.msra.mxu0 %v4863
    %5598 = vmatprep.subr.mxu0 0.0
    %5599 = vmatpush1.msra.mxu0 %v4862
    %5600 = vmatprep.subr.mxu0 0.0
    %5601 = vmatpush1.msra.mxu0 %v4861
    %5602 = vmatprep.subr.mxu0 0.0
    %5603 = vmatpush1.msra.mxu0 %v4860
    %5604 = vmatprep.subr.mxu0 0.0
    %5605 = vmatpush1.msra.mxu0 %v4859
    %5606 = vmatprep.subr.mxu0 0.0
    %5607 = vmatpush1.msra.mxu0 %v4858
    %5608 = vmatprep.subr.mxu0 0.0
    %5609 = vmatpush1.msra.mxu0 %v4857
    %5610 = vmatprep.subr.mxu0 0.0
    %5611 = vmatpush1.msra.mxu0 %v4856
    %5612 = vmatprep.subr.mxu0 0.0
    %5613 = vmatpush1.msra.mxu0 %v4855
    %5614 = vmatprep.subr.mxu0 0.0
    %5615 = vmatpush1.msra.mxu0 %v4854
    %5616 = vmatprep.subr.mxu0 0.0
    %5617 = vmatpush1.msra.mxu0 %v4853
    %5618 = vmatprep.subr.mxu0 0.0
    %5619 = vmatpush1.msra.mxu0 %v4852
    %5620 = vmatprep.subr.mxu0 0.0
    %5621 = vmatpush1.msra.mxu0 %v4851
    %5622 = vmatprep.subr.mxu0 0.0
    %5623 = vmatpush1.msra.mxu0 %v4850
    %5624 = vmatprep.subr.mxu0 0.0
    %5625 = vmatpush1.msra.mxu0 %v4849
    %5626 = vmatprep.subr.mxu0 0.0
    %5627 = vmatpush1.msra.mxu0 %v4848
    %5628 = vmatprep.subr.mxu0 0.0
    %5629 = vmatpush2.msra.mxu0 %v4879
    %5630 = vmatprep.subr.mxu0 0.0
    %5631 = vmatpush2.msra.mxu0 %v4878
    %5632 = vmatprep.subr.mxu0 0.0
    %5633 = vmatpush2.msra.mxu0 %v4877
    %5634 = vmatprep.subr.mxu0 0.0
    %5635 = vmatpush2.msra.mxu0 %v4876
    %5636 = vmatprep.subr.mxu0 0.0
    %5637 = vmatpush2.msra.mxu0 %v4875
    %5638 = vmatprep.subr.mxu0 0.0
    %5639 = vmatpush2.msra.mxu0 %v4874
    %5640 = vmatprep.subr.mxu0 0.0
    %5641 = vmatpush2.msra.mxu0 %v4873
    %5642 = vmatprep.subr.mxu0 0.0
    %5643 = vmatpush2.msra.mxu0 %v4872
    %5644 = vmatprep.subr.mxu0 0.0
    %5645 = vmatpush2.msra.mxu0 %v4871
    %5646 = vmatprep.subr.mxu0 0.0
    %5647 = vmatpush2.msra.mxu0 %v4870
    %5648 = vmatprep.subr.mxu0 0.0
    %5649 = vmatpush2.msra.mxu0 %v4869
    %5650 = vmatprep.subr.mxu0 0.0
    %5651 = vmatpush2.msra.mxu0 %v4868
    %5652 = vmatprep.subr.mxu0 0.0
    %5653 = vmatpush2.msra.mxu0 %v4867
    %5654 = vmatprep.subr.mxu0 0.0
    %5655 = vmatpush2.msra.mxu0 %v4866
    %5656 = vmatprep.subr.mxu0 0.0
    %5657 = vmatpush2.msra.mxu0 %v4865
    %5658 = vmatprep.subr.mxu0 0.0
    %5659 = vmatpush2.msra.mxu0 %v4864
    %5660 = vmatprep.mubr.f32.mxu0 %v5241
    %5661 = vmatmul.mubr.f32.gmra.mxu0 %v5240
    %v5662 = vpop.f32.mrf.mxu0
    %v5663 = vadd.f32 %v5588, %v5662
    %v5664 = vpop.f32.mrf.mxu0
    %5665 = vmatprep.mubr.f32.mxu0 %v5273
    %5666 = vmatmul.mubr.f32.gmra.mxu0 %v5272
    %v5667 = vpop.f32.mrf.mxu0
    %v5668 = vadd.f32 %v5593, %v5667
    %v5669 = vpop.f32.mrf.mxu0
    %5670 = vdwg.mxu0
    %5671 = vmatprep.subr.mxu0 0.0
    %5672 = vmatpush1.msra.mxu0 %v4895
    %5673 = vmatprep.subr.mxu0 0.0
    %5674 = vmatpush1.msra.mxu0 %v4894
    %5675 = vmatprep.subr.mxu0 0.0
    %5676 = vmatpush1.msra.mxu0 %v4893
    %5677 = vmatprep.subr.mxu0 0.0
    %5678 = vmatpush1.msra.mxu0 %v4892
    %5679 = vmatprep.subr.mxu0 0.0
    %5680 = vmatpush1.msra.mxu0 %v4891
    %5681 = vmatprep.subr.mxu0 0.0
    %5682 = vmatpush1.msra.mxu0 %v4890
    %5683 = vmatprep.subr.mxu0 0.0
    %5684 = vmatpush1.msra.mxu0 %v4889
    %5685 = vmatprep.subr.mxu0 0.0
    %5686 = vmatpush1.msra.mxu0 %v4888
    %5687 = vmatprep.subr.mxu0 0.0
    %5688 = vmatpush1.msra.mxu0 %v4887
    %5689 = vmatprep.subr.mxu0 0.0
    %5690 = vmatpush1.msra.mxu0 %v4886
    %5691 = vmatprep.subr.mxu0 0.0
    %5692 = vmatpush1.msra.mxu0 %v4885
    %5693 = vmatprep.subr.mxu0 0.0
    %5694 = vmatpush1.msra.mxu0 %v4884
    %5695 = vmatprep.subr.mxu0 0.0
    %5696 = vmatpush1.msra.mxu0 %v4883
    %5697 = vmatprep.subr.mxu0 0.0
    %5698 = vmatpush1.msra.mxu0 %v4882
    %5699 = vmatprep.subr.mxu0 0.0
    %5700 = vmatpush1.msra.mxu0 %v4881
    %5701 = vmatprep.subr.mxu0 0.0
    %5702 = vmatpush1.msra.mxu0 %v4880
    %5703 = vmatprep.subr.mxu0 0.0
    %5704 = vmatpush2.msra.mxu0 %v4911
    %5705 = vmatprep.subr.mxu0 0.0
    %5706 = vmatpush2.msra.mxu0 %v4910
    %5707 = vmatprep.subr.mxu0 0.0
    %5708 = vmatpush2.msra.mxu0 %v4909
    %5709 = vmatprep.subr.mxu0 0.0
    %5710 = vmatpush2.msra.mxu0 %v4908
    %5711 = vmatprep.subr.mxu0 0.0
    %5712 = vmatpush2.msra.mxu0 %v4907
    %5713 = vmatprep.subr.mxu0 0.0
    %5714 = vmatpush2.msra.mxu0 %v4906
    %5715 = vmatprep.subr.mxu0 0.0
    %5716 = vmatpush2.msra.mxu0 %v4905
    %5717 = vmatprep.subr.mxu0 0.0
    %5718 = vmatpush2.msra.mxu0 %v4904
    %5719 = vmatprep.subr.mxu0 0.0
    %5720 = vmatpush2.msra.mxu0 %v4903
    %5721 = vmatprep.subr.mxu0 0.0
    %5722 = vmatpush2.msra.mxu0 %v4902
    %5723 = vmatprep.subr.mxu0 0.0
    %5724 = vmatpush2.msra.mxu0 %v4901
    %5725 = vmatprep.subr.mxu0 0.0
    %5726 = vmatpush2.msra.mxu0 %v4900
    %5727 = vmatprep.subr.mxu0 0.0
    %5728 = vmatpush2.msra.mxu0 %v4899
    %5729 = vmatprep.subr.mxu0 0.0
    %5730 = vmatpush2.msra.mxu0 %v4898
    %5731 = vmatprep.subr.mxu0 0.0
    %5732 = vmatpush2.msra.mxu0 %v4897
    %5733 = vmatprep.subr.mxu0 0.0
    %5734 = vmatpush2.msra.mxu0 %v4896
    %5735 = vmatprep.mubr.f32.mxu0 %v5243
    %5736 = vmatmul.mubr.f32.gmra.mxu0 %v5242
    %v5737 = vpop.f32.mrf.mxu0
    %v5738 = vadd.f32 %v5663, %v5737
    %v5739 = vpop.f32.mrf.mxu0
    %5740 = vmatprep.mubr.f32.mxu0 %v5275
    %5741 = vmatmul.mubr.f32.gmra.mxu0 %v5274
    %v5742 = vpop.f32.mrf.mxu0
    %v5743 = vadd.f32 %v5668, %v5742
    %v5744 = vpop.f32.mrf.mxu0
    %5745 = vdwg.mxu0
    %5746 = vmatprep.subr.mxu0 0.0
    %5747 = vmatpush1.msra.mxu0 %v4927
    %5748 = vmatprep.subr.mxu0 0.0
    %5749 = vmatpush1.msra.mxu0 %v4926
    %5750 = vmatprep.subr.mxu0 0.0
    %5751 = vmatpush1.msra.mxu0 %v4925
    %5752 = vmatprep.subr.mxu0 0.0
    %5753 = vmatpush1.msra.mxu0 %v4924
    %5754 = vmatprep.subr.mxu0 0.0
    %5755 = vmatpush1.msra.mxu0 %v4923
    %5756 = vmatprep.subr.mxu0 0.0
    %5757 = vmatpush1.msra.mxu0 %v4922
    %5758 = vmatprep.subr.mxu0 0.0
    %5759 = vmatpush1.msra.mxu0 %v4921
    %5760 = vmatprep.subr.mxu0 0.0
    %5761 = vmatpush1.msra.mxu0 %v4920
    %5762 = vmatprep.subr.mxu0 0.0
    %5763 = vmatpush1.msra.mxu0 %v4919
    %5764 = vmatprep.subr.mxu0 0.0
    %5765 = vmatpush1.msra.mxu0 %v4918
    %5766 = vmatprep.subr.mxu0 0.0
    %5767 = vmatpush1.msra.mxu0 %v4917
    %5768 = vmatprep.subr.mxu0 0.0
    %5769 = vmatpush1.msra.mxu0 %v4916
    %5770 = vmatprep.subr.mxu0 0.0
    %5771 = vmatpush1.msra.mxu0 %v4915
    %5772 = vmatprep.subr.mxu0 0.0
    %5773 = vmatpush1.msra.mxu0 %v4914
    %5774 = vmatprep.subr.mxu0 0.0
    %5775 = vmatpush1.msra.mxu0 %v4913
    %5776 = vmatprep.subr.mxu0 0.0
    %5777 = vmatpush1.msra.mxu0 %v4912
    %5778 = vmatprep.subr.mxu0 0.0
    %5779 = vmatpush2.msra.mxu0 %v4943
    %5780 = vmatprep.subr.mxu0 0.0
    %5781 = vmatpush2.msra.mxu0 %v4942
    %5782 = vmatprep.subr.mxu0 0.0
    %5783 = vmatpush2.msra.mxu0 %v4941
    %5784 = vmatprep.subr.mxu0 0.0
    %5785 = vmatpush2.msra.mxu0 %v4940
    %5786 = vmatprep.subr.mxu0 0.0
    %5787 = vmatpush2.msra.mxu0 %v4939
    %5788 = vmatprep.subr.mxu0 0.0
    %5789 = vmatpush2.msra.mxu0 %v4938
    %5790 = vmatprep.subr.mxu0 0.0
    %5791 = vmatpush2.msra.mxu0 %v4937
    %5792 = vmatprep.subr.mxu0 0.0
    %5793 = vmatpush2.msra.mxu0 %v4936
    %5794 = vmatprep.subr.mxu0 0.0
    %5795 = vmatpush2.msra.mxu0 %v4935
    %5796 = vmatprep.subr.mxu0 0.0
    %5797 = vmatpush2.msra.mxu0 %v4934
    %5798 = vmatprep.subr.mxu0 0.0
    %5799 = vmatpush2.msra.mxu0 %v4933
    %5800 = vmatprep.subr.mxu0 0.0
    %5801 = vmatpush2.msra.mxu0 %v4932
    %5802 = vmatprep.subr.mxu0 0.0
    %5803 = vmatpush2.msra.mxu0 %v4931
    %5804 = vmatprep.subr.mxu0 0.0
    %5805 = vmatpush2.msra.mxu0 %v4930
    %5806 = vmatprep.subr.mxu0 0.0
    %5807 = vmatpush2.msra.mxu0 %v4929
    %5808 = vmatprep.subr.mxu0 0.0
    %5809 = vmatpush2.msra.mxu0 %v4928
    %5810 = vmatprep.mubr.f32.mxu0 %v5245
    %5811 = vmatmul.mubr.f32.gmra.mxu0 %v5244
    %v5812 = vpop.f32.mrf.mxu0
    %v5813 = vadd.f32 %v5738, %v5812
    %v5814 = vpop.f32.mrf.mxu0
    %5815 = vmatprep.mubr.f32.mxu0 %v5277
    %5816 = vmatmul.mubr.f32.gmra.mxu0 %v5276
    %v5817 = vpop.f32.mrf.mxu0
    %v5818 = vadd.f32 %v5743, %v5817
    %v5819 = vpop.f32.mrf.mxu0
    %5820 = vdwg.mxu0
    %5821 = vmatprep.subr.mxu0 0.0
    %5822 = vmatpush1.msra.mxu0 %v4959
    %5823 = vmatprep.subr.mxu0 0.0
    %5824 = vmatpush1.msra.mxu0 %v4958
    %5825 = vmatprep.subr.mxu0 0.0
    %5826 = vmatpush1.msra.mxu0 %v4957
    %5827 = vmatprep.subr.mxu0 0.0
    %5828 = vmatpush1.msra.mxu0 %v4956
    %5829 = vmatprep.subr.mxu0 0.0
    %5830 = vmatpush1.msra.mxu0 %v4955
    %5831 = vmatprep.subr.mxu0 0.0
    %5832 = vmatpush1.msra.mxu0 %v4954
    %5833 = vmatprep.subr.mxu0 0.0
    %5834 = vmatpush1.msra.mxu0 %v4953
    %5835 = vmatprep.subr.mxu0 0.0
    %5836 = vmatpush1.msra.mxu0 %v4952
    %5837 = vmatprep.subr.mxu0 0.0
    %5838 = vmatpush1.msra.mxu0 %v4951
    %5839 = vmatprep.subr.mxu0 0.0
    %5840 = vmatpush1.msra.mxu0 %v4950
    %5841 = vmatprep.subr.mxu0 0.0
    %5842 = vmatpush1.msra.mxu0 %v4949
    %5843 = vmatprep.subr.mxu0 0.0
    %5844 = vmatpush1.msra.mxu0 %v4948
    %5845 = vmatprep.subr.mxu0 0.0
    %5846 = vmatpush1.msra.mxu0 %v4947
    %5847 = vmatprep.subr.mxu0 0.0
    %5848 = vmatpush1.msra.mxu0 %v4946
    %5849 = vmatprep.subr.mxu0 0.0
    %5850 = vmatpush1.msra.mxu0 %v4945
    %5851 = vmatprep.subr.mxu0 0.0
    %5852 = vmatpush1.msra.mxu0 %v4944
    %5853 = vmatprep.subr.mxu0 0.0
    %5854 = vmatpush2.msra.mxu0 %v4975
    %5855 = vmatprep.subr.mxu0 0.0
    %5856 = vmatpush2.msra.mxu0 %v4974
    %5857 = vmatprep.subr.mxu0 0.0
    %5858 = vmatpush2.msra.mxu0 %v4973
    %5859 = vmatprep.subr.mxu0 0.0
    %5860 = vmatpush2.msra.mxu0 %v4972
    %5861 = vmatprep.subr.mxu0 0.0
    %5862 = vmatpush2.msra.mxu0 %v4971
    %5863 = vmatprep.subr.mxu0 0.0
    %5864 = vmatpush2.msra.mxu0 %v4970
    %5865 = vmatprep.subr.mxu0 0.0
    %5866 = vmatpush2.msra.mxu0 %v4969
    %5867 = vmatprep.subr.mxu0 0.0
    %5868 = vmatpush2.msra.mxu0 %v4968
    %5869 = vmatprep.subr.mxu0 0.0
    %5870 = vmatpush2.msra.mxu0 %v4967
    %5871 = vmatprep.subr.mxu0 0.0
    %5872 = vmatpush2.msra.mxu0 %v4966
    %5873 = vmatprep.subr.mxu0 0.0
    %5874 = vmatpush2.msra.mxu0 %v4965
    %5875 = vmatprep.subr.mxu0 0.0
    %5876 = vmatpush2.msra.mxu0 %v4964
    %5877 = vmatprep.subr.mxu0 0.0
    %5878 = vmatpush2.msra.mxu0 %v4963
    %5879 = vmatprep.subr.mxu0 0.0
    %5880 = vmatpush2.msra.mxu0 %v4962
    %5881 = vmatprep.subr.mxu0 0.0
    %5882 = vmatpush2.msra.mxu0 %v4961
    %5883 = vmatprep.subr.mxu0 0.0
    %5884 = vmatpush2.msra.mxu0 %v4960
    %5885 = vmatprep.mubr.f32.mxu0 %v5247
    %5886 = vmatmul.mubr.f32.gmra.mxu0 %v5246
    %v5887 = vpop.f32.mrf.mxu0
    %v5888 = vadd.f32 %v5813, %v5887
    %v5889 = vpop.f32.mrf.mxu0
    %5890 = vmatprep.mubr.f32.mxu0 %v5279
    %5891 = vmatmul.mubr.f32.gmra.mxu0 %v5278
    %v5892 = vpop.f32.mrf.mxu0
    %v5893 = vadd.f32 %v5818, %v5892
    %v5894 = vpop.f32.mrf.mxu0
    %5895 = vdwg.mxu0
    %5896 = vmatprep.subr.mxu0 0.0
    %5897 = vmatpush1.msra.mxu0 %v4991
    %5898 = vmatprep.subr.mxu0 0.0
    %5899 = vmatpush1.msra.mxu0 %v4990
    %5900 = vmatprep.subr.mxu0 0.0
    %5901 = vmatpush1.msra.mxu0 %v4989
    %5902 = vmatprep.subr.mxu0 0.0
    %5903 = vmatpush1.msra.mxu0 %v4988
    %5904 = vmatprep.subr.mxu0 0.0
    %5905 = vmatpush1.msra.mxu0 %v4987
    %5906 = vmatprep.subr.mxu0 0.0
    %5907 = vmatpush1.msra.mxu0 %v4986
    %5908 = vmatprep.subr.mxu0 0.0
    %5909 = vmatpush1.msra.mxu0 %v4985
    %5910 = vmatprep.subr.mxu0 0.0
    %5911 = vmatpush1.msra.mxu0 %v4984
    %5912 = vmatprep.subr.mxu0 0.0
    %5913 = vmatpush1.msra.mxu0 %v4983
    %5914 = vmatprep.subr.mxu0 0.0
    %5915 = vmatpush1.msra.mxu0 %v4982
    %5916 = vmatprep.subr.mxu0 0.0
    %5917 = vmatpush1.msra.mxu0 %v4981
    %5918 = vmatprep.subr.mxu0 0.0
    %5919 = vmatpush1.msra.mxu0 %v4980
    %5920 = vmatprep.subr.mxu0 0.0
    %5921 = vmatpush1.msra.mxu0 %v4979
    %5922 = vmatprep.subr.mxu0 0.0
    %5923 = vmatpush1.msra.mxu0 %v4978
    %5924 = vmatprep.subr.mxu0 0.0
    %5925 = vmatpush1.msra.mxu0 %v4977
    %5926 = vmatprep.subr.mxu0 0.0
    %5927 = vmatpush1.msra.mxu0 %v4976
    %5928 = vmatprep.subr.mxu0 0.0
    %5929 = vmatpush2.msra.mxu0 %v5007
    %5930 = vmatprep.subr.mxu0 0.0
    %5931 = vmatpush2.msra.mxu0 %v5006
    %5932 = vmatprep.subr.mxu0 0.0
    %5933 = vmatpush2.msra.mxu0 %v5005
    %5934 = vmatprep.subr.mxu0 0.0
    %5935 = vmatpush2.msra.mxu0 %v5004
    %5936 = vmatprep.subr.mxu0 0.0
    %5937 = vmatpush2.msra.mxu0 %v5003
    %5938 = vmatprep.subr.mxu0 0.0
    %5939 = vmatpush2.msra.mxu0 %v5002
    %5940 = vmatprep.subr.mxu0 0.0
    %5941 = vmatpush2.msra.mxu0 %v5001
    %5942 = vmatprep.subr.mxu0 0.0
    %5943 = vmatpush2.msra.mxu0 %v5000
    %5944 = vmatprep.subr.mxu0 0.0
    %5945 = vmatpush2.msra.mxu0 %v4999
    %5946 = vmatprep.subr.mxu0 0.0
    %5947 = vmatpush2.msra.mxu0 %v4998
    %5948 = vmatprep.subr.mxu0 0.0
    %5949 = vmatpush2.msra.mxu0 %v4997
    %5950 = vmatprep.subr.mxu0 0.0
    %5951 = vmatpush2.msra.mxu0 %v4996
    %5952 = vmatprep.subr.mxu0 0.0
    %5953 = vmatpush2.msra.mxu0 %v4995
    %5954 = vmatprep.subr.mxu0 0.0
    %5955 = vmatpush2.msra.mxu0 %v4994
    %5956 = vmatprep.subr.mxu0 0.0
    %5957 = vmatpush2.msra.mxu0 %v4993
    %5958 = vmatprep.subr.mxu0 0.0
    %5959 = vmatpush2.msra.mxu0 %v4992
    %5960 = vmatprep.mubr.f32.mxu0 %v5249
    %5961 = vmatmul.mubr.f32.gmra.mxu0 %v5248
    %v5962 = vpop.f32.mrf.mxu0
    %v5963 = vadd.f32 %v5888, %v5962
    %v5964 = vpop.f32.mrf.mxu0
    %5965 = vmatprep.mubr.f32.mxu0 %v5281
    %5966 = vmatmul.mubr.f32.gmra.mxu0 %v5280
    %v5967 = vpop.f32.mrf.mxu0
    %v5968 = vadd.f32 %v5893, %v5967
    %v5969 = vpop.f32.mrf.mxu0
    %5970 = vdwg.mxu0
    %5971 = vmatprep.subr.mxu0 0.0
    %5972 = vmatpush1.msra.mxu0 %v5023
    %5973 = vmatprep.subr.mxu0 0.0
    %5974 = vmatpush1.msra.mxu0 %v5022
    %5975 = vmatprep.subr.mxu0 0.0
    %5976 = vmatpush1.msra.mxu0 %v5021
    %5977 = vmatprep.subr.mxu0 0.0
    %5978 = vmatpush1.msra.mxu0 %v5020
    %5979 = vmatprep.subr.mxu0 0.0
    %5980 = vmatpush1.msra.mxu0 %v5019
    %5981 = vmatprep.subr.mxu0 0.0
    %5982 = vmatpush1.msra.mxu0 %v5018
    %5983 = vmatprep.subr.mxu0 0.0
    %5984 = vmatpush1.msra.mxu0 %v5017
    %5985 = vmatprep.subr.mxu0 0.0
    %5986 = vmatpush1.msra.mxu0 %v5016
    %5987 = vmatprep.subr.mxu0 0.0
    %5988 = vmatpush1.msra.mxu0 %v5015
    %5989 = vmatprep.subr.mxu0 0.0
    %5990 = vmatpush1.msra.mxu0 %v5014
    %5991 = vmatprep.subr.mxu0 0.0
    %5992 = vmatpush1.msra.mxu0 %v5013
    %5993 = vmatprep.subr.mxu0 0.0
    %5994 = vmatpush1.msra.mxu0 %v5012
    %5995 = vmatprep.subr.mxu0 0.0
    %5996 = vmatpush1.msra.mxu0 %v5011
    %5997 = vmatprep.subr.mxu0 0.0
    %5998 = vmatpush1.msra.mxu0 %v5010
    %5999 = vmatprep.subr.mxu0 0.0
    %6000 = vmatpush1.msra.mxu0 %v5009
    %6001 = vmatprep.subr.mxu0 0.0
    %6002 = vmatpush1.msra.mxu0 %v5008
    %6003 = vmatprep.subr.mxu0 0.0
    %6004 = vmatpush2.msra.mxu0 %v5039
    %6005 = vmatprep.subr.mxu0 0.0
    %6006 = vmatpush2.msra.mxu0 %v5038
    %6007 = vmatprep.subr.mxu0 0.0
    %6008 = vmatpush2.msra.mxu0 %v5037
    %6009 = vmatprep.subr.mxu0 0.0
    %6010 = vmatpush2.msra.mxu0 %v5036
    %6011 = vmatprep.subr.mxu0 0.0
    %6012 = vmatpush2.msra.mxu0 %v5035
    %6013 = vmatprep.subr.mxu0 0.0
    %6014 = vmatpush2.msra.mxu0 %v5034
    %6015 = vmatprep.subr.mxu0 0.0
    %6016 = vmatpush2.msra.mxu0 %v5033
    %6017 = vmatprep.subr.mxu0 0.0
    %6018 = vmatpush2.msra.mxu0 %v5032
    %6019 = vmatprep.subr.mxu0 0.0
    %6020 = vmatpush2.msra.mxu0 %v5031
    %6021 = vmatprep.subr.mxu0 0.0
    %6022 = vmatpush2.msra.mxu0 %v5030
    %6023 = vmatprep.subr.mxu0 0.0
    %6024 = vmatpush2.msra.mxu0 %v5029
    %6025 = vmatprep.subr.mxu0 0.0
    %6026 = vmatpush2.msra.mxu0 %v5028
    %6027 = vmatprep.subr.mxu0 0.0
    %6028 = vmatpush2.msra.mxu0 %v5027
    %6029 = vmatprep.subr.mxu0 0.0
    %6030 = vmatpush2.msra.mxu0 %v5026
    %6031 = vmatprep.subr.mxu0 0.0
    %6032 = vmatpush2.msra.mxu0 %v5025
    %6033 = vmatprep.subr.mxu0 0.0
    %6034 = vmatpush2.msra.mxu0 %v5024
    %6035 = vmatprep.mubr.f32.mxu0 %v5251
    %6036 = vmatmul.mubr.f32.gmra.mxu0 %v5250
    %v6037 = vpop.f32.mrf.mxu0
    %v6038 = vadd.f32 %v5963, %v6037
    %v6039 = vpop.f32.mrf.mxu0
    %6040 = vmatprep.mubr.f32.mxu0 %v5283
    %6041 = vmatmul.mubr.f32.gmra.mxu0 %v5282
    %v6042 = vpop.f32.mrf.mxu0
    %v6043 = vadd.f32 %v5968, %v6042
    %v6044 = vpop.f32.mrf.mxu0
    %6045 = vdwg.mxu0
    %6046 = vmatprep.subr.mxu0 0.0
    %6047 = vmatpush1.msra.mxu0 %v5055
    %6048 = vmatprep.subr.mxu0 0.0
    %6049 = vmatpush1.msra.mxu0 %v5054
    %6050 = vmatprep.subr.mxu0 0.0
    %6051 = vmatpush1.msra.mxu0 %v5053
    %6052 = vmatprep.subr.mxu0 0.0
    %6053 = vmatpush1.msra.mxu0 %v5052
    %6054 = vmatprep.subr.mxu0 0.0
    %6055 = vmatpush1.msra.mxu0 %v5051
    %6056 = vmatprep.subr.mxu0 0.0
    %6057 = vmatpush1.msra.mxu0 %v5050
    %6058 = vmatprep.subr.mxu0 0.0
    %6059 = vmatpush1.msra.mxu0 %v5049
    %6060 = vmatprep.subr.mxu0 0.0
    %6061 = vmatpush1.msra.mxu0 %v5048
    %6062 = vmatprep.subr.mxu0 0.0
    %6063 = vmatpush1.msra.mxu0 %v5047
    %6064 = vmatprep.subr.mxu0 0.0
    %6065 = vmatpush1.msra.mxu0 %v5046
    %6066 = vmatprep.subr.mxu0 0.0
    %6067 = vmatpush1.msra.mxu0 %v5045
    %6068 = vmatprep.subr.mxu0 0.0
    %6069 = vmatpush1.msra.mxu0 %v5044
    %6070 = vmatprep.subr.mxu0 0.0
    %6071 = vmatpush1.msra.mxu0 %v5043
    %6072 = vmatprep.subr.mxu0 0.0
    %6073 = vmatpush1.msra.mxu0 %v5042
    %6074 = vmatprep.subr.mxu0 0.0
    %6075 = vmatpush1.msra.mxu0 %v5041
    %6076 = vmatprep.subr.mxu0 0.0
    %6077 = vmatpush1.msra.mxu0 %v5040
    %6078 = vmatprep.subr.mxu0 0.0
    %6079 = vmatpush2.msra.mxu0 %v5071
    %6080 = vmatprep.subr.mxu0 0.0
    %6081 = vmatpush2.msra.mxu0 %v5070
    %6082 = vmatprep.subr.mxu0 0.0
    %6083 = vmatpush2.msra.mxu0 %v5069
    %6084 = vmatprep.subr.mxu0 0.0
    %6085 = vmatpush2.msra.mxu0 %v5068
    %6086 = vmatprep.subr.mxu0 0.0
    %6087 = vmatpush2.msra.mxu0 %v5067
    %6088 = vmatprep.subr.mxu0 0.0
    %6089 = vmatpush2.msra.mxu0 %v5066
    %6090 = vmatprep.subr.mxu0 0.0
    %6091 = vmatpush2.msra.mxu0 %v5065
    %6092 = vmatprep.subr.mxu0 0.0
    %6093 = vmatpush2.msra.mxu0 %v5064
    %6094 = vmatprep.subr.mxu0 0.0
    %6095 = vmatpush2.msra.mxu0 %v5063
    %6096 = vmatprep.subr.mxu0 0.0
    %6097 = vmatpush2.msra.mxu0 %v5062
    %6098 = vmatprep.subr.mxu0 0.0
    %6099 = vmatpush2.msra.mxu0 %v5061
    %6100 = vmatprep.subr.mxu0 0.0
    %6101 = vmatpush2.msra.mxu0 %v5060
    %6102 = vmatprep.subr.mxu0 0.0
    %6103 = vmatpush2.msra.mxu0 %v5059
    %6104 = vmatprep.subr.mxu0 0.0
    %6105 = vmatpush2.msra.mxu0 %v5058
    %6106 = vmatprep.subr.mxu0 0.0
    %6107 = vmatpush2.msra.mxu0 %v5057
    %6108 = vmatprep.subr.mxu0 0.0
    %6109 = vmatpush2.msra.mxu0 %v5056
    %6110 = vmatprep.mubr.f32.mxu0 %v5253
    %6111 = vmatmul.mubr.f32.gmra.mxu0 %v5252
    %v6112 = vpop.f32.mrf.mxu0
    %v6113 = vadd.f32 %v6038, %v6112
    %v6114 = vpop.f32.mrf.mxu0
    %6115 = vmatprep.mubr.f32.mxu0 %v5285
    %6116 = vmatmul.mubr.f32.gmra.mxu0 %v5284
    %v6117 = vpop.f32.mrf.mxu0
    %v6118 = vadd.f32 %v6043, %v6117
    %v6119 = vpop.f32.mrf.mxu0
    %6120 = vdwg.mxu0
    %6121 = vmatprep.subr.mxu0 0.0
    %6122 = vmatpush1.msra.mxu0 %v5087
    %6123 = vmatprep.subr.mxu0 0.0
    %6124 = vmatpush1.msra.mxu0 %v5086
    %6125 = vmatprep.subr.mxu0 0.0
    %6126 = vmatpush1.msra.mxu0 %v5085
    %6127 = vmatprep.subr.mxu0 0.0
    %6128 = vmatpush1.msra.mxu0 %v5084
    %6129 = vmatprep.subr.mxu0 0.0
    %6130 = vmatpush1.msra.mxu0 %v5083
    %6131 = vmatprep.subr.mxu0 0.0
    %6132 = vmatpush1.msra.mxu0 %v5082
    %6133 = vmatprep.subr.mxu0 0.0
    %6134 = vmatpush1.msra.mxu0 %v5081
    %6135 = vmatprep.subr.mxu0 0.0
    %6136 = vmatpush1.msra.mxu0 %v5080
    %6137 = vmatprep.subr.mxu0 0.0
    %6138 = vmatpush1.msra.mxu0 %v5079
    %6139 = vmatprep.subr.mxu0 0.0
    %6140 = vmatpush1.msra.mxu0 %v5078
    %6141 = vmatprep.subr.mxu0 0.0
    %6142 = vmatpush1.msra.mxu0 %v5077
    %6143 = vmatprep.subr.mxu0 0.0
    %6144 = vmatpush1.msra.mxu0 %v5076
    %6145 = vmatprep.subr.mxu0 0.0
    %6146 = vmatpush1.msra.mxu0 %v5075
    %6147 = vmatprep.subr.mxu0 0.0
    %6148 = vmatpush1.msra.mxu0 %v5074
    %6149 = vmatprep.subr.mxu0 0.0
    %6150 = vmatpush1.msra.mxu0 %v5073
    %6151 = vmatprep.subr.mxu0 0.0
    %6152 = vmatpush1.msra.mxu0 %v5072
    %6153 = vmatprep.subr.mxu0 0.0
    %6154 = vmatpush2.msra.mxu0 %v5103
    %6155 = vmatprep.subr.mxu0 0.0
    %6156 = vmatpush2.msra.mxu0 %v5102
    %6157 = vmatprep.subr.mxu0 0.0
    %6158 = vmatpush2.msra.mxu0 %v5101
    %6159 = vmatprep.subr.mxu0 0.0
    %6160 = vmatpush2.msra.mxu0 %v5100
    %6161 = vmatprep.subr.mxu0 0.0
    %6162 = vmatpush2.msra.mxu0 %v5099
    %6163 = vmatprep.subr.mxu0 0.0
    %6164 = vmatpush2.msra.mxu0 %v5098
    %6165 = vmatprep.subr.mxu0 0.0
    %6166 = vmatpush2.msra.mxu0 %v5097
    %6167 = vmatprep.subr.mxu0 0.0
    %6168 = vmatpush2.msra.mxu0 %v5096
    %6169 = vmatprep.subr.mxu0 0.0
    %6170 = vmatpush2.msra.mxu0 %v5095
    %6171 = vmatprep.subr.mxu0 0.0
    %6172 = vmatpush2.msra.mxu0 %v5094
    %6173 = vmatprep.subr.mxu0 0.0
    %6174 = vmatpush2.msra.mxu0 %v5093
    %6175 = vmatprep.subr.mxu0 0.0
    %6176 = vmatpush2.msra.mxu0 %v5092
    %6177 = vmatprep.subr.mxu0 0.0
    %6178 = vmatpush2.msra.mxu0 %v5091
    %6179 = vmatprep.subr.mxu0 0.0
    %6180 = vmatpush2.msra.mxu0 %v5090
    %6181 = vmatprep.subr.mxu0 0.0
    %6182 = vmatpush2.msra.mxu0 %v5089
    %6183 = vmatprep.subr.mxu0 0.0
    %6184 = vmatpush2.msra.mxu0 %v5088
    %6185 = vmatprep.mubr.f32.mxu0 %v5255
    %6186 = vmatmul.mubr.f32.gmra.mxu0 %v5254
    %v6187 = vpop.f32.mrf.mxu0
    %v6188 = vadd.f32 %v6113, %v6187
    %v6189 = vpop.f32.mrf.mxu0
    %6190 = vmatprep.mubr.f32.mxu0 %v5287
    %6191 = vmatmul.mubr.f32.gmra.mxu0 %v5286
    %v6192 = vpop.f32.mrf.mxu0
    %v6193 = vadd.f32 %v6118, %v6192
    %v6194 = vpop.f32.mrf.mxu0
    %6195 = vdwg.mxu0
    %6196 = vmatprep.subr.mxu0 0.0
    %6197 = vmatpush1.msra.mxu0 %v5119
    %6198 = vmatprep.subr.mxu0 0.0
    %6199 = vmatpush1.msra.mxu0 %v5118
    %6200 = vmatprep.subr.mxu0 0.0
    %6201 = vmatpush1.msra.mxu0 %v5117
    %6202 = vmatprep.subr.mxu0 0.0
    %6203 = vmatpush1.msra.mxu0 %v5116
    %6204 = vmatprep.subr.mxu0 0.0
    %6205 = vmatpush1.msra.mxu0 %v5115
    %6206 = vmatprep.subr.mxu0 0.0
    %6207 = vmatpush1.msra.mxu0 %v5114
    %6208 = vmatprep.subr.mxu0 0.0
    %6209 = vmatpush1.msra.mxu0 %v5113
    %6210 = vmatprep.subr.mxu0 0.0
    %6211 = vmatpush1.msra.mxu0 %v5112
    %6212 = vmatprep.subr.mxu0 0.0
    %6213 = vmatpush1.msra.mxu0 %v5111
    %6214 = vmatprep.subr.mxu0 0.0
    %6215 = vmatpush1.msra.mxu0 %v5110
    %6216 = vmatprep.subr.mxu0 0.0
    %6217 = vmatpush1.msra.mxu0 %v5109
    %6218 = vmatprep.subr.mxu0 0.0
    %6219 = vmatpush1.msra.mxu0 %v5108
    %6220 = vmatprep.subr.mxu0 0.0
    %6221 = vmatpush1.msra.mxu0 %v5107
    %6222 = vmatprep.subr.mxu0 0.0
    %6223 = vmatpush1.msra.mxu0 %v5106
    %6224 = vmatprep.subr.mxu0 0.0
    %6225 = vmatpush1.msra.mxu0 %v5105
    %6226 = vmatprep.subr.mxu0 0.0
    %6227 = vmatpush1.msra.mxu0 %v5104
    %6228 = vmatprep.subr.mxu0 0.0
    %6229 = vmatpush2.msra.mxu0 %v5135
    %6230 = vmatprep.subr.mxu0 0.0
    %6231 = vmatpush2.msra.mxu0 %v5134
    %6232 = vmatprep.subr.mxu0 0.0
    %6233 = vmatpush2.msra.mxu0 %v5133
    %6234 = vmatprep.subr.mxu0 0.0
    %6235 = vmatpush2.msra.mxu0 %v5132
    %6236 = vmatprep.subr.mxu0 0.0
    %6237 = vmatpush2.msra.mxu0 %v5131
    %6238 = vmatprep.subr.mxu0 0.0
    %6239 = vmatpush2.msra.mxu0 %v5130
    %6240 = vmatprep.subr.mxu0 0.0
    %6241 = vmatpush2.msra.mxu0 %v5129
    %6242 = vmatprep.subr.mxu0 0.0
    %6243 = vmatpush2.msra.mxu0 %v5128
    %6244 = vmatprep.subr.mxu0 0.0
    %6245 = vmatpush2.msra.mxu0 %v5127
    %6246 = vmatprep.subr.mxu0 0.0
    %6247 = vmatpush2.msra.mxu0 %v5126
    %6248 = vmatprep.subr.mxu0 0.0
    %6249 = vmatpush2.msra.mxu0 %v5125
    %6250 = vmatprep.subr.mxu0 0.0
    %6251 = vmatpush2.msra.mxu0 %v5124
    %6252 = vmatprep.subr.mxu0 0.0
    %6253 = vmatpush2.msra.mxu0 %v5123
    %6254 = vmatprep.subr.mxu0 0.0
    %6255 = vmatpush2.msra.mxu0 %v5122
    %6256 = vmatprep.subr.mxu0 0.0
    %6257 = vmatpush2.msra.mxu0 %v5121
    %6258 = vmatprep.subr.mxu0 0.0
    %6259 = vmatpush2.msra.mxu0 %v5120
    %6260 = vmatprep.mubr.f32.mxu0 %v5257
    %6261 = vmatmul.mubr.f32.gmra.mxu0 %v5256
    %v6262 = vpop.f32.mrf.mxu0
    %v6263 = vadd.f32 %v6188, %v6262
    %v6264 = vpop.f32.mrf.mxu0
    %6265 = vmatprep.mubr.f32.mxu0 %v5289
    %6266 = vmatmul.mubr.f32.gmra.mxu0 %v5288
    %v6267 = vpop.f32.mrf.mxu0
    %v6268 = vadd.f32 %v6193, %v6267
    %v6269 = vpop.f32.mrf.mxu0
    %6270 = vdwg.mxu0
    %6271 = vmatprep.subr.mxu0 0.0
    %6272 = vmatpush1.msra.mxu0 %v5151
    %6273 = vmatprep.subr.mxu0 0.0
    %6274 = vmatpush1.msra.mxu0 %v5150
    %6275 = vmatprep.subr.mxu0 0.0
    %6276 = vmatpush1.msra.mxu0 %v5149
    %6277 = vmatprep.subr.mxu0 0.0
    %6278 = vmatpush1.msra.mxu0 %v5148
    %6279 = vmatprep.subr.mxu0 0.0
    %6280 = vmatpush1.msra.mxu0 %v5147
    %6281 = vmatprep.subr.mxu0 0.0
    %6282 = vmatpush1.msra.mxu0 %v5146
    %6283 = vmatprep.subr.mxu0 0.0
    %6284 = vmatpush1.msra.mxu0 %v5145
    %6285 = vmatprep.subr.mxu0 0.0
    %6286 = vmatpush1.msra.mxu0 %v5144
    %6287 = vmatprep.subr.mxu0 0.0
    %6288 = vmatpush1.msra.mxu0 %v5143
    %6289 = vmatprep.subr.mxu0 0.0
    %6290 = vmatpush1.msra.mxu0 %v5142
    %6291 = vmatprep.subr.mxu0 0.0
    %6292 = vmatpush1.msra.mxu0 %v5141
    %6293 = vmatprep.subr.mxu0 0.0
    %6294 = vmatpush1.msra.mxu0 %v5140
    %6295 = vmatprep.subr.mxu0 0.0
    %6296 = vmatpush1.msra.mxu0 %v5139
    %6297 = vmatprep.subr.mxu0 0.0
    %6298 = vmatpush1.msra.mxu0 %v5138
    %6299 = vmatprep.subr.mxu0 0.0
    %6300 = vmatpush1.msra.mxu0 %v5137
    %6301 = vmatprep.subr.mxu0 0.0
    %6302 = vmatpush1.msra.mxu0 %v5136
    %6303 = vmatprep.subr.mxu0 0.0
    %6304 = vmatpush2.msra.mxu0 %v5167
    %6305 = vmatprep.subr.mxu0 0.0
    %6306 = vmatpush2.msra.mxu0 %v5166
    %6307 = vmatprep.subr.mxu0 0.0
    %6308 = vmatpush2.msra.mxu0 %v5165
    %6309 = vmatprep.subr.mxu0 0.0
    %6310 = vmatpush2.msra.mxu0 %v5164
    %6311 = vmatprep.subr.mxu0 0.0
    %6312 = vmatpush2.msra.mxu0 %v5163
    %6313 = vmatprep.subr.mxu0 0.0
    %6314 = vmatpush2.msra.mxu0 %v5162
    %6315 = vmatprep.subr.mxu0 0.0
    %6316 = vmatpush2.msra.mxu0 %v5161
    %6317 = vmatprep.subr.mxu0 0.0
    %6318 = vmatpush2.msra.mxu0 %v5160
    %6319 = vmatprep.subr.mxu0 0.0
    %6320 = vmatpush2.msra.mxu0 %v5159
    %6321 = vmatprep.subr.mxu0 0.0
    %6322 = vmatpush2.msra.mxu0 %v5158
    %6323 = vmatprep.subr.mxu0 0.0
    %6324 = vmatpush2.msra.mxu0 %v5157
    %6325 = vmatprep.subr.mxu0 0.0
    %6326 = vmatpush2.msra.mxu0 %v5156
    %6327 = vmatprep.subr.mxu0 0.0
    %6328 = vmatpush2.msra.mxu0 %v5155
    %6329 = vmatprep.subr.mxu0 0.0
    %6330 = vmatpush2.msra.mxu0 %v5154
    %6331 = vmatprep.subr.mxu0 0.0
    %6332 = vmatpush2.msra.mxu0 %v5153
    %6333 = vmatprep.subr.mxu0 0.0
    %6334 = vmatpush2.msra.mxu0 %v5152
    %6335 = vmatprep.mubr.f32.mxu0 %v5259
    %6336 = vmatmul.mubr.f32.gmra.mxu0 %v5258
    %v6337 = vpop.f32.mrf.mxu0
    %v6338 = vadd.f32 %v6263, %v6337
    %v6339 = vpop.f32.mrf.mxu0
    %6340 = vmatprep.mubr.f32.mxu0 %v5291
    %6341 = vmatmul.mubr.f32.gmra.mxu0 %v5290
    %v6342 = vpop.f32.mrf.mxu0
    %v6343 = vadd.f32 %v6268, %v6342
    %v6344 = vpop.f32.mrf.mxu0
    %6345 = vdwg.mxu0
    %6346 = vmatprep.subr.mxu0 0.0
    %6347 = vmatpush1.msra.mxu0 %v5183
    %6348 = vmatprep.subr.mxu0 0.0
    %6349 = vmatpush1.msra.mxu0 %v5182
    %6350 = vmatprep.subr.mxu0 0.0
    %6351 = vmatpush1.msra.mxu0 %v5181
    %6352 = vmatprep.subr.mxu0 0.0
    %6353 = vmatpush1.msra.mxu0 %v5180
    %6354 = vmatprep.subr.mxu0 0.0
    %6355 = vmatpush1.msra.mxu0 %v5179
    %6356 = vmatprep.subr.mxu0 0.0
    %6357 = vmatpush1.msra.mxu0 %v5178
    %6358 = vmatprep.subr.mxu0 0.0
    %6359 = vmatpush1.msra.mxu0 %v5177
    %6360 = vmatprep.subr.mxu0 0.0
    %6361 = vmatpush1.msra.mxu0 %v5176
    %6362 = vmatprep.subr.mxu0 0.0
    %6363 = vmatpush1.msra.mxu0 %v5175
    %6364 = vmatprep.subr.mxu0 0.0
    %6365 = vmatpush1.msra.mxu0 %v5174
    %6366 = vmatprep.subr.mxu0 0.0
    %6367 = vmatpush1.msra.mxu0 %v5173
    %6368 = vmatprep.subr.mxu0 0.0
    %6369 = vmatpush1.msra.mxu0 %v5172
    %6370 = vmatprep.subr.mxu0 0.0
    %6371 = vmatpush1.msra.mxu0 %v5171
    %6372 = vmatprep.subr.mxu0 0.0
    %6373 = vmatpush1.msra.mxu0 %v5170
    %6374 = vmatprep.subr.mxu0 0.0
    %6375 = vmatpush1.msra.mxu0 %v5169
    %6376 = vmatprep.subr.mxu0 0.0
    %6377 = vmatpush1.msra.mxu0 %v5168
    %6378 = vmatprep.subr.mxu0 0.0
    %6379 = vmatpush2.msra.mxu0 %v5199
    %6380 = vmatprep.subr.mxu0 0.0
    %6381 = vmatpush2.msra.mxu0 %v5198
    %6382 = vmatprep.subr.mxu0 0.0
    %6383 = vmatpush2.msra.mxu0 %v5197
    %6384 = vmatprep.subr.mxu0 0.0
    %6385 = vmatpush2.msra.mxu0 %v5196
    %6386 = vmatprep.subr.mxu0 0.0
    %6387 = vmatpush2.msra.mxu0 %v5195
    %6388 = vmatprep.subr.mxu0 0.0
    %6389 = vmatpush2.msra.mxu0 %v5194
    %6390 = vmatprep.subr.mxu0 0.0
    %6391 = vmatpush2.msra.mxu0 %v5193
    %6392 = vmatprep.subr.mxu0 0.0
    %6393 = vmatpush2.msra.mxu0 %v5192
    %6394 = vmatprep.subr.mxu0 0.0
    %6395 = vmatpush2.msra.mxu0 %v5191
    %6396 = vmatprep.subr.mxu0 0.0
    %6397 = vmatpush2.msra.mxu0 %v5190
    %6398 = vmatprep.subr.mxu0 0.0
    %6399 = vmatpush2.msra.mxu0 %v5189
    %6400 = vmatprep.subr.mxu0 0.0
    %6401 = vmatpush2.msra.mxu0 %v5188
    %6402 = vmatprep.subr.mxu0 0.0
    %6403 = vmatpush2.msra.mxu0 %v5187
    %6404 = vmatprep.subr.mxu0 0.0
    %6405 = vmatpush2.msra.mxu0 %v5186
    %6406 = vmatprep.subr.mxu0 0.0
    %6407 = vmatpush2.msra.mxu0 %v5185
    %6408 = vmatprep.subr.mxu0 0.0
    %6409 = vmatpush2.msra.mxu0 %v5184
    %6410 = vmatprep.mubr.f32.mxu0 %v5261
    %6411 = vmatmul.mubr.f32.gmra.mxu0 %v5260
    %v6412 = vpop.f32.mrf.mxu0
    %v6413 = vadd.f32 %v6338, %v6412
    %v6414 = vpop.f32.mrf.mxu0
    %6415 = vmatprep.mubr.f32.mxu0 %v5293
    %6416 = vmatmul.mubr.f32.gmra.mxu0 %v5292
    %v6417 = vpop.f32.mrf.mxu0
    %v6418 = vadd.f32 %v6343, %v6417
    %v6419 = vpop.f32.mrf.mxu0
    %6420 = vdwg.mxu0
    %6421 = vmatprep.subr.mxu0 0.0
    %6422 = vmatpush1.msra.mxu0 %v5215
    %6423 = vmatprep.subr.mxu0 0.0
    %6424 = vmatpush1.msra.mxu0 %v5214
    %6425 = vmatprep.subr.mxu0 0.0
    %6426 = vmatpush1.msra.mxu0 %v5213
    %6427 = vmatprep.subr.mxu0 0.0
    %6428 = vmatpush1.msra.mxu0 %v5212
    %6429 = vmatprep.subr.mxu0 0.0
    %6430 = vmatpush1.msra.mxu0 %v5211
    %6431 = vmatprep.subr.mxu0 0.0
    %6432 = vmatpush1.msra.mxu0 %v5210
    %6433 = vmatprep.subr.mxu0 0.0
    %6434 = vmatpush1.msra.mxu0 %v5209
    %6435 = vmatprep.subr.mxu0 0.0
    %6436 = vmatpush1.msra.mxu0 %v5208
    %6437 = vmatprep.subr.mxu0 0.0
    %6438 = vmatpush1.msra.mxu0 %v5207
    %6439 = vmatprep.subr.mxu0 0.0
    %6440 = vmatpush1.msra.mxu0 %v5206
    %6441 = vmatprep.subr.mxu0 0.0
    %6442 = vmatpush1.msra.mxu0 %v5205
    %6443 = vmatprep.subr.mxu0 0.0
    %6444 = vmatpush1.msra.mxu0 %v5204
    %6445 = vmatprep.subr.mxu0 0.0
    %6446 = vmatpush1.msra.mxu0 %v5203
    %6447 = vmatprep.subr.mxu0 0.0
    %6448 = vmatpush1.msra.mxu0 %v5202
    %6449 = vmatprep.subr.mxu0 0.0
    %6450 = vmatpush1.msra.mxu0 %v5201
    %6451 = vmatprep.subr.mxu0 0.0
    %6452 = vmatpush1.msra.mxu0 %v5200
    %6453 = vmatprep.subr.mxu0 0.0
    %6454 = vmatpush2.msra.mxu0 %v5231
    %6455 = vmatprep.subr.mxu0 0.0
    %6456 = vmatpush2.msra.mxu0 %v5230
    %6457 = vmatprep.subr.mxu0 0.0
    %6458 = vmatpush2.msra.mxu0 %v5229
    %6459 = vmatprep.subr.mxu0 0.0
    %6460 = vmatpush2.msra.mxu0 %v5228
    %6461 = vmatprep.subr.mxu0 0.0
    %6462 = vmatpush2.msra.mxu0 %v5227
    %6463 = vmatprep.subr.mxu0 0.0
    %6464 = vmatpush2.msra.mxu0 %v5226
    %6465 = vmatprep.subr.mxu0 0.0
    %6466 = vmatpush2.msra.mxu0 %v5225
    %6467 = vmatprep.subr.mxu0 0.0
    %6468 = vmatpush2.msra.mxu0 %v5224
    %6469 = vmatprep.subr.mxu0 0.0
    %6470 = vmatpush2.msra.mxu0 %v5223
    %6471 = vmatprep.subr.mxu0 0.0
    %6472 = vmatpush2.msra.mxu0 %v5222
    %6473 = vmatprep.subr.mxu0 0.0
    %6474 = vmatpush2.msra.mxu0 %v5221
    %6475 = vmatprep.subr.mxu0 0.0
    %6476 = vmatpush2.msra.mxu0 %v5220
    %6477 = vmatprep.subr.mxu0 0.0
    %6478 = vmatpush2.msra.mxu0 %v5219
    %6479 = vmatprep.subr.mxu0 0.0
    %6480 = vmatpush2.msra.mxu0 %v5218
    %6481 = vmatprep.subr.mxu0 0.0
    %6482 = vmatpush2.msra.mxu0 %v5217
    %6483 = vmatprep.subr.mxu0 0.0
    %6484 = vmatpush2.msra.mxu0 %v5216
    %6485 = vmatprep.mubr.f32.mxu0 %v5263
    %6486 = vmatmul.mubr.f32.gmra.mxu0 %v5262
    %v6487 = vpop.f32.mrf.mxu0
    %v6488 = vadd.f32 %v6413, %v6487
    %v6489 = vpop.f32.mrf.mxu0
    %6490 = vmatprep.mubr.f32.mxu0 %v5295
    %6491 = vmatmul.mubr.f32.gmra.mxu0 %v5294
    %v6492 = vpop.f32.mrf.mxu0
    %v6493 = vadd.f32 %v6418, %v6492
    %v6494 = vpop.f32.mrf.mxu0
    %6495 = vdwg.mxu0
    %v6496 = vld [vmem:[%s4] sm:$0xff]
    %v6497 = vld [vmem:[%s4 + $0x8] sm:$0xff]
    %v6498 = vld [vmem:[%s4 + $0x10] sm:$0xff]
    %v6499 = vld [vmem:[%s4 + $0x18] sm:$0xff]
    %v6500 = vld [vmem:[%s5] sm:$0x1]
    %v6502 = vlaneseq
    %v6503 = vshrl.u32 %v6502, 7
    %v6504 = vsub.s32 0, %v6503
    %v6505 = vrot.slane %v6500, %v6504
    %vm6507 = vcmask 261120
    %v6509 = vsel %vm6507, %v6488, 0
    %v6512 = vsel %vm6507, %v6493, 0
    %6514 = vmatprep.subr.mxu0 0.0
    %6515 = vmatpush1.msra.mxu0 0.0
    %6516 = vmatprep.subr.mxu0 0.0
    %6517 = vmatpush1.msra.mxu0 0.0
    %6518 = vmatprep.subr.mxu0 0.0
    %6519 = vmatpush1.msra.mxu0 0.0
    %6520 = vmatprep.subr.mxu0 0.0
    %6521 = vmatpush1.msra.mxu0 0.0
    %6522 = vmatprep.subr.mxu0 0.0
    %6523 = vmatpush1.msra.mxu0 0.0
    %6524 = vmatprep.subr.mxu0 0.0
    %6525 = vmatpush1.msra.mxu0 0.0
    %6526 = vmatprep.subr.mxu0 0.0
    %6527 = vmatpush1.msra.mxu0 0.0
    %6528 = vmatprep.subr.mxu0 0.0
    %6529 = vmatpush1.msra.mxu0 0.0
    %6530 = vmatprep.subr.mxu0 0.0
    %6531 = vmatpush1.msra.mxu0 0.0
    %6532 = vmatprep.subr.mxu0 0.0
    %6533 = vmatpush1.msra.mxu0 0.0
    %6534 = vmatprep.subr.mxu0 0.0
    %6535 = vmatpush1.msra.mxu0 0.0
    %6536 = vmatprep.subr.mxu0 0.0
    %6537 = vmatpush1.msra.mxu0 0.0
    %6538 = vmatprep.subr.mxu0 0.0
    %6539 = vmatpush1.msra.mxu0 %v6499
    %6540 = vmatprep.subr.mxu0 0.0
    %6541 = vmatpush1.msra.mxu0 %v6498
    %6542 = vmatprep.subr.mxu0 0.0
    %6543 = vmatpush1.msra.mxu0 %v6497
    %6544 = vmatprep.subr.mxu0 0.0
    %6545 = vmatpush1.msra.mxu0 %v6496
    %6546 = vmatprep.subr.mxu0 0.0
    %6547 = vmatpush2.msra.mxu0 0.0
    %6548 = vmatprep.subr.mxu0 0.0
    %6549 = vmatpush2.msra.mxu0 0.0
    %6550 = vmatprep.subr.mxu0 0.0
    %6551 = vmatpush2.msra.mxu0 0.0
    %6552 = vmatprep.subr.mxu0 0.0
    %6553 = vmatpush2.msra.mxu0 0.0
    %6554 = vmatprep.subr.mxu0 0.0
    %6555 = vmatpush2.msra.mxu0 0.0
    %6556 = vmatprep.subr.mxu0 0.0
    %6557 = vmatpush2.msra.mxu0 0.0
    %6558 = vmatprep.subr.mxu0 0.0
    %6559 = vmatpush2.msra.mxu0 0.0
    %6560 = vmatprep.subr.mxu0 0.0
    %6561 = vmatpush2.msra.mxu0 0.0
    %6562 = vmatprep.subr.mxu0 0.0
    %6563 = vmatpush2.msra.mxu0 0.0
    %6564 = vmatprep.subr.mxu0 0.0
    %6565 = vmatpush2.msra.mxu0 0.0
    %6566 = vmatprep.subr.mxu0 0.0
    %6567 = vmatpush2.msra.mxu0 0.0
    %6568 = vmatprep.subr.mxu0 0.0
    %6569 = vmatpush2.msra.mxu0 0.0
    %6570 = vmatprep.subr.mxu0 0.0
    %6571 = vmatpush2.msra.mxu0 0.0
    %6572 = vmatprep.subr.mxu0 0.0
    %6573 = vmatpush2.msra.mxu0 0.0
    %6574 = vmatprep.subr.mxu0 0.0
    %6575 = vmatpush2.msra.mxu0 0.0
    %6576 = vmatprep.subr.mxu0 0.0
    %6577 = vmatpush2.msra.mxu0 0.0
    %6578 = vmatprep.mubr.f32.mxu0 0.0
    %6579 = vmatmul.mubr.f32.gmra.mxu0 %v6509
    %v6580 = vpop.f32.mrf.mxu0
    %v6581 = vadd.f32 %v6505, %v6580
    %v6582 = vpop.f32.mrf.mxu0
    %6583 = vmatprep.mubr.f32.mxu0 0.0
    %6584 = vmatmul.mubr.f32.gmra.mxu0 %v6512
    %v6585 = vpop.f32.mrf.mxu0
    %v6586 = vadd.f32 %v6505, %v6585
    %v6587 = vpop.f32.mrf.mxu0
    %6588 = vdwg.mxu0
    %v6589 = vmax.f32 %v6581, 0.0
    %v6590 = vmax.f32 %v6586, 0.0
    %v6591 = vld [vmem:[%s6] sm:$0xff]
    %v6592 = vld [vmem:[%s6 + $0x8] sm:$0xff]
    %v6593 = vld [vmem:[%s6 + $0x10] sm:$0xff]
    %v6594 = vld [vmem:[%s6 + $0x18] sm:$0xff]
    %v6595 = vld [vmem:[%s6 + $0x20] sm:$0xff]
    %v6596 = vld [vmem:[%s6 + $0x28] sm:$0xff]
    %v6597 = vld [vmem:[%s6 + $0x30] sm:$0xff]
    %v6598 = vld [vmem:[%s6 + $0x38] sm:$0xff]
    %v6599 = vld [vmem:[%s7] sm:$0x1]
    %v6601 = vlaneseq
    %v6602 = vshrl.u32 %v6601, 7
    %v6603 = vsub.s32 0, %v6602
    %v6604 = vrot.slane %v6599, %v6603
    %vm6606 = vcmask 523264
    %v6608 = vsel %vm6606, %v6589, 0
    %v6611 = vsel %vm6606, %v6590, 0
    %6613 = vmatprep.subr.mxu0 0.0
    %6614 = vmatpush1.msra.mxu0 0.0
    %6615 = vmatprep.subr.mxu0 0.0
    %6616 = vmatpush1.msra.mxu0 0.0
    %6617 = vmatprep.subr.mxu0 0.0
    %6618 = vmatpush1.msra.mxu0 0.0
    %6619 = vmatprep.subr.mxu0 0.0
    %6620 = vmatpush1.msra.mxu0 0.0
    %6621 = vmatprep.subr.mxu0 0.0
    %6622 = vmatpush1.msra.mxu0 0.0
    %6623 = vmatprep.subr.mxu0 0.0
    %6624 = vmatpush1.msra.mxu0 0.0
    %6625 = vmatprep.subr.mxu0 0.0
    %6626 = vmatpush1.msra.mxu0 0.0
    %6627 = vmatprep.subr.mxu0 0.0
    %6628 = vmatpush1.msra.mxu0 0.0
    %6629 = vmatprep.subr.mxu0 0.0
    %6630 = vmatpush1.msra.mxu0 %v6598
    %6631 = vmatprep.subr.mxu0 0.0
    %6632 = vmatpush1.msra.mxu0 %v6597
    %6633 = vmatprep.subr.mxu0 0.0
    %6634 = vmatpush1.msra.mxu0 %v6596
    %6635 = vmatprep.subr.mxu0 0.0
    %6636 = vmatpush1.msra.mxu0 %v6595
    %6637 = vmatprep.subr.mxu0 0.0
    %6638 = vmatpush1.msra.mxu0 %v6594
    %6639 = vmatprep.subr.mxu0 0.0
    %6640 = vmatpush1.msra.mxu0 %v6593
    %6641 = vmatprep.subr.mxu0 0.0
    %6642 = vmatpush1.msra.mxu0 %v6592
    %6643 = vmatprep.subr.mxu0 0.0
    %6644 = vmatpush1.msra.mxu0 %v6591
    %6645 = vmatprep.subr.mxu0 0.0
    %6646 = vmatpush2.msra.mxu0 0.0
    %6647 = vmatprep.subr.mxu0 0.0
    %6648 = vmatpush2.msra.mxu0 0.0
    %6649 = vmatprep.subr.mxu0 0.0
    %6650 = vmatpush2.msra.mxu0 0.0
    %6651 = vmatprep.subr.mxu0 0.0
    %6652 = vmatpush2.msra.mxu0 0.0
    %6653 = vmatprep.subr.mxu0 0.0
    %6654 = vmatpush2.msra.mxu0 0.0
    %6655 = vmatprep.subr.mxu0 0.0
    %6656 = vmatpush2.msra.mxu0 0.0
    %6657 = vmatprep.subr.mxu0 0.0
    %6658 = vmatpush2.msra.mxu0 0.0
    %6659 = vmatprep.subr.mxu0 0.0
    %6660 = vmatpush2.msra.mxu0 0.0
    %6661 = vmatprep.subr.mxu0 0.0
    %6662 = vmatpush2.msra.mxu0 0.0
    %6663 = vmatprep.subr.mxu0 0.0
    %6664 = vmatpush2.msra.mxu0 0.0
    %6665 = vmatprep.subr.mxu0 0.0
    %6666 = vmatpush2.msra.mxu0 0.0
    %6667 = vmatprep.subr.mxu0 0.0
    %6668 = vmatpush2.msra.mxu0 0.0
    %6669 = vmatprep.subr.mxu0 0.0
    %6670 = vmatpush2.msra.mxu0 0.0
    %6671 = vmatprep.subr.mxu0 0.0
    %6672 = vmatpush2.msra.mxu0 0.0
    %6673 = vmatprep.subr.mxu0 0.0
    %6674 = vmatpush2.msra.mxu0 0.0
    %6675 = vmatprep.subr.mxu0 0.0
    %6676 = vmatpush2.msra.mxu0 0.0
    %6677 = vmatprep.mubr.f32.mxu0 0.0
    %6678 = vmatmul.mubr.f32.gmra.mxu0 %v6608
    %v6679 = vpop.f32.mrf.mxu0
    %v6680 = vadd.f32 %v6604, %v6679
    %v6681 = vpop.f32.mrf.mxu0
    %6682 = vmatprep.mubr.f32.mxu0 0.0
    %6683 = vmatmul.mubr.f32.gmra.mxu0 %v6611
    %v6684 = vpop.f32.mrf.mxu0
    %v6685 = vadd.f32 %v6604, %v6684
    %v6686 = vpop.f32.mrf.mxu0
    %6687 = vdwg.mxu0
    %v6688 = vsel %vm6507, %v6680, 0.0
    %v6689 = vrot.slane %v6688, 4
    %v6690 = vadd.f32 %v6688, %v6689
    %v6691 = vrot.slane %v6690, 2
    %v6692 = vadd.f32 %v6690, %v6691
    %v6693 = vrot.slane %v6692, 1
    %v6694 = vadd.f32 %v6692, %v6693
    %v6695 = vrcp.pop 8.0
    %v6696 = vmul.f32 %v6694, %v6695
    %v6697 = vsub.f32 %v6680, %v6696
    %v6698 = vmul.f32 %v6697, %v6697
    %v6699 = vsel %vm6507, %v6698, 0.0
    %v6700 = vrot.slane %v6699, 4
    %v6701 = vadd.f32 %v6699, %v6700
    %v6702 = vrot.slane %v6701, 2
    %v6703 = vadd.f32 %v6701, %v6702
    %v6704 = vrot.slane %v6703, 1
    %v6705 = vadd.f32 %v6703, %v6704
    %v6706 = vrcp.pop 7.0
    %v6707 = vmul.f32 %v6705, %v6706
    %v6708 = vrsqrt.pop %v6707
    %v6709 = vmul.f32 %v6697, %v6708
    %v6710 = vsel %vm6507, %v6685, 0.0
    %v6711 = vrot.slane %v6710, 4
    %v6712 = vadd.f32 %v6710, %v6711
    %v6713 = vrot.slane %v6712, 2
    %v6714 = vadd.f32 %v6712, %v6713
    %v6715 = vrot.slane %v6714, 1
    %v6716 = vadd.f32 %v6714, %v6715
    %v6717 = vmul.f32 %v6716, %v6695
    %v6718 = vsub.f32 %v6685, %v6717
    %v6719 = vmul.f32 %v6718, %v6718
    %v6720 = vsel %vm6507, %v6719, 0.0
    %v6721 = vrot.slane %v6720, 4
    %v6722 = vadd.f32 %v6720, %v6721
    %v6723 = vrot.slane %v6722, 2
    %v6724 = vadd.f32 %v6722, %v6723
    %v6725 = vrot.slane %v6724, 1
    %v6726 = vadd.f32 %v6724, %v6725
    %v6727 = vmul.f32 %v6726, %v6706
    %v6728 = vrsqrt.pop %v6727
    %v6729 = vmul.f32 %v6718, %v6728
    %6730 = vxpose.xlu0.b32.start [1/16] %v6709, 128
    %6731 = vxpose.xlu0.b32.cont [2/16] 0.0, 128
    %6732 = vxpose.xlu0.b32.cont [3/16] 0.0, 128
    %6733 = vxpose.xlu0.b32.cont [4/16] 0.0, 128
    %6734 = vxpose.xlu0.b32.cont [5/16] 0.0, 128
    %6735 = vxpose.xlu0.b32.cont [6/16] 0.0, 128
    %6736 = vxpose.xlu0.b32.cont [7/16] 0.0, 128
    %6737 = vxpose.xlu0.b32.cont [8/16] 0.0, 128
    %6738 = vxpose.xlu0.b32.cont [9/16] 0.0, 128
    %6739 = vxpose.xlu0.b32.cont [10/16] 0.0, 128
    %6740 = vxpose.xlu0.b32.cont [11/16] 0.0, 128
    %6741 = vxpose.xlu0.b32.cont [12/16] 0.0, 128
    %6742 = vxpose.xlu0.b32.cont [13/16] 0.0, 128
    %6743 = vxpose.xlu0.b32.cont [14/16] 0.0, 128
    %6744 = vxpose.xlu0.b32.cont [15/16] 0.0, 128
    %6745 = vxpose.xlu0.b32.end [16/16] 0.0, 128
    %v6746 = vpop.trf.xlu0
    %v6747 = vpop.trf.xlu0
    %v6748 = vpop.trf.xlu0
    %v6749 = vpop.trf.xlu0
    %v6750 = vpop.trf.xlu0
    %v6751 = vpop.trf.xlu0
    %v6752 = vpop.trf.xlu0
    %v6753 = vpop.trf.xlu0
    %v6754 = vpop.trf.xlu0
    %v6755 = vpop.trf.xlu0
    %v6756 = vpop.trf.xlu0
    %v6757 = vpop.trf.xlu0
    %v6758 = vpop.trf.xlu0
    %v6759 = vpop.trf.xlu0
    %v6760 = vpop.trf.xlu0
    %v6761 = vpop.trf.xlu0
    %vm6762 = vcmask 64512
    %v6764 = vsel %vm6762, %v6746, 0
    %v6767 = vsel %vm6762, %v6747, 0
    %v6770 = vsel %vm6762, %v6748, 0
    %v6773 = vsel %vm6762, %v6749, 0
    %6775 = vmatprep.subr.mxu0 0.0
    %6776 = vmatpush1.msra.mxu0 0.0
    %6777 = vmatprep.subr.mxu0 0.0
    %6778 = vmatpush1.msra.mxu0 0.0
    %6779 = vmatprep.subr.mxu0 0.0
    %6780 = vmatpush1.msra.mxu0 0.0
    %6781 = vmatprep.subr.mxu0 0.0
    %6782 = vmatpush1.msra.mxu0 0.0
    %6783 = vmatprep.subr.mxu0 0.0
    %6784 = vmatpush1.msra.mxu0 0.0
    %6785 = vmatprep.subr.mxu0 0.0
    %6786 = vmatpush1.msra.mxu0 0.0
    %6787 = vmatprep.subr.mxu0 0.0
    %6788 = vmatpush1.msra.mxu0 0.0
    %6789 = vmatprep.subr.mxu0 0.0
    %6790 = vmatpush1.msra.mxu0 0.0
    %6791 = vmatprep.subr.mxu0 0.0
    %6792 = vmatpush1.msra.mxu0 0.0
    %6793 = vmatprep.subr.mxu0 0.0
    %6794 = vmatpush1.msra.mxu0 0.0
    %6795 = vmatprep.subr.mxu0 0.0
    %6796 = vmatpush1.msra.mxu0 0.0
    %6797 = vmatprep.subr.mxu0 0.0
    %6798 = vmatpush1.msra.mxu0 0.0
    %6799 = vmatprep.subr.mxu0 0.0
    %6800 = vmatpush1.msra.mxu0 0.0
    %6801 = vmatprep.subr.mxu0 0.0
    %6802 = vmatpush1.msra.mxu0 0.0
    %6803 = vmatprep.subr.mxu0 0.0
    %6804 = vmatpush1.msra.mxu0 0.0
    %6805 = vmatprep.subr.mxu0 0.0
    %6806 = vmatpush1.msra.mxu0 %v6729
    %6807 = vmatprep.subr.mxu0 0.0
    %6808 = vmatpush2.msra.mxu0 0.0
    %6809 = vmatprep.subr.mxu0 0.0
    %6810 = vmatpush2.msra.mxu0 0.0
    %6811 = vmatprep.subr.mxu0 0.0
    %6812 = vmatpush2.msra.mxu0 0.0
    %6813 = vmatprep.subr.mxu0 0.0
    %6814 = vmatpush2.msra.mxu0 0.0
    %6815 = vmatprep.subr.mxu0 0.0
    %6816 = vmatpush2.msra.mxu0 0.0
    %6817 = vmatprep.subr.mxu0 0.0
    %6818 = vmatpush2.msra.mxu0 0.0
    %6819 = vmatprep.subr.mxu0 0.0
    %6820 = vmatpush2.msra.mxu0 0.0
    %6821 = vmatprep.subr.mxu0 0.0
    %6822 = vmatpush2.msra.mxu0 0.0
    %6823 = vmatprep.subr.mxu0 0.0
    %6824 = vmatpush2.msra.mxu0 0.0
    %6825 = vmatprep.subr.mxu0 0.0
    %6826 = vmatpush2.msra.mxu0 0.0
    %6827 = vmatprep.subr.mxu0 0.0
    %6828 = vmatpush2.msra.mxu0 0.0
    %6829 = vmatprep.subr.mxu0 0.0
    %6830 = vmatpush2.msra.mxu0 0.0
    %6831 = vmatprep.subr.mxu0 0.0
    %6832 = vmatpush2.msra.mxu0 0.0
    %6833 = vmatprep.subr.mxu0 0.0
    %6834 = vmatpush2.msra.mxu0 0.0
    %6835 = vmatprep.subr.mxu0 0.0
    %6836 = vmatpush2.msra.mxu0 0.0
    %6837 = vmatprep.subr.mxu0 0.0
    %6838 = vmatpush2.msra.mxu0 0.0
    %6839 = vmatprep.mubr.f32.mxu0 0.0
    %6840 = vmatmul.mubr.f32.gmra.mxu0 %v6764
    %v6841 = vpop.f32.mrf.mxu0
    %v6842 = vadd.f32 0.0, %v6841
    %v6843 = vpop.f32.mrf.mxu0
    %6844 = vmatprep.mubr.f32.mxu0 0.0
    %6845 = vmatmul.mubr.f32.gmra.mxu0 %v6767
    %v6846 = vpop.f32.mrf.mxu0
    %v6847 = vadd.f32 0.0, %v6846
    %v6848 = vpop.f32.mrf.mxu0
    %6849 = vmatprep.mubr.f32.mxu0 0.0
    %6850 = vmatmul.mubr.f32.gmra.mxu0 %v6770
    %v6851 = vpop.f32.mrf.mxu0
    %v6852 = vadd.f32 0.0, %v6851
    %v6853 = vpop.f32.mrf.mxu0
    %6854 = vmatprep.mubr.f32.mxu0 0.0
    %6855 = vmatmul.mubr.f32.gmra.mxu0 %v6773
    %v6856 = vpop.f32.mrf.mxu0
    %v6857 = vadd.f32 0.0, %v6856
    %v6858 = vpop.f32.mrf.mxu0
    %6859 = vdwg.mxu0
    %v6860 = vmul.f32 %v6842, %v6695
    %v6861 = vmul.f32 %v6847, %v6695
    %v6862 = vmul.f32 %v6852, %v6695
    %v6863 = vmul.f32 %v6857, %v6695
    %v6864 = vlaneseq
    %v6865 = vshrl.u32 %v6864, 7
    %v6866 = vadd.s32 %v6865, 8
    %v6867 = vadd.s32 %v6865, 16
    %v6868 = vadd.s32 %v6865, 24
    %v6869 = vlaneseq
    %v6870 = vand.u32 %v6869, 127
    %vm6871 = vcmp.eq.s32.totalorder %v6865, %v6870
    %vm6872 = vcmp.eq.s32.totalorder %v6866, %v6870
    %vm6873 = vcmp.eq.s32.totalorder %v6867, %v6870
    %vm6874 = vcmp.eq.s32.totalorder %v6868, %v6870
    %v6875 = vsel %vm6871, 1, 0
    %v6876 = vsel %vm6872, 1, 0
    %v6877 = vsel %vm6873, 1, 0
    %v6878 = vsel %vm6874, 1, 0
    %v6879 = vcvt.s32.f32 %v6875
    %v6880 = vcvt.s32.f32 %v6876
    %v6881 = vcvt.s32.f32 %v6877
    %v6882 = vcvt.s32.f32 %v6878
    %v6883 = vsub.f32 %v6860, %v6879
    %v6884 = vsub.f32 %v6861, %v6880
    %v6885 = vsub.f32 %v6862, %v6881
    %v6886 = vsub.f32 %v6863, %v6882
    %v6887 = vmul.f32 %v6883, %v6883
    %v6888 = vmul.f32 %v6884, %v6884
    %v6889 = vmul.f32 %v6885, %v6885
    %v6890 = vmul.f32 %v6886, %v6886
    %v6891 = vmul.f32 %v6887, 0.005
    %v6892 = vmul.f32 %v6888, 0.005
    %v6893 = vmul.f32 %v6889, 0.005
    %v6894 = vmul.f32 %v6890, 0.005
    %v6895 = vsel %vm6871, 200.0, 1.0
    %v6896 = vsel %vm6872, 200.0, 1.0
    %v6897 = vsel %vm6873, 200.0, 1.0
    %v6898 = vsel %vm6874, 200.0, 1.0
    %v6899 = vmul.f32 %v6891, %v6895
    %v6900 = vmul.f32 %v6892, %v6896
    %v6901 = vmul.f32 %v6893, %v6897
    %v6902 = vmul.f32 %v6894, %v6898
    %v6903 = vsel %vm6507, %v6899, 0.0
    %v6904 = vsel %vm6507, %v6900, 0.0
    %v6905 = vadd.f32 %v6903, %v6904
    %v6906 = vsel %vm6507, %v6901, 0.0
    %v6907 = vadd.f32 %v6905, %v6906
    %v6908 = vsel %vm6507, %v6902, 0.0
    %v6909 = vadd.f32 %v6907, %v6908
    %6910 = vadd.xlane.f32.xlu0 %v6909
    %v6911 = vpop.xlane.xlu0 %6910
    %v6912 = vrot.slane %v6911, 4
    %v6913 = vadd.f32 %v6911, %v6912
    %v6914 = vrot.slane %v6913, 2
    %v6915 = vadd.f32 %v6913, %v6914
    %v6916 = vrot.slane %v6915, 1
    %v6917 = vadd.f32 %v6915, %v6916
    %s6918 = vtos %v6917
    %v6919 = vstv %s6918
    %vm6920 = vcmask 0
    %6921 = vst.msk [vmem:[#allocation2] sm:$0x1] %vm6920, %v6919
    // Predicated region
    $region34: #{_forward.1} parent=1 // pred_check
      _
    $region35: #{_forward.1} parent=1 // pred_check_branch
      %6923 = sbr.rel (0) target = $region37
    $region36: #{_forward.1} parent=1 // pred_region
      %s6925 = ssub.s32 16, 16
      %6926 = vsyncadd [#allocation3], %s6925
      %s6928 = sshll.u32 [#allocation2], 4
      %s6929 = int_to_ptr.vmem [resolvable:$true] %s6928
      %6931 = dma.vmem_to_hbm [thread:$0]  %s6929, 16, %s8, [#allocation3]
    $region37: #{_forward.1} parent=1 // pred_fallthru
      _
    // Predicated region
    $region38: #{_forward.1} parent=1 // pred_check
      _
    $region39: #{_forward.1} parent=1 // pred_check_branch
      %6933 = sbr.rel (0) target = $region41
    $region40: #{_forward.1} parent=1 // pred_region
      %6934 = dma.done [#allocation3], 16
    $region41: #{_forward.1} parent=1 // pred_fallthru
      _
    %6935 = vsyncpa [#allocation3], 1

</llo_original>
